<compile_context>
chip_gen: v5e
topology: v5e:2x2
jax: 0.10.0
libtpu: 0.0.40
codegen_flags: <defaults>
</compile_context>

<pallas_src>
import numpy as np
import jax
import jax.numpy as jnp
from jax import lax
from jax.experimental import pallas as pl
from jax.experimental.pallas import tpu as pltpu

INP_DIM = 1
MID_DIM = 18
MID_LAYERS = 4
OUT_DIM = 1


def reglstm_kernel(x_ref, w_ih0_ref, w_hh_ref, w_ih_ref, b_ref,
                   w1_ref, b1_ref, w2_ref, b2_ref, out_ref):
    # x_ref:     (S, B, 1)       raw input (no feature padding)
    # w_ih0_ref: (1, 4H)         layer-0 input->gates row (gate-scaled)
    # w_hh_ref:  (L, H, 4H)      hidden->gates per layer (gate-scaled)
    # w_ih_ref:  (L-1, H, 4H)    input->gates for layers 1..L-1 (gate-scaled)
    # b_ref:     (L, 1, 4H)      fused biases b_ih+b_hh per layer (gate-scaled)
    # w1_ref:    (H, H)          head Linear-1 weight (torch layout, used transposed-head)
    # b1_ref:    (H, 1)          head Linear-1 bias (column)
    # w2_ref:    (1, H)          head Linear-2 weight (torch layout)
    # b2_ref:    (1, 1)          head Linear-2 bias
    # out_ref:   (1, S*B)        lane-dense output row
    S, B, _ = x_ref.shape
    L, H, _ = w_hh_ref.shape
    f32 = jnp.float32

    # Hoist broadcast biases (broadcasts are not CSE'd) and the sigmoid-gate lane mask.
    b_bcast = [jnp.broadcast_to(b_ref[l], (B, 4 * H)) for l in range(L)]
    col = lax.broadcasted_iota(jnp.int32, (B, 4 * H), 1)
    sig_mask = jnp.logical_or(col < 2 * H, col >= 3 * H)   # i, f, o gates; g stays tanh

    def lstm_cell(pre, c):
        # Pre-activations are gate-scaled (0.5 for i/f/o, 1.0 for g) so a single tanh over
        # the fused (B,4H) tile plus one full-vreg affine yields sigmoid for i/f/o and
        # tanh for g:  sigmoid(a) = 0.5*tanh(a/2) + 0.5.
        t = jnp.tanh(pre)
        t = jnp.where(sig_mask, 0.5 * t + 0.5, t)
        i = t[:, 0 * H:1 * H]
        f = t[:, 1 * H:2 * H]
        g = t[:, 2 * H:3 * H]
        o = t[:, 3 * H:4 * H]
        c_new = f * c + i * g
        h_new = o * jnp.tanh(c_new)
        return h_new, c_new

    zeros = jnp.zeros((B, H), f32)
    hs = [zeros] * L
    cs = [zeros] * L
    h_stash = []   # register-resident top-layer hidden states (no VMEM round-trip)

    # Fully unrolled time loop (S is a small static constant).
    for t in range(S):
        # Recurrent partials: depend only on t-1 state, so all L matmuls are independent
        # and can be issued back-to-back into the MXU at the top of the timestep; the
        # bias add is folded in here, off the layer-chain critical path. Weights are read
        # from VMEM at point of use to keep vreg pressure low in the unrolled body.
        rec = [jnp.dot(hs[l], w_hh_ref[l], preferred_element_type=f32) + b_bcast[l]
               for l in range(L)]

        # Layer 0: input contribution is a broadcast multiply (INP_DIM == 1), no matmul.
        pre = x_ref[t] * w_ih0_ref[...] + rec[0]                 # (B,1)*(1,4H) + (B,4H)
        h_new, c_new = lstm_cell(pre, cs[0])
        hs[0], cs[0] = h_new, c_new
        inp = h_new

        # Layers 1..L-1: one small (B,H)@(H,4H) matmul per layer on the critical path.
        for l in range(1, L):
            pre = jnp.dot(inp, w_ih_ref[l - 1], preferred_element_type=f32) + rec[l]
            h_new, c_new = lstm_cell(pre, cs[l])
            hs[l], cs[l] = h_new, c_new
            inp = h_new

        h_stash.append(inp)

    # Regression head (Linear -> Tanh -> Linear) over all timesteps, done once after the
    # recurrence, in transposed form so the single output store is lane-dense (1, S*B).
    h_all = jnp.concatenate(h_stash, axis=0)                     # (S*B, H)
    h_allT = h_all.T                                             # (H, S*B)
    zT = jnp.tanh(jnp.dot(w1_ref[...], h_allT, preferred_element_type=f32) + b1_ref[...])
    yT = jnp.dot(w2_ref[...], zT, preferred_element_type=f32) + b2_ref[...]   # (1, S*B)
    out_ref[...] = yT.astype(out_ref.dtype)


def reglstm_forward(x, kernel_params):
    S, B, _ = x.shape
    (w_ih0, w_hh, w_ih, b, w1, b1, w2, b2) = kernel_params
    out_row = pl.pallas_call(
        reglstm_kernel,
        out_shape=jax.ShapeDtypeStruct((1, S * B), jnp.float32),
        in_specs=[pl.BlockSpec(memory_space=pltpu.MemorySpace.VMEM)] * 9,
        out_specs=pl.BlockSpec(memory_space=pltpu.MemorySpace.VMEM),
    )(x.astype(jnp.float32), w_ih0, w_hh, w_ih, b, w1, b1, w2, b2)
    return out_row.reshape(S, B, OUT_DIM)


def init_params(key):
    """PyTorch-style uniform(-1/sqrt(H), 1/sqrt(H)) init; returns (torch-layout, kernel-layout)."""
    H, L, I = MID_DIM, MID_LAYERS, INP_DIM
    keys = jax.random.split(key, 4 * L + 4)
    k = 1.0 / np.sqrt(H)

    # Gate order i, f, g, o. Pre-scale i/f/o columns by 0.5 so sigmoid becomes one tanh.
    # NOTE: kernel weights therefore are NOT the raw PyTorch weights — any external
    # weight-loading path must reapply this gate_scale.
    gate_scale = jnp.concatenate([
        jnp.full((H,), 0.5, jnp.float32), jnp.full((H,), 0.5, jnp.float32),
        jnp.ones((H,), jnp.float32), jnp.full((H,), 0.5, jnp.float32)])   # (4H,)

    torch_lstm = []
    w_hh_layers, w_ih_layers, b_layers = [], [], []
    w_ih0 = None
    for l in range(L):
        in_l = I if l == 0 else H
        k0, k1, k2, k3 = keys[4 * l: 4 * l + 4]
        w_ih_t = jax.random.uniform(k0, (4 * H, in_l), jnp.float32, -k, k)
        w_hh_t = jax.random.uniform(k1, (4 * H, H), jnp.float32, -k, k)
        b_ih_t = jax.random.uniform(k2, (4 * H,), jnp.float32, -k, k)
        b_hh_t = jax.random.uniform(k3, (4 * H,), jnp.float32, -k, k)
        torch_lstm.append((w_ih_t, w_hh_t, b_ih_t, b_hh_t))

        w_hh_layers.append(w_hh_t.T * gate_scale)                           # (H, 4H)
        b_layers.append(((b_ih_t + b_hh_t) * gate_scale).reshape(1, 4 * H))  # (1, 4H)
        if l == 0:
            w_ih0 = w_ih_t.T * gate_scale                                    # (1, 4H)
        else:
            w_ih_layers.append(w_ih_t.T * gate_scale)                        # (H, 4H)

    kr0, kr1, kr2, kr3 = keys[4 * L: 4 * L + 4]
    kl = 1.0 / np.sqrt(H)
    W1 = jax.random.uniform(kr0, (H, H), jnp.float32, -kl, kl)
    B1 = jax.random.uniform(kr1, (H,), jnp.float32, -kl, kl)
    W2 = jax.random.uniform(kr2, (OUT_DIM, H), jnp.float32, -kl, kl)
    B2 = jax.random.uniform(kr3, (OUT_DIM,), jnp.float32, -kl, kl)
    torch_reg = (W1, B1, W2, B2)

    kernel_params = (
        w_ih0,                         # (1, 4H)
        jnp.stack(w_hh_layers),        # (L, H, 4H)
        jnp.stack(w_ih_layers),        # (L-1, H, 4H)
        jnp.stack(b_layers),           # (L, 1, 4H)
        W1,                            # (H, H)   transposed-head layout (z^T = W1 @ h^T + b1)
        B1.reshape(H, 1),              # (H, 1)
        W2,                            # (1, H)
        B2.reshape(1, OUT_DIM),        # (1, 1)
    )
    return (torch_lstm, torch_reg), kernel_params


def reference_forward(x, torch_params):
    """Pure-JAX replica of the PyTorch RegLSTM forward (torch weight layout)."""
    lstm_params, (W1, B1, W2, B2) = torch_params
    S, B, _ = x.shape
    H = MID_DIM
    inp = x.astype(jnp.float32)
    for (w_ih, w_hh, b_ih, b_hh) in lstm_params:
        def step(carry, x_t):
            h, c = carry
            gates = x_t @ w_ih.T + h @ w_hh.T + b_ih + b_hh
            i_t = jax.nn.sigmoid(gates[:, 0 * H:1 * H])
            f_t = jax.nn.sigmoid(gates[:, 1 * H:2 * H])
            g_t = jnp.tanh(gates[:, 2 * H:3 * H])
            o_t = jax.nn.sigmoid(gates[:, 3 * H:4 * H])
            c_new = f_t * c + i_t * g_t
            h_new = o_t * jnp.tanh(c_new)
            return (h_new, c_new), h_new
        h0 = jnp.zeros((B, H), jnp.float32)
        c0 = jnp.zeros((B, H), jnp.float32)
        _, inp = lax.scan(step, (h0, c0), inp)
    y = jnp.tanh(inp.reshape(S * B, H) @ W1.T + B1) @ W2.T + B2
    return y.reshape(S, B, OUT_DIM)


if __name__ == "__main__":
    key = jax.random.PRNGKey(0)
    pkey, xkey = jax.random.split(key)
    torch_params, kernel_params = init_params(pkey)

    seq_len, batch = 8, 4
    x = jax.random.normal(xkey, (seq_len, batch, INP_DIM), jnp.float32)

    out = reglstm_forward(x, kernel_params)
    out = jax.block_until_ready(out)
    assert out.shape == (seq_len, batch, OUT_DIM)

    ref = reference_forward(x, torch_params)
    np.testing.assert_allclose(np.asarray(out), np.asarray(ref), atol=1e-4, rtol=1e-4)

    print("KERNEL_OK")
</pallas_src>

<mosaic_0001>
module attributes {stable_mosaic.version = 11 : i64} {
  func.func @reglstm_kernel(%arg0: memref<8x4x1xf32, #tpu.memory_space<vmem>>, %arg1: memref<1x72xf32, #tpu.memory_space<vmem>>, %arg2: memref<4x18x72xf32, #tpu.memory_space<vmem>>, %arg3: memref<3x18x72xf32, #tpu.memory_space<vmem>>, %arg4: memref<4x1x72xf32, #tpu.memory_space<vmem>>, %arg5: memref<18x18xf32, #tpu.memory_space<vmem>>, %arg6: memref<18x1xf32, #tpu.memory_space<vmem>>, %arg7: memref<1x18xf32, #tpu.memory_space<vmem>>, %arg8: memref<1x1xf32, #tpu.memory_space<vmem>>, %arg9: memref<1x32xf32, #tpu.memory_space<vmem>>) attributes {dimension_semantics = [], scalar_prefetch = 0 : i64, scratch_operands = 0 : i64, tpu.core_type = #tpu.core_type<tc>} {
    %c0 = arith.constant 0 : index
    %c0_0 = arith.constant 0 : index
    %c0_1 = arith.constant 0 : index
    %0 = vector.load %arg4[%c0, %c0_0, %c0_1] : memref<4x1x72xf32, #tpu.memory_space<vmem>>, vector<1x1x72xf32>
    %1 = vector.shape_cast %0 : vector<1x1x72xf32> to vector<1x72xf32>
    %2 = vector.shape_cast %1 : vector<1x72xf32> to vector<1x72xf32>
    %3 = vector.broadcast %2 : vector<1x72xf32> to vector<4x72xf32>
    %c1 = arith.constant 1 : index
    %c0_2 = arith.constant 0 : index
    %c0_3 = arith.constant 0 : index
    %4 = vector.load %arg4[%c1, %c0_2, %c0_3] : memref<4x1x72xf32, #tpu.memory_space<vmem>>, vector<1x1x72xf32>
    %5 = vector.shape_cast %4 : vector<1x1x72xf32> to vector<1x72xf32>
    %6 = vector.shape_cast %5 : vector<1x72xf32> to vector<1x72xf32>
    %7 = vector.broadcast %6 : vector<1x72xf32> to vector<4x72xf32>
    %c2 = arith.constant 2 : index
    %c0_4 = arith.constant 0 : index
    %c0_5 = arith.constant 0 : index
    %8 = vector.load %arg4[%c2, %c0_4, %c0_5] : memref<4x1x72xf32, #tpu.memory_space<vmem>>, vector<1x1x72xf32>
    %9 = vector.shape_cast %8 : vector<1x1x72xf32> to vector<1x72xf32>
    %10 = vector.shape_cast %9 : vector<1x72xf32> to vector<1x72xf32>
    %11 = vector.broadcast %10 : vector<1x72xf32> to vector<4x72xf32>
    %c3 = arith.constant 3 : index
    %c0_6 = arith.constant 0 : index
    %c0_7 = arith.constant 0 : index
    %12 = vector.load %arg4[%c3, %c0_6, %c0_7] : memref<4x1x72xf32, #tpu.memory_space<vmem>>, vector<1x1x72xf32>
    %13 = vector.shape_cast %12 : vector<1x1x72xf32> to vector<1x72xf32>
    %14 = vector.shape_cast %13 : vector<1x72xf32> to vector<1x72xf32>
    %15 = vector.broadcast %14 : vector<1x72xf32> to vector<4x72xf32>
    %16 = tpu.iota {dimensions = array<i32: 1>} : vector<4x72xi32>
    %c36_i32 = arith.constant 36 : i32
    %17 = vector.broadcast %c36_i32 : i32 to vector<4x72xi32>
    %18 = arith.cmpi slt, %16, %17 : vector<4x72xi32>
    %c54_i32 = arith.constant 54 : i32
    %19 = vector.broadcast %c54_i32 : i32 to vector<4x72xi32>
    %20 = arith.cmpi sge, %16, %19 : vector<4x72xi32>
    %21 = arith.ori %18, %20 : vector<4x72xi1>
    %cst = arith.constant 0.000000e+00 : f32
    %22 = vector.broadcast %cst : f32 to vector<4x18xf32>
    %c0_8 = arith.constant 0 : index
    %c0_9 = arith.constant 0 : index
    %c0_10 = arith.constant 0 : index
    %23 = vector.load %arg2[%c0_8, %c0_9, %c0_10] : memref<4x18x72xf32, #tpu.memory_space<vmem>>, vector<1x18x72xf32>
    %24 = vector.shape_cast %23 : vector<1x18x72xf32> to vector<18x72xf32>
    %cst_11 = arith.constant dense<0.000000e+00> : vector<4x72xf32>
    %25 = tpu.matmul %22, %24, %cst_11 {dimension_numbers = #tpu.dot_dimension_numbers<[1], [0], [0], [1], [0, 0, 1, 1], [], []>} : vector<4x18xf32>, vector<18x72xf32>, vector<4x72xf32> -> vector<4x72xf32>
    %26 = arith.addf %25, %3 : vector<4x72xf32>
    %c1_12 = arith.constant 1 : index
    %c0_13 = arith.constant 0 : index
    %c0_14 = arith.constant 0 : index
    %27 = vector.load %arg2[%c1_12, %c0_13, %c0_14] : memref<4x18x72xf32, #tpu.memory_space<vmem>>, vector<1x18x72xf32>
    %28 = vector.shape_cast %27 : vector<1x18x72xf32> to vector<18x72xf32>
    %cst_15 = arith.constant dense<0.000000e+00> : vector<4x72xf32>
    %29 = tpu.matmul %22, %28, %cst_15 {dimension_numbers = #tpu.dot_dimension_numbers<[1], [0], [0], [1], [0, 0, 1, 1], [], []>} : vector<4x18xf32>, vector<18x72xf32>, vector<4x72xf32> -> vector<4x72xf32>
    %30 = arith.addf %29, %7 : vector<4x72xf32>
    %c2_16 = arith.constant 2 : index
    %c0_17 = arith.constant 0 : index
    %c0_18 = arith.constant 0 : index
    %31 = vector.load %arg2[%c2_16, %c0_17, %c0_18] : memref<4x18x72xf32, #tpu.memory_space<vmem>>, vector<1x18x72xf32>
    %32 = vector.shape_cast %31 : vector<1x18x72xf32> to vector<18x72xf32>
    %cst_19 = arith.constant dense<0.000000e+00> : vector<4x72xf32>
    %33 = tpu.matmul %22, %32, %cst_19 {dimension_numbers = #tpu.dot_dimension_numbers<[1], [0], [0], [1], [0, 0, 1, 1], [], []>} : vector<4x18xf32>, vector<18x72xf32>, vector<4x72xf32> -> vector<4x72xf32>
    %34 = arith.addf %33, %11 : vector<4x72xf32>
    %c3_20 = arith.constant 3 : index
    %c0_21 = arith.constant 0 : index
    %c0_22 = arith.constant 0 : index
    %35 = vector.load %arg2[%c3_20, %c0_21, %c0_22] : memref<4x18x72xf32, #tpu.memory_space<vmem>>, vector<1x18x72xf32>
    %36 = vector.shape_cast %35 : vector<1x18x72xf32> to vector<18x72xf32>
    %cst_23 = arith.constant dense<0.000000e+00> : vector<4x72xf32>
    %37 = tpu.matmul %22, %36, %cst_23 {dimension_numbers = #tpu.dot_dimension_numbers<[1], [0], [0], [1], [0, 0, 1, 1], [], []>} : vector<4x18xf32>, vector<18x72xf32>, vector<4x72xf32> -> vector<4x72xf32>
    %38 = arith.addf %37, %15 : vector<4x72xf32>
    %c0_24 = arith.constant 0 : index
    %c0_25 = arith.constant 0 : index
    %c0_26 = arith.constant 0 : index
    %39 = vector.load %arg0[%c0_24, %c0_25, %c0_26] : memref<8x4x1xf32, #tpu.memory_space<vmem>>, vector<1x4x1xf32>
    %40 = vector.shape_cast %39 : vector<1x4x1xf32> to vector<4x1xf32>
    %c0_27 = arith.constant 0 : index
    %c0_28 = arith.constant 0 : index
    %41 = vector.load %arg1[%c0_27, %c0_28] : memref<1x72xf32, #tpu.memory_space<vmem>>, vector<1x72xf32>
    %42 = vector.broadcast %40 : vector<4x1xf32> to vector<4x72xf32>
    %43 = vector.broadcast %41 : vector<1x72xf32> to vector<4x72xf32>
    %44 = arith.mulf %42, %43 : vector<4x72xf32>
    %45 = arith.addf %44, %26 : vector<4x72xf32>
    %46 = math.tanh %45 : vector<4x72xf32>
    %cst_29 = arith.constant 5.000000e-01 : f32
    %47 = vector.broadcast %cst_29 : f32 to vector<4x72xf32>
    %48 = arith.mulf %47, %46 : vector<4x72xf32>
    %cst_30 = arith.constant 5.000000e-01 : f32
    %49 = vector.broadcast %cst_30 : f32 to vector<4x72xf32>
    %50 = arith.addf %48, %49 : vector<4x72xf32>
    %51 = arith.select %21, %50, %46 : vector<4x72xi1>, vector<4x72xf32>
    %52 = vector.extract_strided_slice %51 {offsets = [0, 0], sizes = [4, 18], strides = [1, 1]} : vector<4x72xf32> to vector<4x18xf32>
    %53 = vector.extract_strided_slice %51 {offsets = [0, 18], sizes = [4, 18], strides = [1, 1]} : vector<4x72xf32> to vector<4x18xf32>
    %54 = vector.extract_strided_slice %51 {offsets = [0, 36], sizes = [4, 18], strides = [1, 1]} : vector<4x72xf32> to vector<4x18xf32>
    %55 = vector.extract_strided_slice %51 {offsets = [0, 54], sizes = [4, 18], strides = [1, 1]} : vector<4x72xf32> to vector<4x18xf32>
    %56 = arith.mulf %53, %22 : vector<4x18xf32>
    %57 = arith.mulf %52, %54 : vector<4x18xf32>
    %58 = arith.addf %56, %57 : vector<4x18xf32>
    %59 = math.tanh %58 : vector<4x18xf32>
    %60 = arith.mulf %55, %59 : vector<4x18xf32>
    %c0_31 = arith.constant 0 : index
    %c0_32 = arith.constant 0 : index
    %c0_33 = arith.constant 0 : index
    %61 = vector.load %arg3[%c0_31, %c0_32, %c0_33] : memref<3x18x72xf32, #tpu.memory_space<vmem>>, vector<1x18x72xf32>
    %62 = vector.shape_cast %61 : vector<1x18x72xf32> to vector<18x72xf32>
    %cst_34 = arith.constant dense<0.000000e+00> : vector<4x72xf32>
    %63 = tpu.matmul %60, %62, %cst_34 {dimension_numbers = #tpu.dot_dimension_numbers<[1], [0], [0], [1], [0, 0, 1, 1], [], []>} : vector<4x18xf32>, vector<18x72xf32>, vector<4x72xf32> -> vector<4x72xf32>
    %64 = arith.addf %63, %30 : vector<4x72xf32>
    %65 = math.tanh %64 : vector<4x72xf32>
    %cst_35 = arith.constant 5.000000e-01 : f32
    %66 = vector.broadcast %cst_35 : f32 to vector<4x72xf32>
    %67 = arith.mulf %66, %65 : vector<4x72xf32>
    %cst_36 = arith.constant 5.000000e-01 : f32
    %68 = vector.broadcast %cst_36 : f32 to vector<4x72xf32>
    %69 = arith.addf %67, %68 : vector<4x72xf32>
    %70 = arith.select %21, %69, %65 : vector<4x72xi1>, vector<4x72xf32>
    %71 = vector.extract_strided_slice %70 {offsets = [0, 0], sizes = [4, 18], strides = [1, 1]} : vector<4x72xf32> to vector<4x18xf32>
    %72 = vector.extract_strided_slice %70 {offsets = [0, 18], sizes = [4, 18], strides = [1, 1]} : vector<4x72xf32> to vector<4x18xf32>
    %73 = vector.extract_strided_slice %70 {offsets = [0, 36], sizes = [4, 18], strides = [1, 1]} : vector<4x72xf32> to vector<4x18xf32>
    %74 = vector.extract_strided_slice %70 {offsets = [0, 54], sizes = [4, 18], strides = [1, 1]} : vector<4x72xf32> to vector<4x18xf32>
    %75 = arith.mulf %72, %22 : vector<4x18xf32>
    %76 = arith.mulf %71, %73 : vector<4x18xf32>
    %77 = arith.addf %75, %76 : vector<4x18xf32>
    %78 = math.tanh %77 : vector<4x18xf32>
    %79 = arith.mulf %74, %78 : vector<4x18xf32>
    %c1_37 = arith.constant 1 : index
    %c0_38 = arith.constant 0 : index
    %c0_39 = arith.constant 0 : index
    %80 = vector.load %arg3[%c1_37, %c0_38, %c0_39] : memref<3x18x72xf32, #tpu.memory_space<vmem>>, vector<1x18x72xf32>
    %81 = vector.shape_cast %80 : vector<1x18x72xf32> to vector<18x72xf32>
    %cst_40 = arith.constant dense<0.000000e+00> : vector<4x72xf32>
    %82 = tpu.matmul %79, %81, %cst_40 {dimension_numbers = #tpu.dot_dimension_numbers<[1], [0], [0], [1], [0, 0, 1, 1], [], []>} : vector<4x18xf32>, vector<18x72xf32>, vector<4x72xf32> -> vector<4x72xf32>
    %83 = arith.addf %82, %34 : vector<4x72xf32>
    %84 = math.tanh %83 : vector<4x72xf32>
    %cst_41 = arith.constant 5.000000e-01 : f32
    %85 = vector.broadcast %cst_41 : f32 to vector<4x72xf32>
    %86 = arith.mulf %85, %84 : vector<4x72xf32>
    %cst_42 = arith.constant 5.000000e-01 : f32
    %87 = vector.broadcast %cst_42 : f32 to vector<4x72xf32>
    %88 = arith.addf %86, %87 : vector<4x72xf32>
    %89 = arith.select %21, %88, %84 : vector<4x72xi1>, vector<4x72xf32>
    %90 = vector.extract_strided_slice %89 {offsets = [0, 0], sizes = [4, 18], strides = [1, 1]} : vector<4x72xf32> to vector<4x18xf32>
    %91 = vector.extract_strided_slice %89 {offsets = [0, 18], sizes = [4, 18], strides = [1, 1]} : vector<4x72xf32> to vector<4x18xf32>
    %92 = vector.extract_strided_slice %89 {offsets = [0, 36], sizes = [4, 18], strides = [1, 1]} : vector<4x72xf32> to vector<4x18xf32>
    %93 = vector.extract_strided_slice %89 {offsets = [0, 54], sizes = [4, 18], strides = [1, 1]} : vector<4x72xf32> to vector<4x18xf32>
    %94 = arith.mulf %91, %22 : vector<4x18xf32>
    %95 = arith.mulf %90, %92 : vector<4x18xf32>
    %96 = arith.addf %94, %95 : vector<4x18xf32>
    %97 = math.tanh %96 : vector<4x18xf32>
    %98 = arith.mulf %93, %97 : vector<4x18xf32>
    %c2_43 = arith.constant 2 : index
    %c0_44 = arith.constant 0 : index
    %c0_45 = arith.constant 0 : index
    %99 = vector.load %arg3[%c2_43, %c0_44, %c0_45] : memref<3x18x72xf32, #tpu.memory_space<vmem>>, vector<1x18x72xf32>
    %100 = vector.shape_cast %99 : vector<1x18x72xf32> to vector<18x72xf32>
    %cst_46 = arith.constant dense<0.000000e+00> : vector<4x72xf32>
    %101 = tpu.matmul %98, %100, %cst_46 {dimension_numbers = #tpu.dot_dimension_numbers<[1], [0], [0], [1], [0, 0, 1, 1], [], []>} : vector<4x18xf32>, vector<18x72xf32>, vector<4x72xf32> -> vector<4x72xf32>
    %102 = arith.addf %101, %38 : vector<4x72xf32>
    %103 = math.tanh %102 : vector<4x72xf32>
    %cst_47 = arith.constant 5.000000e-01 : f32
    %104 = vector.broadcast %cst_47 : f32 to vector<4x72xf32>
    %105 = arith.mulf %104, %103 : vector<4x72xf32>
    %cst_48 = arith.constant 5.000000e-01 : f32
    %106 = vector.broadcast %cst_48 : f32 to vector<4x72xf32>
    %107 = arith.addf %105, %106 : vector<4x72xf32>
    %108 = arith.select %21, %107, %103 : vector<4x72xi1>, vector<4x72xf32>
    %109 = vector.extract_strided_slice %108 {offsets = [0, 0], sizes = [4, 18], strides = [1, 1]} : vector<4x72xf32> to vector<4x18xf32>
    %110 = vector.extract_strided_slice %108 {offsets = [0, 18], sizes = [4, 18], strides = [1, 1]} : vector<4x72xf32> to vector<4x18xf32>
    %111 = vector.extract_strided_slice %108 {offsets = [0, 36], sizes = [4, 18], strides = [1, 1]} : vector<4x72xf32> to vector<4x18xf32>
    %112 = vector.extract_strided_slice %108 {offsets = [0, 54], sizes = [4, 18], strides = [1, 1]} : vector<4x72xf32> to vector<4x18xf32>
    %113 = arith.mulf %110, %22 : vector<4x18xf32>
    %114 = arith.mulf %109, %111 : vector<4x18xf32>
    %115 = arith.addf %113, %114 : vector<4x18xf32>
    %116 = math.tanh %115 : vector<4x18xf32>
    %117 = arith.mulf %112, %116 : vector<4x18xf32>
    %c0_49 = arith.constant 0 : index
    %c0_50 = arith.constant 0 : index
    %c0_51 = arith.constant 0 : index
    %118 = vector.load %arg2[%c0_49, %c0_50, %c0_51] : memref<4x18x72xf32, #tpu.memory_space<vmem>>, vector<1x18x72xf32>
    %119 = vector.shape_cast %118 : vector<1x18x72xf32> to vector<18x72xf32>
    %cst_52 = arith.constant dense<0.000000e+00> : vector<4x72xf32>
    %120 = tpu.matmul %60, %119, %cst_52 {dimension_numbers = #tpu.dot_dimension_numbers<[1], [0], [0], [1], [0, 0, 1, 1], [], []>} : vector<4x18xf32>, vector<18x72xf32>, vector<4x72xf32> -> vector<4x72xf32>
    %121 = arith.addf %120, %3 : vector<4x72xf32>
    %c1_53 = arith.constant 1 : index
    %c0_54 = arith.constant 0 : index
    %c0_55 = arith.constant 0 : index
    %122 = vector.load %arg2[%c1_53, %c0_54, %c0_55] : memref<4x18x72xf32, #tpu.memory_space<vmem>>, vector<1x18x72xf32>
    %123 = vector.shape_cast %122 : vector<1x18x72xf32> to vector<18x72xf32>
    %cst_56 = arith.constant dense<0.000000e+00> : vector<4x72xf32>
    %124 = tpu.matmul %79, %123, %cst_56 {dimension_numbers = #tpu.dot_dimension_numbers<[1], [0], [0], [1], [0, 0, 1, 1], [], []>} : vector<4x18xf32>, vector<18x72xf32>, vector<4x72xf32> -> vector<4x72xf32>
    %125 = arith.addf %124, %7 : vector<4x72xf32>
    %c2_57 = arith.constant 2 : index
    %c0_58 = arith.constant 0 : index
    %c0_59 = arith.constant 0 : index
    %126 = vector.load %arg2[%c2_57, %c0_58, %c0_59] : memref<4x18x72xf32, #tpu.memory_space<vmem>>, vector<1x18x72xf32>
    %127 = vector.shape_cast %126 : vector<1x18x72xf32> to vector<18x72xf32>
    %cst_60 = arith.constant dense<0.000000e+00> : vector<4x72xf32>
    %128 = tpu.matmul %98, %127, %cst_60 {dimension_numbers = #tpu.dot_dimension_numbers<[1], [0], [0], [1], [0, 0, 1, 1], [], []>} : vector<4x18xf32>, vector<18x72xf32>, vector<4x72xf32> -> vector<4x72xf32>
    %129 = arith.addf %128, %11 : vector<4x72xf32>
    %c3_61 = arith.constant 3 : index
    %c0_62 = arith.constant 0 : index
    %c0_63 = arith.constant 0 : index
    %130 = vector.load %arg2[%c3_61, %c0_62, %c0_63] : memref<4x18x72xf32, #tpu.memory_space<vmem>>, vector<1x18x72xf32>
    %131 = vector.shape_cast %130 : vector<1x18x72xf32> to vector<18x72xf32>
    %cst_64 = arith.constant dense<0.000000e+00> : vector<4x72xf32>
    %132 = tpu.matmul %117, %131, %cst_64 {dimension_numbers = #tpu.dot_dimension_numbers<[1], [0], [0], [1], [0, 0, 1, 1], [], []>} : vector<4x18xf32>, vector<18x72xf32>, vector<4x72xf32> -> vector<4x72xf32>
    %133 = arith.addf %132, %15 : vector<4x72xf32>
    %c1_65 = arith.constant 1 : index
    %c0_66 = arith.constant 0 : index
    %c0_67 = arith.constant 0 : index
    %134 = vector.load %arg0[%c1_65, %c0_66, %c0_67] : memref<8x4x1xf32, #tpu.memory_space<vmem>>, vector<1x4x1xf32>
    %135 = vector.shape_cast %134 : vector<1x4x1xf32> to vector<4x1xf32>
    %c0_68 = arith.constant 0 : index
    %c0_69 = arith.constant 0 : index
    %136 = vector.load %arg1[%c0_68, %c0_69] : memref<1x72xf32, #tpu.memory_space<vmem>>, vector<1x72xf32>
    %137 = vector.broadcast %135 : vector<4x1xf32> to vector<4x72xf32>
    %138 = vector.broadcast %136 : vector<1x72xf32> to vector<4x72xf32>
    %139 = arith.mulf %137, %138 : vector<4x72xf32>
    %140 = arith.addf %139, %121 : vector<4x72xf32>
    %141 = math.tanh %140 : vector<4x72xf32>
    %cst_70 = arith.constant 5.000000e-01 : f32
    %142 = vector.broadcast %cst_70 : f32 to vector<4x72xf32>
    %143 = arith.mulf %142, %141 : vector<4x72xf32>
    %cst_71 = arith.constant 5.000000e-01 : f32
    %144 = vector.broadcast %cst_71 : f32 to vector<4x72xf32>
    %145 = arith.addf %143, %144 : vector<4x72xf32>
    %146 = arith.select %21, %145, %141 : vector<4x72xi1>, vector<4x72xf32>
    %147 = vector.extract_strided_slice %146 {offsets = [0, 0], sizes = [4, 18], strides = [1, 1]} : vector<4x72xf32> to vector<4x18xf32>
    %148 = vector.extract_strided_slice %146 {offsets = [0, 18], sizes = [4, 18], strides = [1, 1]} : vector<4x72xf32> to vector<4x18xf32>
    %149 = vector.extract_strided_slice %146 {offsets = [0, 36], sizes = [4, 18], strides = [1, 1]} : vector<4x72xf32> to vector<4x18xf32>
    %150 = vector.extract_strided_slice %146 {offsets = [0, 54], sizes = [4, 18], strides = [1, 1]} : vector<4x72xf32> to vector<4x18xf32>
    %151 = arith.mulf %148, %58 : vector<4x18xf32>
    %152 = arith.mulf %147, %149 : vector<4x18xf32>
    %153 = arith.addf %151, %152 : vector<4x18xf32>
    %154 = math.tanh %153 : vector<4x18xf32>
    %155 = arith.mulf %150, %154 : vector<4x18xf32>
    %c0_72 = arith.constant 0 : index
    %c0_73 = arith.constant 0 : index
    %c0_74 = arith.constant 0 : index
    %156 = vector.load %arg3[%c0_72, %c0_73, %c0_74] : memref<3x18x72xf32, #tpu.memory_space<vmem>>, vector<1x18x72xf32>
    %157 = vector.shape_cast %156 : vector<1x18x72xf32> to vector<18x72xf32>
    %cst_75 = arith.constant dense<0.000000e+00> : vector<4x72xf32>
    %158 = tpu.matmul %155, %157, %cst_75 {dimension_numbers = #tpu.dot_dimension_numbers<[1], [0], [0], [1], [0, 0, 1, 1], [], []>} : vector<4x18xf32>, vector<18x72xf32>, vector<4x72xf32> -> vector<4x72xf32>
    %159 = arith.addf %158, %125 : vector<4x72xf32>
    %160 = math.tanh %159 : vector<4x72xf32>
    %cst_76 = arith.constant 5.000000e-01 : f32
    %161 = vector.broadcast %cst_76 : f32 to vector<4x72xf32>
    %162 = arith.mulf %161, %160 : vector<4x72xf32>
    %cst_77 = arith.constant 5.000000e-01 : f32
    %163 = vector.broadcast %cst_77 : f32 to vector<4x72xf32>
    %164 = arith.addf %162, %163 : vector<4x72xf32>
    %165 = arith.select %21, %164, %160 : vector<4x72xi1>, vector<4x72xf32>
    %166 = vector.extract_strided_slice %165 {offsets = [0, 0], sizes = [4, 18], strides = [1, 1]} : vector<4x72xf32> to vector<4x18xf32>
    %167 = vector.extract_strided_slice %165 {offsets = [0, 18], sizes = [4, 18], strides = [1, 1]} : vector<4x72xf32> to vector<4x18xf32>
    %168 = vector.extract_strided_slice %165 {offsets = [0, 36], sizes = [4, 18], strides = [1, 1]} : vector<4x72xf32> to vector<4x18xf32>
    %169 = vector.extract_strided_slice %165 {offsets = [0, 54], sizes = [4, 18], strides = [1, 1]} : vector<4x72xf32> to vector<4x18xf32>
    %170 = arith.mulf %167, %77 : vector<4x18xf32>
    %171 = arith.mulf %166, %168 : vector<4x18xf32>
    %172 = arith.addf %170, %171 : vector<4x18xf32>
    %173 = math.tanh %172 : vector<4x18xf32>
    %174 = arith.mulf %169, %173 : vector<4x18xf32>
    %c1_78 = arith.constant 1 : index
    %c0_79 = arith.constant 0 : index
    %c0_80 = arith.constant 0 : index
    %175 = vector.load %arg3[%c1_78, %c0_79, %c0_80] : memref<3x18x72xf32, #tpu.memory_space<vmem>>, vector<1x18x72xf32>
    %176 = vector.shape_cast %175 : vector<1x18x72xf32> to vector<18x72xf32>
    %cst_81 = arith.constant dense<0.000000e+00> : vector<4x72xf32>
    %177 = tpu.matmul %174, %176, %cst_81 {dimension_numbers = #tpu.dot_dimension_numbers<[1], [0], [0], [1], [0, 0, 1, 1], [], []>} : vector<4x18xf32>, vector<18x72xf32>, vector<4x72xf32> -> vector<4x72xf32>
    %178 = arith.addf %177, %129 : vector<4x72xf32>
    %179 = math.tanh %178 : vector<4x72xf32>
    %cst_82 = arith.constant 5.000000e-01 : f32
    %180 = vector.broadcast %cst_82 : f32 to vector<4x72xf32>
    %181 = arith.mulf %180, %179 : vector<4x72xf32>
    %cst_83 = arith.constant 5.000000e-01 : f32
    %182 = vector.broadcast %cst_83 : f32 to vector<4x72xf32>
    %183 = arith.addf %181, %182 : vector<4x72xf32>
    %184 = arith.select %21, %183, %179 : vector<4x72xi1>, vector<4x72xf32>
    %185 = vector.extract_strided_slice %184 {offsets = [0, 0], sizes = [4, 18], strides = [1, 1]} : vector<4x72xf32> to vector<4x18xf32>
    %186 = vector.extract_strided_slice %184 {offsets = [0, 18], sizes = [4, 18], strides = [1, 1]} : vector<4x72xf32> to vector<4x18xf32>
    %187 = vector.extract_strided_slice %184 {offsets = [0, 36], sizes = [4, 18], strides = [1, 1]} : vector<4x72xf32> to vector<4x18xf32>
    %188 = vector.extract_strided_slice %184 {offsets = [0, 54], sizes = [4, 18], strides = [1, 1]} : vector<4x72xf32> to vector<4x18xf32>
    %189 = arith.mulf %186, %96 : vector<4x18xf32>
    %190 = arith.mulf %185, %187 : vector<4x18xf32>
    %191 = arith.addf %189, %190 : vector<4x18xf32>
    %192 = math.tanh %191 : vector<4x18xf32>
    %193 = arith.mulf %188, %192 : vector<4x18xf32>
    %c2_84 = arith.constant 2 : index
    %c0_85 = arith.constant 0 : index
    %c0_86 = arith.constant 0 : index
    %194 = vector.load %arg3[%c2_84, %c0_85, %c0_86] : memref<3x18x72xf32, #tpu.memory_space<vmem>>, vector<1x18x72xf32>
    %195 = vector.shape_cast %194 : vector<1x18x72xf32> to vector<18x72xf32>
    %cst_87 = arith.constant dense<0.000000e+00> : vector<4x72xf32>
    %196 = tpu.matmul %193, %195, %cst_87 {dimension_numbers = #tpu.dot_dimension_numbers<[1], [0], [0], [1], [0, 0, 1, 1], [], []>} : vector<4x18xf32>, vector<18x72xf32>, vector<4x72xf32> -> vector<4x72xf32>
    %197 = arith.addf %196, %133 : vector<4x72xf32>
    %198 = math.tanh %197 : vector<4x72xf32>
    %cst_88 = arith.constant 5.000000e-01 : f32
    %199 = vector.broadcast %cst_88 : f32 to vector<4x72xf32>
    %200 = arith.mulf %199, %198 : vector<4x72xf32>
    %cst_89 = arith.constant 5.000000e-01 : f32
    %201 = vector.broadcast %cst_89 : f32 to vector<4x72xf32>
    %202 = arith.addf %200, %201 : vector<4x72xf32>
    %203 = arith.select %21, %202, %198 : vector<4x72xi1>, vector<4x72xf32>
    %204 = vector.extract_strided_slice %203 {offsets = [0, 0], sizes = [4, 18], strides = [1, 1]} : vector<4x72xf32> to vector<4x18xf32>
    %205 = vector.extract_strided_slice %203 {offsets = [0, 18], sizes = [4, 18], strides = [1, 1]} : vector<4x72xf32> to vector<4x18xf32>
    %206 = vector.extract_strided_slice %203 {offsets = [0, 36], sizes = [4, 18], strides = [1, 1]} : vector<4x72xf32> to vector<4x18xf32>
    %207 = vector.extract_strided_slice %203 {offsets = [0, 54], sizes = [4, 18], strides = [1, 1]} : vector<4x72xf32> to vector<4x18xf32>
    %208 = arith.mulf %205, %115 : vector<4x18xf32>
    %209 = arith.mulf %204, %206 : vector<4x18xf32>
    %210 = arith.addf %208, %209 : vector<4x18xf32>
    %211 = math.tanh %210 : vector<4x18xf32>
    %212 = arith.mulf %207, %211 : vector<4x18xf32>
    %c0_90 = arith.constant 0 : index
    %c0_91 = arith.constant 0 : index
    %c0_92 = arith.constant 0 : index
    %213 = vector.load %arg2[%c0_90, %c0_91, %c0_92] : memref<4x18x72xf32, #tpu.memory_space<vmem>>, vector<1x18x72xf32>
    %214 = vector.shape_cast %213 : vector<1x18x72xf32> to vector<18x72xf32>
    %cst_93 = arith.constant dense<0.000000e+00> : vector<4x72xf32>
    %215 = tpu.matmul %155, %214, %cst_93 {dimension_numbers = #tpu.dot_dimension_numbers<[1], [0], [0], [1], [0, 0, 1, 1], [], []>} : vector<4x18xf32>, vector<18x72xf32>, vector<4x72xf32> -> vector<4x72xf32>
    %216 = arith.addf %215, %3 : vector<4x72xf32>
    %c1_94 = arith.constant 1 : index
    %c0_95 = arith.constant 0 : index
    %c0_96 = arith.constant 0 : index
    %217 = vector.load %arg2[%c1_94, %c0_95, %c0_96] : memref<4x18x72xf32, #tpu.memory_space<vmem>>, vector<1x18x72xf32>
    %218 = vector.shape_cast %217 : vector<1x18x72xf32> to vector<18x72xf32>
    %cst_97 = arith.constant dense<0.000000e+00> : vector<4x72xf32>
    %219 = tpu.matmul %174, %218, %cst_97 {dimension_numbers = #tpu.dot_dimension_numbers<[1], [0], [0], [1], [0, 0, 1, 1], [], []>} : vector<4x18xf32>, vector<18x72xf32>, vector<4x72xf32> -> vector<4x72xf32>
    %220 = arith.addf %219, %7 : vector<4x72xf32>
    %c2_98 = arith.constant 2 : index
    %c0_99 = arith.constant 0 : index
    %c0_100 = arith.constant 0 : index
    %221 = vector.load %arg2[%c2_98, %c0_99, %c0_100] : memref<4x18x72xf32, #tpu.memory_space<vmem>>, vector<1x18x72xf32>
    %222 = vector.shape_cast %221 : vector<1x18x72xf32> to vector<18x72xf32>
    %cst_101 = arith.constant dense<0.000000e+00> : vector<4x72xf32>
    %223 = tpu.matmul %193, %222, %cst_101 {dimension_numbers = #tpu.dot_dimension_numbers<[1], [0], [0], [1], [0, 0, 1, 1], [], []>} : vector<4x18xf32>, vector<18x72xf32>, vector<4x72xf32> -> vector<4x72xf32>
    %224 = arith.addf %223, %11 : vector<4x72xf32>
    %c3_102 = arith.constant 3 : index
    %c0_103 = arith.constant 0 : index
    %c0_104 = arith.constant 0 : index
    %225 = vector.load %arg2[%c3_102, %c0_103, %c0_104] : memref<4x18x72xf32, #tpu.memory_space<vmem>>, vector<1x18x72xf32>
    %226 = vector.shape_cast %225 : vector<1x18x72xf32> to vector<18x72xf32>
    %cst_105 = arith.constant dense<0.000000e+00> : vector<4x72xf32>
    %227 = tpu.matmul %212, %226, %cst_105 {dimension_numbers = #tpu.dot_dimension_numbers<[1], [0], [0], [1], [0, 0, 1, 1], [], []>} : vector<4x18xf32>, vector<18x72xf32>, vector<4x72xf32> -> vector<4x72xf32>
    %228 = arith.addf %227, %15 : vector<4x72xf32>
    %c2_106 = arith.constant 2 : index
    %c0_107 = arith.constant 0 : index
    %c0_108 = arith.constant 0 : index
    %229 = vector.load %arg0[%c2_106, %c0_107, %c0_108] : memref<8x4x1xf32, #tpu.memory_space<vmem>>, vector<1x4x1xf32>
    %230 = vector.shape_cast %229 : vector<1x4x1xf32> to vector<4x1xf32>
    %c0_109 = arith.constant 0 : index
    %c0_110 = arith.constant 0 : index
    %231 = vector.load %arg1[%c0_109, %c0_110] : memref<1x72xf32, #tpu.memory_space<vmem>>, vector<1x72xf32>
    %232 = vector.broadcast %230 : vector<4x1xf32> to vector<4x72xf32>
    %233 = vector.broadcast %231 : vector<1x72xf32> to vector<4x72xf32>
    %234 = arith.mulf %232, %233 : vector<4x72xf32>
    %235 = arith.addf %234, %216 : vector<4x72xf32>
    %236 = math.tanh %235 : vector<4x72xf32>
    %cst_111 = arith.constant 5.000000e-01 : f32
    %237 = vector.broadcast %cst_111 : f32 to vector<4x72xf32>
    %238 = arith.mulf %237, %236 : vector<4x72xf32>
    %cst_112 = arith.constant 5.000000e-01 : f32
    %239 = vector.broadcast %cst_112 : f32 to vector<4x72xf32>
    %240 = arith.addf %238, %239 : vector<4x72xf32>
    %241 = arith.select %21, %240, %236 : vector<4x72xi1>, vector<4x72xf32>
    %242 = vector.extract_strided_slice %241 {offsets = [0, 0], sizes = [4, 18], strides = [1, 1]} : vector<4x72xf32> to vector<4x18xf32>
    %243 = vector.extract_strided_slice %241 {offsets = [0, 18], sizes = [4, 18], strides = [1, 1]} : vector<4x72xf32> to vector<4x18xf32>
    %244 = vector.extract_strided_slice %241 {offsets = [0, 36], sizes = [4, 18], strides = [1, 1]} : vector<4x72xf32> to vector<4x18xf32>
    %245 = vector.extract_strided_slice %241 {offsets = [0, 54], sizes = [4, 18], strides = [1, 1]} : vector<4x72xf32> to vector<4x18xf32>
    %246 = arith.mulf %243, %153 : vector<4x18xf32>
    %247 = arith.mulf %242, %244 : vector<4x18xf32>
    %248 = arith.addf %246, %247 : vector<4x18xf32>
    %249 = math.tanh %248 : vector<4x18xf32>
    %250 = arith.mulf %245, %249 : vector<4x18xf32>
    %c0_113 = arith.constant 0 : index
    %c0_114 = arith.constant 0 : index
    %c0_115 = arith.constant 0 : index
    %251 = vector.load %arg3[%c0_113, %c0_114, %c0_115] : memref<3x18x72xf32, #tpu.memory_space<vmem>>, vector<1x18x72xf32>
    %252 = vector.shape_cast %251 : vector<1x18x72xf32> to vector<18x72xf32>
    %cst_116 = arith.constant dense<0.000000e+00> : vector<4x72xf32>
    %253 = tpu.matmul %250, %252, %cst_116 {dimension_numbers = #tpu.dot_dimension_numbers<[1], [0], [0], [1], [0, 0, 1, 1], [], []>} : vector<4x18xf32>, vector<18x72xf32>, vector<4x72xf32> -> vector<4x72xf32>
    %254 = arith.addf %253, %220 : vector<4x72xf32>
    %255 = math.tanh %254 : vector<4x72xf32>
    %cst_117 = arith.constant 5.000000e-01 : f32
    %256 = vector.broadcast %cst_117 : f32 to vector<4x72xf32>
    %257 = arith.mulf %256, %255 : vector<4x72xf32>
    %cst_118 = arith.constant 5.000000e-01 : f32
    %258 = vector.broadcast %cst_118 : f32 to vector<4x72xf32>
    %259 = arith.addf %257, %258 : vector<4x72xf32>
    %260 = arith.select %21, %259, %255 : vector<4x72xi1>, vector<4x72xf32>
    %261 = vector.extract_strided_slice %260 {offsets = [0, 0], sizes = [4, 18], strides = [1, 1]} : vector<4x72xf32> to vector<4x18xf32>
    %262 = vector.extract_strided_slice %260 {offsets = [0, 18], sizes = [4, 18], strides = [1, 1]} : vector<4x72xf32> to vector<4x18xf32>
    %263 = vector.extract_strided_slice %260 {offsets = [0, 36], sizes = [4, 18], strides = [1, 1]} : vector<4x72xf32> to vector<4x18xf32>
    %264 = vector.extract_strided_slice %260 {offsets = [0, 54], sizes = [4, 18], strides = [1, 1]} : vector<4x72xf32> to vector<4x18xf32>
    %265 = arith.mulf %262, %172 : vector<4x18xf32>
    %266 = arith.mulf %261, %263 : vector<4x18xf32>
    %267 = arith.addf %265, %266 : vector<4x18xf32>
    %268 = math.tanh %267 : vector<4x18xf32>
    %269 = arith.mulf %264, %268 : vector<4x18xf32>
    %c1_119 = arith.constant 1 : index
    %c0_120 = arith.constant 0 : index
    %c0_121 = arith.constant 0 : index
    %270 = vector.load %arg3[%c1_119, %c0_120, %c0_121] : memref<3x18x72xf32, #tpu.memory_space<vmem>>, vector<1x18x72xf32>
    %271 = vector.shape_cast %270 : vector<1x18x72xf32> to vector<18x72xf32>
    %cst_122 = arith.constant dense<0.000000e+00> : vector<4x72xf32>
    %272 = tpu.matmul %269, %271, %cst_122 {dimension_numbers = #tpu.dot_dimension_numbers<[1], [0], [0], [1], [0, 0, 1, 1], [], []>} : vector<4x18xf32>, vector<18x72xf32>, vector<4x72xf32> -> vector<4x72xf32>
    %273 = arith.addf %272, %224 : vector<4x72xf32>
    %274 = math.tanh %273 : vector<4x72xf32>
    %cst_123 = arith.constant 5.000000e-01 : f32
    %275 = vector.broadcast %cst_123 : f32 to vector<4x72xf32>
    %276 = arith.mulf %275, %274 : vector<4x72xf32>
    %cst_124 = arith.constant 5.000000e-01 : f32
    %277 = vector.broadcast %cst_124 : f32 to vector<4x72xf32>
    %278 = arith.addf %276, %277 : vector<4x72xf32>
    %279 = arith.select %21, %278, %274 : vector<4x72xi1>, vector<4x72xf32>
    %280 = vector.extract_strided_slice %279 {offsets = [0, 0], sizes = [4, 18], strides = [1, 1]} : vector<4x72xf32> to vector<4x18xf32>
    %281 = vector.extract_strided_slice %279 {offsets = [0, 18], sizes = [4, 18], strides = [1, 1]} : vector<4x72xf32> to vector<4x18xf32>
    %282 = vector.extract_strided_slice %279 {offsets = [0, 36], sizes = [4, 18], strides = [1, 1]} : vector<4x72xf32> to vector<4x18xf32>
    %283 = vector.extract_strided_slice %279 {offsets = [0, 54], sizes = [4, 18], strides = [1, 1]} : vector<4x72xf32> to vector<4x18xf32>
    %284 = arith.mulf %281, %191 : vector<4x18xf32>
    %285 = arith.mulf %280, %282 : vector<4x18xf32>
    %286 = arith.addf %284, %285 : vector<4x18xf32>
    %287 = math.tanh %286 : vector<4x18xf32>
    %288 = arith.mulf %283, %287 : vector<4x18xf32>
    %c2_125 = arith.constant 2 : index
    %c0_126 = arith.constant 0 : index
    %c0_127 = arith.constant 0 : index
    %289 = vector.load %arg3[%c2_125, %c0_126, %c0_127] : memref<3x18x72xf32, #tpu.memory_space<vmem>>, vector<1x18x72xf32>
    %290 = vector.shape_cast %289 : vector<1x18x72xf32> to vector<18x72xf32>
    %cst_128 = arith.constant dense<0.000000e+00> : vector<4x72xf32>
    %291 = tpu.matmul %288, %290, %cst_128 {dimension_numbers = #tpu.dot_dimension_numbers<[1], [0], [0], [1], [0, 0, 1, 1], [], []>} : vector<4x18xf32>, vector<18x72xf32>, vector<4x72xf32> -> vector<4x72xf32>
    %292 = arith.addf %291, %228 : vector<4x72xf32>
    %293 = math.tanh %292 : vector<4x72xf32>
    %cst_129 = arith.constant 5.000000e-01 : f32
    %294 = vector.broadcast %cst_129 : f32 to vector<4x72xf32>
    %295 = arith.mulf %294, %293 : vector<4x72xf32>
    %cst_130 = arith.constant 5.000000e-01 : f32
    %296 = vector.broadcast %cst_130 : f32 to vector<4x72xf32>
    %297 = arith.addf %295, %296 : vector<4x72xf32>
    %298 = arith.select %21, %297, %293 : vector<4x72xi1>, vector<4x72xf32>
    %299 = vector.extract_strided_slice %298 {offsets = [0, 0], sizes = [4, 18], strides = [1, 1]} : vector<4x72xf32> to vector<4x18xf32>
    %300 = vector.extract_strided_slice %298 {offsets = [0, 18], sizes = [4, 18], strides = [1, 1]} : vector<4x72xf32> to vector<4x18xf32>
    %301 = vector.extract_strided_slice %298 {offsets = [0, 36], sizes = [4, 18], strides = [1, 1]} : vector<4x72xf32> to vector<4x18xf32>
    %302 = vector.extract_strided_slice %298 {offsets = [0, 54], sizes = [4, 18], strides = [1, 1]} : vector<4x72xf32> to vector<4x18xf32>
    %303 = arith.mulf %300, %210 : vector<4x18xf32>
    %304 = arith.mulf %299, %301 : vector<4x18xf32>
    %305 = arith.addf %303, %304 : vector<4x18xf32>
    %306 = math.tanh %305 : vector<4x18xf32>
    %307 = arith.mulf %302, %306 : vector<4x18xf32>
    %c0_131 = arith.constant 0 : index
    %c0_132 = arith.constant 0 : index
    %c0_133 = arith.constant 0 : index
    %308 = vector.load %arg2[%c0_131, %c0_132, %c0_133] : memref<4x18x72xf32, #tpu.memory_space<vmem>>, vector<1x18x72xf32>
    %309 = vector.shape_cast %308 : vector<1x18x72xf32> to vector<18x72xf32>
    %cst_134 = arith.constant dense<0.000000e+00> : vector<4x72xf32>
    %310 = tpu.matmul %250, %309, %cst_134 {dimension_numbers = #tpu.dot_dimension_numbers<[1], [0], [0], [1], [0, 0, 1, 1], [], []>} : vector<4x18xf32>, vector<18x72xf32>, vector<4x72xf32> -> vector<4x72xf32>
    %311 = arith.addf %310, %3 : vector<4x72xf32>
    %c1_135 = arith.constant 1 : index
    %c0_136 = arith.constant 0 : index
    %c0_137 = arith.constant 0 : index
    %312 = vector.load %arg2[%c1_135, %c0_136, %c0_137] : memref<4x18x72xf32, #tpu.memory_space<vmem>>, vector<1x18x72xf32>
    %313 = vector.shape_cast %312 : vector<1x18x72xf32> to vector<18x72xf32>
    %cst_138 = arith.constant dense<0.000000e+00> : vector<4x72xf32>
    %314 = tpu.matmul %269, %313, %cst_138 {dimension_numbers = #tpu.dot_dimension_numbers<[1], [0], [0], [1], [0, 0, 1, 1], [], []>} : vector<4x18xf32>, vector<18x72xf32>, vector<4x72xf32> -> vector<4x72xf32>
    %315 = arith.addf %314, %7 : vector<4x72xf32>
    %c2_139 = arith.constant 2 : index
    %c0_140 = arith.constant 0 : index
    %c0_141 = arith.constant 0 : index
    %316 = vector.load %arg2[%c2_139, %c0_140, %c0_141] : memref<4x18x72xf32, #tpu.memory_space<vmem>>, vector<1x18x72xf32>
    %317 = vector.shape_cast %316 : vector<1x18x72xf32> to vector<18x72xf32>
    %cst_142 = arith.constant dense<0.000000e+00> : vector<4x72xf32>
    %318 = tpu.matmul %288, %317, %cst_142 {dimension_numbers = #tpu.dot_dimension_numbers<[1], [0], [0], [1], [0, 0, 1, 1], [], []>} : vector<4x18xf32>, vector<18x72xf32>, vector<4x72xf32> -> vector<4x72xf32>
    %319 = arith.addf %318, %11 : vector<4x72xf32>
    %c3_143 = arith.constant 3 : index
    %c0_144 = arith.constant 0 : index
    %c0_145 = arith.constant 0 : index
    %320 = vector.load %arg2[%c3_143, %c0_144, %c0_145] : memref<4x18x72xf32, #tpu.memory_space<vmem>>, vector<1x18x72xf32>
    %321 = vector.shape_cast %320 : vector<1x18x72xf32> to vector<18x72xf32>
    %cst_146 = arith.constant dense<0.000000e+00> : vector<4x72xf32>
    %322 = tpu.matmul %307, %321, %cst_146 {dimension_numbers = #tpu.dot_dimension_numbers<[1], [0], [0], [1], [0, 0, 1, 1], [], []>} : vector<4x18xf32>, vector<18x72xf32>, vector<4x72xf32> -> vector<4x72xf32>
    %323 = arith.addf %322, %15 : vector<4x72xf32>
    %c3_147 = arith.constant 3 : index
    %c0_148 = arith.constant 0 : index
    %c0_149 = arith.constant 0 : index
    %324 = vector.load %arg0[%c3_147, %c0_148, %c0_149] : memref<8x4x1xf32, #tpu.memory_space<vmem>>, vector<1x4x1xf32>
    %325 = vector.shape_cast %324 : vector<1x4x1xf32> to vector<4x1xf32>
    %c0_150 = arith.constant 0 : index
    %c0_151 = arith.constant 0 : index
    %326 = vector.load %arg1[%c0_150, %c0_151] : memref<1x72xf32, #tpu.memory_space<vmem>>, vector<1x72xf32>
    %327 = vector.broadcast %325 : vector<4x1xf32> to vector<4x72xf32>
    %328 = vector.broadcast %326 : vector<1x72xf32> to vector<4x72xf32>
    %329 = arith.mulf %327, %328 : vector<4x72xf32>
    %330 = arith.addf %329, %311 : vector<4x72xf32>
    %331 = math.tanh %330 : vector<4x72xf32>
    %cst_152 = arith.constant 5.000000e-01 : f32
    %332 = vector.broadcast %cst_152 : f32 to vector<4x72xf32>
    %333 = arith.mulf %332, %331 : vector<4x72xf32>
    %cst_153 = arith.constant 5.000000e-01 : f32
    %334 = vector.broadcast %cst_153 : f32 to vector<4x72xf32>
    %335 = arith.addf %333, %334 : vector<4x72xf32>
    %336 = arith.select %21, %335, %331 : vector<4x72xi1>, vector<4x72xf32>
    %337 = vector.extract_strided_slice %336 {offsets = [0, 0], sizes = [4, 18], strides = [1, 1]} : vector<4x72xf32> to vector<4x18xf32>
    %338 = vector.extract_strided_slice %336 {offsets = [0, 18], sizes = [4, 18], strides = [1, 1]} : vector<4x72xf32> to vector<4x18xf32>
    %339 = vector.extract_strided_slice %336 {offsets = [0, 36], sizes = [4, 18], strides = [1, 1]} : vector<4x72xf32> to vector<4x18xf32>
    %340 = vector.extract_strided_slice %336 {offsets = [0, 54], sizes = [4, 18], strides = [1, 1]} : vector<4x72xf32> to vector<4x18xf32>
    %341 = arith.mulf %338, %248 : vector<4x18xf32>
    %342 = arith.mulf %337, %339 : vector<4x18xf32>
    %343 = arith.addf %341, %342 : vector<4x18xf32>
    %344 = math.tanh %343 : vector<4x18xf32>
    %345 = arith.mulf %340, %344 : vector<4x18xf32>
    %c0_154 = arith.constant 0 : index
    %c0_155 = arith.constant 0 : index
    %c0_156 = arith.constant 0 : index
    %346 = vector.load %arg3[%c0_154, %c0_155, %c0_156] : memref<3x18x72xf32, #tpu.memory_space<vmem>>, vector<1x18x72xf32>
    %347 = vector.shape_cast %346 : vector<1x18x72xf32> to vector<18x72xf32>
    %cst_157 = arith.constant dense<0.000000e+00> : vector<4x72xf32>
    %348 = tpu.matmul %345, %347, %cst_157 {dimension_numbers = #tpu.dot_dimension_numbers<[1], [0], [0], [1], [0, 0, 1, 1], [], []>} : vector<4x18xf32>, vector<18x72xf32>, vector<4x72xf32> -> vector<4x72xf32>
    %349 = arith.addf %348, %315 : vector<4x72xf32>
    %350 = math.tanh %349 : vector<4x72xf32>
    %cst_158 = arith.constant 5.000000e-01 : f32
    %351 = vector.broadcast %cst_158 : f32 to vector<4x72xf32>
    %352 = arith.mulf %351, %350 : vector<4x72xf32>
    %cst_159 = arith.constant 5.000000e-01 : f32
    %353 = vector.broadcast %cst_159 : f32 to vector<4x72xf32>
    %354 = arith.addf %352, %353 : vector<4x72xf32>
    %355 = arith.select %21, %354, %350 : vector<4x72xi1>, vector<4x72xf32>
    %356 = vector.extract_strided_slice %355 {offsets = [0, 0], sizes = [4, 18], strides = [1, 1]} : vector<4x72xf32> to vector<4x18xf32>
    %357 = vector.extract_strided_slice %355 {offsets = [0, 18], sizes = [4, 18], strides = [1, 1]} : vector<4x72xf32> to vector<4x18xf32>
    %358 = vector.extract_strided_slice %355 {offsets = [0, 36], sizes = [4, 18], strides = [1, 1]} : vector<4x72xf32> to vector<4x18xf32>
    %359 = vector.extract_strided_slice %355 {offsets = [0, 54], sizes = [4, 18], strides = [1, 1]} : vector<4x72xf32> to vector<4x18xf32>
    %360 = arith.mulf %357, %267 : vector<4x18xf32>
    %361 = arith.mulf %356, %358 : vector<4x18xf32>
    %362 = arith.addf %360, %361 : vector<4x18xf32>
    %363 = math.tanh %362 : vector<4x18xf32>
    %364 = arith.mulf %359, %363 : vector<4x18xf32>
    %c1_160 = arith.constant 1 : index
    %c0_161 = arith.constant 0 : index
    %c0_162 = arith.constant 0 : index
    %365 = vector.load %arg3[%c1_160, %c0_161, %c0_162] : memref<3x18x72xf32, #tpu.memory_space<vmem>>, vector<1x18x72xf32>
    %366 = vector.shape_cast %365 : vector<1x18x72xf32> to vector<18x72xf32>
    %cst_163 = arith.constant dense<0.000000e+00> : vector<4x72xf32>
    %367 = tpu.matmul %364, %366, %cst_163 {dimension_numbers = #tpu.dot_dimension_numbers<[1], [0], [0], [1], [0, 0, 1, 1], [], []>} : vector<4x18xf32>, vector<18x72xf32>, vector<4x72xf32> -> vector<4x72xf32>
    %368 = arith.addf %367, %319 : vector<4x72xf32>
    %369 = math.tanh %368 : vector<4x72xf32>
    %cst_164 = arith.constant 5.000000e-01 : f32
    %370 = vector.broadcast %cst_164 : f32 to vector<4x72xf32>
    %371 = arith.mulf %370, %369 : vector<4x72xf32>
    %cst_165 = arith.constant 5.000000e-01 : f32
    %372 = vector.broadcast %cst_165 : f32 to vector<4x72xf32>
    %373 = arith.addf %371, %372 : vector<4x72xf32>
    %374 = arith.select %21, %373, %369 : vector<4x72xi1>, vector<4x72xf32>
    %375 = vector.extract_strided_slice %374 {offsets = [0, 0], sizes = [4, 18], strides = [1, 1]} : vector<4x72xf32> to vector<4x18xf32>
    %376 = vector.extract_strided_slice %374 {offsets = [0, 18], sizes = [4, 18], strides = [1, 1]} : vector<4x72xf32> to vector<4x18xf32>
    %377 = vector.extract_strided_slice %374 {offsets = [0, 36], sizes = [4, 18], strides = [1, 1]} : vector<4x72xf32> to vector<4x18xf32>
    %378 = vector.extract_strided_slice %374 {offsets = [0, 54], sizes = [4, 18], strides = [1, 1]} : vector<4x72xf32> to vector<4x18xf32>
    %379 = arith.mulf %376, %286 : vector<4x18xf32>
    %380 = arith.mulf %375, %377 : vector<4x18xf32>
    %381 = arith.addf %379, %380 : vector<4x18xf32>
    %382 = math.tanh %381 : vector<4x18xf32>
    %383 = arith.mulf %378, %382 : vector<4x18xf32>
    %c2_166 = arith.constant 2 : index
    %c0_167 = arith.constant 0 : index
    %c0_168 = arith.constant 0 : index
    %384 = vector.load %arg3[%c2_166, %c0_167, %c0_168] : memref<3x18x72xf32, #tpu.memory_space<vmem>>, vector<1x18x72xf32>
    %385 = vector.shape_cast %384 : vector<1x18x72xf32> to vector<18x72xf32>
    %cst_169 = arith.constant dense<0.000000e+00> : vector<4x72xf32>
    %386 = tpu.matmul %383, %385, %cst_169 {dimension_numbers = #tpu.dot_dimension_numbers<[1], [0], [0], [1], [0, 0, 1, 1], [], []>} : vector<4x18xf32>, vector<18x72xf32>, vector<4x72xf32> -> vector<4x72xf32>
    %387 = arith.addf %386, %323 : vector<4x72xf32>
    %388 = math.tanh %387 : vector<4x72xf32>
    %cst_170 = arith.constant 5.000000e-01 : f32
    %389 = vector.broadcast %cst_170 : f32 to vector<4x72xf32>
    %390 = arith.mulf %389, %388 : vector<4x72xf32>
    %cst_171 = arith.constant 5.000000e-01 : f32
    %391 = vector.broadcast %cst_171 : f32 to vector<4x72xf32>
    %392 = arith.addf %390, %391 : vector<4x72xf32>
    %393 = arith.select %21, %392, %388 : vector<4x72xi1>, vector<4x72xf32>
    %394 = vector.extract_strided_slice %393 {offsets = [0, 0], sizes = [4, 18], strides = [1, 1]} : vector<4x72xf32> to vector<4x18xf32>
    %395 = vector.extract_strided_slice %393 {offsets = [0, 18], sizes = [4, 18], strides = [1, 1]} : vector<4x72xf32> to vector<4x18xf32>
    %396 = vector.extract_strided_slice %393 {offsets = [0, 36], sizes = [4, 18], strides = [1, 1]} : vector<4x72xf32> to vector<4x18xf32>
    %397 = vector.extract_strided_slice %393 {offsets = [0, 54], sizes = [4, 18], strides = [1, 1]} : vector<4x72xf32> to vector<4x18xf32>
    %398 = arith.mulf %395, %305 : vector<4x18xf32>
    %399 = arith.mulf %394, %396 : vector<4x18xf32>
    %400 = arith.addf %398, %399 : vector<4x18xf32>
    %401 = math.tanh %400 : vector<4x18xf32>
    %402 = arith.mulf %397, %401 : vector<4x18xf32>
    %c0_172 = arith.constant 0 : index
    %c0_173 = arith.constant 0 : index
    %c0_174 = arith.constant 0 : index
    %403 = vector.load %arg2[%c0_172, %c0_173, %c0_174] : memref<4x18x72xf32, #tpu.memory_space<vmem>>, vector<1x18x72xf32>
    %404 = vector.shape_cast %403 : vector<1x18x72xf32> to vector<18x72xf32>
    %cst_175 = arith.constant dense<0.000000e+00> : vector<4x72xf32>
    %405 = tpu.matmul %345, %404, %cst_175 {dimension_numbers = #tpu.dot_dimension_numbers<[1], [0], [0], [1], [0, 0, 1, 1], [], []>} : vector<4x18xf32>, vector<18x72xf32>, vector<4x72xf32> -> vector<4x72xf32>
    %406 = arith.addf %405, %3 : vector<4x72xf32>
    %c1_176 = arith.constant 1 : index
    %c0_177 = arith.constant 0 : index
    %c0_178 = arith.constant 0 : index
    %407 = vector.load %arg2[%c1_176, %c0_177, %c0_178] : memref<4x18x72xf32, #tpu.memory_space<vmem>>, vector<1x18x72xf32>
    %408 = vector.shape_cast %407 : vector<1x18x72xf32> to vector<18x72xf32>
    %cst_179 = arith.constant dense<0.000000e+00> : vector<4x72xf32>
    %409 = tpu.matmul %364, %408, %cst_179 {dimension_numbers = #tpu.dot_dimension_numbers<[1], [0], [0], [1], [0, 0, 1, 1], [], []>} : vector<4x18xf32>, vector<18x72xf32>, vector<4x72xf32> -> vector<4x72xf32>
    %410 = arith.addf %409, %7 : vector<4x72xf32>
    %c2_180 = arith.constant 2 : index
    %c0_181 = arith.constant 0 : index
    %c0_182 = arith.constant 0 : index
    %411 = vector.load %arg2[%c2_180, %c0_181, %c0_182] : memref<4x18x72xf32, #tpu.memory_space<vmem>>, vector<1x18x72xf32>
    %412 = vector.shape_cast %411 : vector<1x18x72xf32> to vector<18x72xf32>
    %cst_183 = arith.constant dense<0.000000e+00> : vector<4x72xf32>
    %413 = tpu.matmul %383, %412, %cst_183 {dimension_numbers = #tpu.dot_dimension_numbers<[1], [0], [0], [1], [0, 0, 1, 1], [], []>} : vector<4x18xf32>, vector<18x72xf32>, vector<4x72xf32> -> vector<4x72xf32>
    %414 = arith.addf %413, %11 : vector<4x72xf32>
    %c3_184 = arith.constant 3 : index
    %c0_185 = arith.constant 0 : index
    %c0_186 = arith.constant 0 : index
    %415 = vector.load %arg2[%c3_184, %c0_185, %c0_186] : memref<4x18x72xf32, #tpu.memory_space<vmem>>, vector<1x18x72xf32>
    %416 = vector.shape_cast %415 : vector<1x18x72xf32> to vector<18x72xf32>
    %cst_187 = arith.constant dense<0.000000e+00> : vector<4x72xf32>
    %417 = tpu.matmul %402, %416, %cst_187 {dimension_numbers = #tpu.dot_dimension_numbers<[1], [0], [0], [1], [0, 0, 1, 1], [], []>} : vector<4x18xf32>, vector<18x72xf32>, vector<4x72xf32> -> vector<4x72xf32>
    %418 = arith.addf %417, %15 : vector<4x72xf32>
    %c4 = arith.constant 4 : index
    %c0_188 = arith.constant 0 : index
    %c0_189 = arith.constant 0 : index
    %419 = vector.load %arg0[%c4, %c0_188, %c0_189] : memref<8x4x1xf32, #tpu.memory_space<vmem>>, vector<1x4x1xf32>
    %420 = vector.shape_cast %419 : vector<1x4x1xf32> to vector<4x1xf32>
    %c0_190 = arith.constant 0 : index
    %c0_191 = arith.constant 0 : index
    %421 = vector.load %arg1[%c0_190, %c0_191] : memref<1x72xf32, #tpu.memory_space<vmem>>, vector<1x72xf32>
    %422 = vector.broadcast %420 : vector<4x1xf32> to vector<4x72xf32>
    %423 = vector.broadcast %421 : vector<1x72xf32> to vector<4x72xf32>
    %424 = arith.mulf %422, %423 : vector<4x72xf32>
    %425 = arith.addf %424, %406 : vector<4x72xf32>
    %426 = math.tanh %425 : vector<4x72xf32>
    %cst_192 = arith.constant 5.000000e-01 : f32
    %427 = vector.broadcast %cst_192 : f32 to vector<4x72xf32>
    %428 = arith.mulf %427, %426 : vector<4x72xf32>
    %cst_193 = arith.constant 5.000000e-01 : f32
    %429 = vector.broadcast %cst_193 : f32 to vector<4x72xf32>
    %430 = arith.addf %428, %429 : vector<4x72xf32>
    %431 = arith.select %21, %430, %426 : vector<4x72xi1>, vector<4x72xf32>
    %432 = vector.extract_strided_slice %431 {offsets = [0, 0], sizes = [4, 18], strides = [1, 1]} : vector<4x72xf32> to vector<4x18xf32>
    %433 = vector.extract_strided_slice %431 {offsets = [0, 18], sizes = [4, 18], strides = [1, 1]} : vector<4x72xf32> to vector<4x18xf32>
    %434 = vector.extract_strided_slice %431 {offsets = [0, 36], sizes = [4, 18], strides = [1, 1]} : vector<4x72xf32> to vector<4x18xf32>
    %435 = vector.extract_strided_slice %431 {offsets = [0, 54], sizes = [4, 18], strides = [1, 1]} : vector<4x72xf32> to vector<4x18xf32>
    %436 = arith.mulf %433, %343 : vector<4x18xf32>
    %437 = arith.mulf %432, %434 : vector<4x18xf32>
    %438 = arith.addf %436, %437 : vector<4x18xf32>
    %439 = math.tanh %438 : vector<4x18xf32>
    %440 = arith.mulf %435, %439 : vector<4x18xf32>
    %c0_194 = arith.constant 0 : index
    %c0_195 = arith.constant 0 : index
    %c0_196 = arith.constant 0 : index
    %441 = vector.load %arg3[%c0_194, %c0_195, %c0_196] : memref<3x18x72xf32, #tpu.memory_space<vmem>>, vector<1x18x72xf32>
    %442 = vector.shape_cast %441 : vector<1x18x72xf32> to vector<18x72xf32>
    %cst_197 = arith.constant dense<0.000000e+00> : vector<4x72xf32>
    %443 = tpu.matmul %440, %442, %cst_197 {dimension_numbers = #tpu.dot_dimension_numbers<[1], [0], [0], [1], [0, 0, 1, 1], [], []>} : vector<4x18xf32>, vector<18x72xf32>, vector<4x72xf32> -> vector<4x72xf32>
    %444 = arith.addf %443, %410 : vector<4x72xf32>
    %445 = math.tanh %444 : vector<4x72xf32>
    %cst_198 = arith.constant 5.000000e-01 : f32
    %446 = vector.broadcast %cst_198 : f32 to vector<4x72xf32>
    %447 = arith.mulf %446, %445 : vector<4x72xf32>
    %cst_199 = arith.constant 5.000000e-01 : f32
    %448 = vector.broadcast %cst_199 : f32 to vector<4x72xf32>
    %449 = arith.addf %447, %448 : vector<4x72xf32>
    %450 = arith.select %21, %449, %445 : vector<4x72xi1>, vector<4x72xf32>
    %451 = vector.extract_strided_slice %450 {offsets = [0, 0], sizes = [4, 18], strides = [1, 1]} : vector<4x72xf32> to vector<4x18xf32>
    %452 = vector.extract_strided_slice %450 {offsets = [0, 18], sizes = [4, 18], strides = [1, 1]} : vector<4x72xf32> to vector<4x18xf32>
    %453 = vector.extract_strided_slice %450 {offsets = [0, 36], sizes = [4, 18], strides = [1, 1]} : vector<4x72xf32> to vector<4x18xf32>
    %454 = vector.extract_strided_slice %450 {offsets = [0, 54], sizes = [4, 18], strides = [1, 1]} : vector<4x72xf32> to vector<4x18xf32>
    %455 = arith.mulf %452, %362 : vector<4x18xf32>
    %456 = arith.mulf %451, %453 : vector<4x18xf32>
    %457 = arith.addf %455, %456 : vector<4x18xf32>
    %458 = math.tanh %457 : vector<4x18xf32>
    %459 = arith.mulf %454, %458 : vector<4x18xf32>
    %c1_200 = arith.constant 1 : index
    %c0_201 = arith.constant 0 : index
    %c0_202 = arith.constant 0 : index
    %460 = vector.load %arg3[%c1_200, %c0_201, %c0_202] : memref<3x18x72xf32, #tpu.memory_space<vmem>>, vector<1x18x72xf32>
    %461 = vector.shape_cast %460 : vector<1x18x72xf32> to vector<18x72xf32>
    %cst_203 = arith.constant dense<0.000000e+00> : vector<4x72xf32>
    %462 = tpu.matmul %459, %461, %cst_203 {dimension_numbers = #tpu.dot_dimension_numbers<[1], [0], [0], [1], [0, 0, 1, 1], [], []>} : vector<4x18xf32>, vector<18x72xf32>, vector<4x72xf32> -> vector<4x72xf32>
    %463 = arith.addf %462, %414 : vector<4x72xf32>
    %464 = math.tanh %463 : vector<4x72xf32>
    %cst_204 = arith.constant 5.000000e-01 : f32
    %465 = vector.broadcast %cst_204 : f32 to vector<4x72xf32>
    %466 = arith.mulf %465, %464 : vector<4x72xf32>
    %cst_205 = arith.constant 5.000000e-01 : f32
    %467 = vector.broadcast %cst_205 : f32 to vector<4x72xf32>
    %468 = arith.addf %466, %467 : vector<4x72xf32>
    %469 = arith.select %21, %468, %464 : vector<4x72xi1>, vector<4x72xf32>
    %470 = vector.extract_strided_slice %469 {offsets = [0, 0], sizes = [4, 18], strides = [1, 1]} : vector<4x72xf32> to vector<4x18xf32>
    %471 = vector.extract_strided_slice %469 {offsets = [0, 18], sizes = [4, 18], strides = [1, 1]} : vector<4x72xf32> to vector<4x18xf32>
    %472 = vector.extract_strided_slice %469 {offsets = [0, 36], sizes = [4, 18], strides = [1, 1]} : vector<4x72xf32> to vector<4x18xf32>
    %473 = vector.extract_strided_slice %469 {offsets = [0, 54], sizes = [4, 18], strides = [1, 1]} : vector<4x72xf32> to vector<4x18xf32>
    %474 = arith.mulf %471, %381 : vector<4x18xf32>
    %475 = arith.mulf %470, %472 : vector<4x18xf32>
    %476 = arith.addf %474, %475 : vector<4x18xf32>
    %477 = math.tanh %476 : vector<4x18xf32>
    %478 = arith.mulf %473, %477 : vector<4x18xf32>
    %c2_206 = arith.constant 2 : index
    %c0_207 = arith.constant 0 : index
    %c0_208 = arith.constant 0 : index
    %479 = vector.load %arg3[%c2_206, %c0_207, %c0_208] : memref<3x18x72xf32, #tpu.memory_space<vmem>>, vector<1x18x72xf32>
    %480 = vector.shape_cast %479 : vector<1x18x72xf32> to vector<18x72xf32>
    %cst_209 = arith.constant dense<0.000000e+00> : vector<4x72xf32>
    %481 = tpu.matmul %478, %480, %cst_209 {dimension_numbers = #tpu.dot_dimension_numbers<[1], [0], [0], [1], [0, 0, 1, 1], [], []>} : vector<4x18xf32>, vector<18x72xf32>, vector<4x72xf32> -> vector<4x72xf32>
    %482 = arith.addf %481, %418 : vector<4x72xf32>
    %483 = math.tanh %482 : vector<4x72xf32>
    %cst_210 = arith.constant 5.000000e-01 : f32
    %484 = vector.broadcast %cst_210 : f32 to vector<4x72xf32>
    %485 = arith.mulf %484, %483 : vector<4x72xf32>
    %cst_211 = arith.constant 5.000000e-01 : f32
    %486 = vector.broadcast %cst_211 : f32 to vector<4x72xf32>
    %487 = arith.addf %485, %486 : vector<4x72xf32>
    %488 = arith.select %21, %487, %483 : vector<4x72xi1>, vector<4x72xf32>
    %489 = vector.extract_strided_slice %488 {offsets = [0, 0], sizes = [4, 18], strides = [1, 1]} : vector<4x72xf32> to vector<4x18xf32>
    %490 = vector.extract_strided_slice %488 {offsets = [0, 18], sizes = [4, 18], strides = [1, 1]} : vector<4x72xf32> to vector<4x18xf32>
    %491 = vector.extract_strided_slice %488 {offsets = [0, 36], sizes = [4, 18], strides = [1, 1]} : vector<4x72xf32> to vector<4x18xf32>
    %492 = vector.extract_strided_slice %488 {offsets = [0, 54], sizes = [4, 18], strides = [1, 1]} : vector<4x72xf32> to vector<4x18xf32>
    %493 = arith.mulf %490, %400 : vector<4x18xf32>
    %494 = arith.mulf %489, %491 : vector<4x18xf32>
    %495 = arith.addf %493, %494 : vector<4x18xf32>
    %496 = math.tanh %495 : vector<4x18xf32>
    %497 = arith.mulf %492, %496 : vector<4x18xf32>
    %c0_212 = arith.constant 0 : index
    %c0_213 = arith.constant 0 : index
    %c0_214 = arith.constant 0 : index
    %498 = vector.load %arg2[%c0_212, %c0_213, %c0_214] : memref<4x18x72xf32, #tpu.memory_space<vmem>>, vector<1x18x72xf32>
    %499 = vector.shape_cast %498 : vector<1x18x72xf32> to vector<18x72xf32>
    %cst_215 = arith.constant dense<0.000000e+00> : vector<4x72xf32>
    %500 = tpu.matmul %440, %499, %cst_215 {dimension_numbers = #tpu.dot_dimension_numbers<[1], [0], [0], [1], [0, 0, 1, 1], [], []>} : vector<4x18xf32>, vector<18x72xf32>, vector<4x72xf32> -> vector<4x72xf32>
    %501 = arith.addf %500, %3 : vector<4x72xf32>
    %c1_216 = arith.constant 1 : index
    %c0_217 = arith.constant 0 : index
    %c0_218 = arith.constant 0 : index
    %502 = vector.load %arg2[%c1_216, %c0_217, %c0_218] : memref<4x18x72xf32, #tpu.memory_space<vmem>>, vector<1x18x72xf32>
    %503 = vector.shape_cast %502 : vector<1x18x72xf32> to vector<18x72xf32>
    %cst_219 = arith.constant dense<0.000000e+00> : vector<4x72xf32>
    %504 = tpu.matmul %459, %503, %cst_219 {dimension_numbers = #tpu.dot_dimension_numbers<[1], [0], [0], [1], [0, 0, 1, 1], [], []>} : vector<4x18xf32>, vector<18x72xf32>, vector<4x72xf32> -> vector<4x72xf32>
    %505 = arith.addf %504, %7 : vector<4x72xf32>
    %c2_220 = arith.constant 2 : index
    %c0_221 = arith.constant 0 : index
    %c0_222 = arith.constant 0 : index
    %506 = vector.load %arg2[%c2_220, %c0_221, %c0_222] : memref<4x18x72xf32, #tpu.memory_space<vmem>>, vector<1x18x72xf32>
    %507 = vector.shape_cast %506 : vector<1x18x72xf32> to vector<18x72xf32>
    %cst_223 = arith.constant dense<0.000000e+00> : vector<4x72xf32>
    %508 = tpu.matmul %478, %507, %cst_223 {dimension_numbers = #tpu.dot_dimension_numbers<[1], [0], [0], [1], [0, 0, 1, 1], [], []>} : vector<4x18xf32>, vector<18x72xf32>, vector<4x72xf32> -> vector<4x72xf32>
    %509 = arith.addf %508, %11 : vector<4x72xf32>
    %c3_224 = arith.constant 3 : index
    %c0_225 = arith.constant 0 : index
    %c0_226 = arith.constant 0 : index
    %510 = vector.load %arg2[%c3_224, %c0_225, %c0_226] : memref<4x18x72xf32, #tpu.memory_space<vmem>>, vector<1x18x72xf32>
    %511 = vector.shape_cast %510 : vector<1x18x72xf32> to vector<18x72xf32>
    %cst_227 = arith.constant dense<0.000000e+00> : vector<4x72xf32>
    %512 = tpu.matmul %497, %511, %cst_227 {dimension_numbers = #tpu.dot_dimension_numbers<[1], [0], [0], [1], [0, 0, 1, 1], [], []>} : vector<4x18xf32>, vector<18x72xf32>, vector<4x72xf32> -> vector<4x72xf32>
    %513 = arith.addf %512, %15 : vector<4x72xf32>
    %c5 = arith.constant 5 : index
    %c0_228 = arith.constant 0 : index
    %c0_229 = arith.constant 0 : index
    %514 = vector.load %arg0[%c5, %c0_228, %c0_229] : memref<8x4x1xf32, #tpu.memory_space<vmem>>, vector<1x4x1xf32>
    %515 = vector.shape_cast %514 : vector<1x4x1xf32> to vector<4x1xf32>
    %c0_230 = arith.constant 0 : index
    %c0_231 = arith.constant 0 : index
    %516 = vector.load %arg1[%c0_230, %c0_231] : memref<1x72xf32, #tpu.memory_space<vmem>>, vector<1x72xf32>
    %517 = vector.broadcast %515 : vector<4x1xf32> to vector<4x72xf32>
    %518 = vector.broadcast %516 : vector<1x72xf32> to vector<4x72xf32>
    %519 = arith.mulf %517, %518 : vector<4x72xf32>
    %520 = arith.addf %519, %501 : vector<4x72xf32>
    %521 = math.tanh %520 : vector<4x72xf32>
    %cst_232 = arith.constant 5.000000e-01 : f32
    %522 = vector.broadcast %cst_232 : f32 to vector<4x72xf32>
    %523 = arith.mulf %522, %521 : vector<4x72xf32>
    %cst_233 = arith.constant 5.000000e-01 : f32
    %524 = vector.broadcast %cst_233 : f32 to vector<4x72xf32>
    %525 = arith.addf %523, %524 : vector<4x72xf32>
    %526 = arith.select %21, %525, %521 : vector<4x72xi1>, vector<4x72xf32>
    %527 = vector.extract_strided_slice %526 {offsets = [0, 0], sizes = [4, 18], strides = [1, 1]} : vector<4x72xf32> to vector<4x18xf32>
    %528 = vector.extract_strided_slice %526 {offsets = [0, 18], sizes = [4, 18], strides = [1, 1]} : vector<4x72xf32> to vector<4x18xf32>
    %529 = vector.extract_strided_slice %526 {offsets = [0, 36], sizes = [4, 18], strides = [1, 1]} : vector<4x72xf32> to vector<4x18xf32>
    %530 = vector.extract_strided_slice %526 {offsets = [0, 54], sizes = [4, 18], strides = [1, 1]} : vector<4x72xf32> to vector<4x18xf32>
    %531 = arith.mulf %528, %438 : vector<4x18xf32>
    %532 = arith.mulf %527, %529 : vector<4x18xf32>
    %533 = arith.addf %531, %532 : vector<4x18xf32>
    %534 = math.tanh %533 : vector<4x18xf32>
    %535 = arith.mulf %530, %534 : vector<4x18xf32>
    %c0_234 = arith.constant 0 : index
    %c0_235 = arith.constant 0 : index
    %c0_236 = arith.constant 0 : index
    %536 = vector.load %arg3[%c0_234, %c0_235, %c0_236] : memref<3x18x72xf32, #tpu.memory_space<vmem>>, vector<1x18x72xf32>
    %537 = vector.shape_cast %536 : vector<1x18x72xf32> to vector<18x72xf32>
    %cst_237 = arith.constant dense<0.000000e+00> : vector<4x72xf32>
    %538 = tpu.matmul %535, %537, %cst_237 {dimension_numbers = #tpu.dot_dimension_numbers<[1], [0], [0], [1], [0, 0, 1, 1], [], []>} : vector<4x18xf32>, vector<18x72xf32>, vector<4x72xf32> -> vector<4x72xf32>
    %539 = arith.addf %538, %505 : vector<4x72xf32>
    %540 = math.tanh %539 : vector<4x72xf32>
    %cst_238 = arith.constant 5.000000e-01 : f32
    %541 = vector.broadcast %cst_238 : f32 to vector<4x72xf32>
    %542 = arith.mulf %541, %540 : vector<4x72xf32>
    %cst_239 = arith.constant 5.000000e-01 : f32
    %543 = vector.broadcast %cst_239 : f32 to vector<4x72xf32>
    %544 = arith.addf %542, %543 : vector<4x72xf32>
    %545 = arith.select %21, %544, %540 : vector<4x72xi1>, vector<4x72xf32>
    %546 = vector.extract_strided_slice %545 {offsets = [0, 0], sizes = [4, 18], strides = [1, 1]} : vector<4x72xf32> to vector<4x18xf32>
    %547 = vector.extract_strided_slice %545 {offsets = [0, 18], sizes = [4, 18], strides = [1, 1]} : vector<4x72xf32> to vector<4x18xf32>
    %548 = vector.extract_strided_slice %545 {offsets = [0, 36], sizes = [4, 18], strides = [1, 1]} : vector<4x72xf32> to vector<4x18xf32>
    %549 = vector.extract_strided_slice %545 {offsets = [0, 54], sizes = [4, 18], strides = [1, 1]} : vector<4x72xf32> to vector<4x18xf32>
    %550 = arith.mulf %547, %457 : vector<4x18xf32>
    %551 = arith.mulf %546, %548 : vector<4x18xf32>
    %552 = arith.addf %550, %551 : vector<4x18xf32>
    %553 = math.tanh %552 : vector<4x18xf32>
    %554 = arith.mulf %549, %553 : vector<4x18xf32>
    %c1_240 = arith.constant 1 : index
    %c0_241 = arith.constant 0 : index
    %c0_242 = arith.constant 0 : index
    %555 = vector.load %arg3[%c1_240, %c0_241, %c0_242] : memref<3x18x72xf32, #tpu.memory_space<vmem>>, vector<1x18x72xf32>
    %556 = vector.shape_cast %555 : vector<1x18x72xf32> to vector<18x72xf32>
    %cst_243 = arith.constant dense<0.000000e+00> : vector<4x72xf32>
    %557 = tpu.matmul %554, %556, %cst_243 {dimension_numbers = #tpu.dot_dimension_numbers<[1], [0], [0], [1], [0, 0, 1, 1], [], []>} : vector<4x18xf32>, vector<18x72xf32>, vector<4x72xf32> -> vector<4x72xf32>
    %558 = arith.addf %557, %509 : vector<4x72xf32>
    %559 = math.tanh %558 : vector<4x72xf32>
    %cst_244 = arith.constant 5.000000e-01 : f32
    %560 = vector.broadcast %cst_244 : f32 to vector<4x72xf32>
    %561 = arith.mulf %560, %559 : vector<4x72xf32>
    %cst_245 = arith.constant 5.000000e-01 : f32
    %562 = vector.broadcast %cst_245 : f32 to vector<4x72xf32>
    %563 = arith.addf %561, %562 : vector<4x72xf32>
    %564 = arith.select %21, %563, %559 : vector<4x72xi1>, vector<4x72xf32>
    %565 = vector.extract_strided_slice %564 {offsets = [0, 0], sizes = [4, 18], strides = [1, 1]} : vector<4x72xf32> to vector<4x18xf32>
    %566 = vector.extract_strided_slice %564 {offsets = [0, 18], sizes = [4, 18], strides = [1, 1]} : vector<4x72xf32> to vector<4x18xf32>
    %567 = vector.extract_strided_slice %564 {offsets = [0, 36], sizes = [4, 18], strides = [1, 1]} : vector<4x72xf32> to vector<4x18xf32>
    %568 = vector.extract_strided_slice %564 {offsets = [0, 54], sizes = [4, 18], strides = [1, 1]} : vector<4x72xf32> to vector<4x18xf32>
    %569 = arith.mulf %566, %476 : vector<4x18xf32>
    %570 = arith.mulf %565, %567 : vector<4x18xf32>
    %571 = arith.addf %569, %570 : vector<4x18xf32>
    %572 = math.tanh %571 : vector<4x18xf32>
    %573 = arith.mulf %568, %572 : vector<4x18xf32>
    %c2_246 = arith.constant 2 : index
    %c0_247 = arith.constant 0 : index
    %c0_248 = arith.constant 0 : index
    %574 = vector.load %arg3[%c2_246, %c0_247, %c0_248] : memref<3x18x72xf32, #tpu.memory_space<vmem>>, vector<1x18x72xf32>
    %575 = vector.shape_cast %574 : vector<1x18x72xf32> to vector<18x72xf32>
    %cst_249 = arith.constant dense<0.000000e+00> : vector<4x72xf32>
    %576 = tpu.matmul %573, %575, %cst_249 {dimension_numbers = #tpu.dot_dimension_numbers<[1], [0], [0], [1], [0, 0, 1, 1], [], []>} : vector<4x18xf32>, vector<18x72xf32>, vector<4x72xf32> -> vector<4x72xf32>
    %577 = arith.addf %576, %513 : vector<4x72xf32>
    %578 = math.tanh %577 : vector<4x72xf32>
    %cst_250 = arith.constant 5.000000e-01 : f32
    %579 = vector.broadcast %cst_250 : f32 to vector<4x72xf32>
    %580 = arith.mulf %579, %578 : vector<4x72xf32>
    %cst_251 = arith.constant 5.000000e-01 : f32
    %581 = vector.broadcast %cst_251 : f32 to vector<4x72xf32>
    %582 = arith.addf %580, %581 : vector<4x72xf32>
    %583 = arith.select %21, %582, %578 : vector<4x72xi1>, vector<4x72xf32>
    %584 = vector.extract_strided_slice %583 {offsets = [0, 0], sizes = [4, 18], strides = [1, 1]} : vector<4x72xf32> to vector<4x18xf32>
    %585 = vector.extract_strided_slice %583 {offsets = [0, 18], sizes = [4, 18], strides = [1, 1]} : vector<4x72xf32> to vector<4x18xf32>
    %586 = vector.extract_strided_slice %583 {offsets = [0, 36], sizes = [4, 18], strides = [1, 1]} : vector<4x72xf32> to vector<4x18xf32>
    %587 = vector.extract_strided_slice %583 {offsets = [0, 54], sizes = [4, 18], strides = [1, 1]} : vector<4x72xf32> to vector<4x18xf32>
    %588 = arith.mulf %585, %495 : vector<4x18xf32>
    %589 = arith.mulf %584, %586 : vector<4x18xf32>
    %590 = arith.addf %588, %589 : vector<4x18xf32>
    %591 = math.tanh %590 : vector<4x18xf32>
    %592 = arith.mulf %587, %591 : vector<4x18xf32>
    %c0_252 = arith.constant 0 : index
    %c0_253 = arith.constant 0 : index
    %c0_254 = arith.constant 0 : index
    %593 = vector.load %arg2[%c0_252, %c0_253, %c0_254] : memref<4x18x72xf32, #tpu.memory_space<vmem>>, vector<1x18x72xf32>
    %594 = vector.shape_cast %593 : vector<1x18x72xf32> to vector<18x72xf32>
    %cst_255 = arith.constant dense<0.000000e+00> : vector<4x72xf32>
    %595 = tpu.matmul %535, %594, %cst_255 {dimension_numbers = #tpu.dot_dimension_numbers<[1], [0], [0], [1], [0, 0, 1, 1], [], []>} : vector<4x18xf32>, vector<18x72xf32>, vector<4x72xf32> -> vector<4x72xf32>
    %596 = arith.addf %595, %3 : vector<4x72xf32>
    %c1_256 = arith.constant 1 : index
    %c0_257 = arith.constant 0 : index
    %c0_258 = arith.constant 0 : index
    %597 = vector.load %arg2[%c1_256, %c0_257, %c0_258] : memref<4x18x72xf32, #tpu.memory_space<vmem>>, vector<1x18x72xf32>
    %598 = vector.shape_cast %597 : vector<1x18x72xf32> to vector<18x72xf32>
    %cst_259 = arith.constant dense<0.000000e+00> : vector<4x72xf32>
    %599 = tpu.matmul %554, %598, %cst_259 {dimension_numbers = #tpu.dot_dimension_numbers<[1], [0], [0], [1], [0, 0, 1, 1], [], []>} : vector<4x18xf32>, vector<18x72xf32>, vector<4x72xf32> -> vector<4x72xf32>
    %600 = arith.addf %599, %7 : vector<4x72xf32>
    %c2_260 = arith.constant 2 : index
    %c0_261 = arith.constant 0 : index
    %c0_262 = arith.constant 0 : index
    %601 = vector.load %arg2[%c2_260, %c0_261, %c0_262] : memref<4x18x72xf32, #tpu.memory_space<vmem>>, vector<1x18x72xf32>
    %602 = vector.shape_cast %601 : vector<1x18x72xf32> to vector<18x72xf32>
    %cst_263 = arith.constant dense<0.000000e+00> : vector<4x72xf32>
    %603 = tpu.matmul %573, %602, %cst_263 {dimension_numbers = #tpu.dot_dimension_numbers<[1], [0], [0], [1], [0, 0, 1, 1], [], []>} : vector<4x18xf32>, vector<18x72xf32>, vector<4x72xf32> -> vector<4x72xf32>
    %604 = arith.addf %603, %11 : vector<4x72xf32>
    %c3_264 = arith.constant 3 : index
    %c0_265 = arith.constant 0 : index
    %c0_266 = arith.constant 0 : index
    %605 = vector.load %arg2[%c3_264, %c0_265, %c0_266] : memref<4x18x72xf32, #tpu.memory_space<vmem>>, vector<1x18x72xf32>
    %606 = vector.shape_cast %605 : vector<1x18x72xf32> to vector<18x72xf32>
    %cst_267 = arith.constant dense<0.000000e+00> : vector<4x72xf32>
    %607 = tpu.matmul %592, %606, %cst_267 {dimension_numbers = #tpu.dot_dimension_numbers<[1], [0], [0], [1], [0, 0, 1, 1], [], []>} : vector<4x18xf32>, vector<18x72xf32>, vector<4x72xf32> -> vector<4x72xf32>
    %608 = arith.addf %607, %15 : vector<4x72xf32>
    %c6 = arith.constant 6 : index
    %c0_268 = arith.constant 0 : index
    %c0_269 = arith.constant 0 : index
    %609 = vector.load %arg0[%c6, %c0_268, %c0_269] : memref<8x4x1xf32, #tpu.memory_space<vmem>>, vector<1x4x1xf32>
    %610 = vector.shape_cast %609 : vector<1x4x1xf32> to vector<4x1xf32>
    %c0_270 = arith.constant 0 : index
    %c0_271 = arith.constant 0 : index
    %611 = vector.load %arg1[%c0_270, %c0_271] : memref<1x72xf32, #tpu.memory_space<vmem>>, vector<1x72xf32>
    %612 = vector.broadcast %610 : vector<4x1xf32> to vector<4x72xf32>
    %613 = vector.broadcast %611 : vector<1x72xf32> to vector<4x72xf32>
    %614 = arith.mulf %612, %613 : vector<4x72xf32>
    %615 = arith.addf %614, %596 : vector<4x72xf32>
    %616 = math.tanh %615 : vector<4x72xf32>
    %cst_272 = arith.constant 5.000000e-01 : f32
    %617 = vector.broadcast %cst_272 : f32 to vector<4x72xf32>
    %618 = arith.mulf %617, %616 : vector<4x72xf32>
    %cst_273 = arith.constant 5.000000e-01 : f32
    %619 = vector.broadcast %cst_273 : f32 to vector<4x72xf32>
    %620 = arith.addf %618, %619 : vector<4x72xf32>
    %621 = arith.select %21, %620, %616 : vector<4x72xi1>, vector<4x72xf32>
    %622 = vector.extract_strided_slice %621 {offsets = [0, 0], sizes = [4, 18], strides = [1, 1]} : vector<4x72xf32> to vector<4x18xf32>
    %623 = vector.extract_strided_slice %621 {offsets = [0, 18], sizes = [4, 18], strides = [1, 1]} : vector<4x72xf32> to vector<4x18xf32>
    %624 = vector.extract_strided_slice %621 {offsets = [0, 36], sizes = [4, 18], strides = [1, 1]} : vector<4x72xf32> to vector<4x18xf32>
    %625 = vector.extract_strided_slice %621 {offsets = [0, 54], sizes = [4, 18], strides = [1, 1]} : vector<4x72xf32> to vector<4x18xf32>
    %626 = arith.mulf %623, %533 : vector<4x18xf32>
    %627 = arith.mulf %622, %624 : vector<4x18xf32>
    %628 = arith.addf %626, %627 : vector<4x18xf32>
    %629 = math.tanh %628 : vector<4x18xf32>
    %630 = arith.mulf %625, %629 : vector<4x18xf32>
    %c0_274 = arith.constant 0 : index
    %c0_275 = arith.constant 0 : index
    %c0_276 = arith.constant 0 : index
    %631 = vector.load %arg3[%c0_274, %c0_275, %c0_276] : memref<3x18x72xf32, #tpu.memory_space<vmem>>, vector<1x18x72xf32>
    %632 = vector.shape_cast %631 : vector<1x18x72xf32> to vector<18x72xf32>
    %cst_277 = arith.constant dense<0.000000e+00> : vector<4x72xf32>
    %633 = tpu.matmul %630, %632, %cst_277 {dimension_numbers = #tpu.dot_dimension_numbers<[1], [0], [0], [1], [0, 0, 1, 1], [], []>} : vector<4x18xf32>, vector<18x72xf32>, vector<4x72xf32> -> vector<4x72xf32>
    %634 = arith.addf %633, %600 : vector<4x72xf32>
    %635 = math.tanh %634 : vector<4x72xf32>
    %cst_278 = arith.constant 5.000000e-01 : f32
    %636 = vector.broadcast %cst_278 : f32 to vector<4x72xf32>
    %637 = arith.mulf %636, %635 : vector<4x72xf32>
    %cst_279 = arith.constant 5.000000e-01 : f32
    %638 = vector.broadcast %cst_279 : f32 to vector<4x72xf32>
    %639 = arith.addf %637, %638 : vector<4x72xf32>
    %640 = arith.select %21, %639, %635 : vector<4x72xi1>, vector<4x72xf32>
    %641 = vector.extract_strided_slice %640 {offsets = [0, 0], sizes = [4, 18], strides = [1, 1]} : vector<4x72xf32> to vector<4x18xf32>
    %642 = vector.extract_strided_slice %640 {offsets = [0, 18], sizes = [4, 18], strides = [1, 1]} : vector<4x72xf32> to vector<4x18xf32>
    %643 = vector.extract_strided_slice %640 {offsets = [0, 36], sizes = [4, 18], strides = [1, 1]} : vector<4x72xf32> to vector<4x18xf32>
    %644 = vector.extract_strided_slice %640 {offsets = [0, 54], sizes = [4, 18], strides = [1, 1]} : vector<4x72xf32> to vector<4x18xf32>
    %645 = arith.mulf %642, %552 : vector<4x18xf32>
    %646 = arith.mulf %641, %643 : vector<4x18xf32>
    %647 = arith.addf %645, %646 : vector<4x18xf32>
    %648 = math.tanh %647 : vector<4x18xf32>
    %649 = arith.mulf %644, %648 : vector<4x18xf32>
    %c1_280 = arith.constant 1 : index
    %c0_281 = arith.constant 0 : index
    %c0_282 = arith.constant 0 : index
    %650 = vector.load %arg3[%c1_280, %c0_281, %c0_282] : memref<3x18x72xf32, #tpu.memory_space<vmem>>, vector<1x18x72xf32>
    %651 = vector.shape_cast %650 : vector<1x18x72xf32> to vector<18x72xf32>
    %cst_283 = arith.constant dense<0.000000e+00> : vector<4x72xf32>
    %652 = tpu.matmul %649, %651, %cst_283 {dimension_numbers = #tpu.dot_dimension_numbers<[1], [0], [0], [1], [0, 0, 1, 1], [], []>} : vector<4x18xf32>, vector<18x72xf32>, vector<4x72xf32> -> vector<4x72xf32>
    %653 = arith.addf %652, %604 : vector<4x72xf32>
    %654 = math.tanh %653 : vector<4x72xf32>
    %cst_284 = arith.constant 5.000000e-01 : f32
    %655 = vector.broadcast %cst_284 : f32 to vector<4x72xf32>
    %656 = arith.mulf %655, %654 : vector<4x72xf32>
    %cst_285 = arith.constant 5.000000e-01 : f32
    %657 = vector.broadcast %cst_285 : f32 to vector<4x72xf32>
    %658 = arith.addf %656, %657 : vector<4x72xf32>
    %659 = arith.select %21, %658, %654 : vector<4x72xi1>, vector<4x72xf32>
    %660 = vector.extract_strided_slice %659 {offsets = [0, 0], sizes = [4, 18], strides = [1, 1]} : vector<4x72xf32> to vector<4x18xf32>
    %661 = vector.extract_strided_slice %659 {offsets = [0, 18], sizes = [4, 18], strides = [1, 1]} : vector<4x72xf32> to vector<4x18xf32>
    %662 = vector.extract_strided_slice %659 {offsets = [0, 36], sizes = [4, 18], strides = [1, 1]} : vector<4x72xf32> to vector<4x18xf32>
    %663 = vector.extract_strided_slice %659 {offsets = [0, 54], sizes = [4, 18], strides = [1, 1]} : vector<4x72xf32> to vector<4x18xf32>
    %664 = arith.mulf %661, %571 : vector<4x18xf32>
    %665 = arith.mulf %660, %662 : vector<4x18xf32>
    %666 = arith.addf %664, %665 : vector<4x18xf32>
    %667 = math.tanh %666 : vector<4x18xf32>
    %668 = arith.mulf %663, %667 : vector<4x18xf32>
    %c2_286 = arith.constant 2 : index
    %c0_287 = arith.constant 0 : index
    %c0_288 = arith.constant 0 : index
    %669 = vector.load %arg3[%c2_286, %c0_287, %c0_288] : memref<3x18x72xf32, #tpu.memory_space<vmem>>, vector<1x18x72xf32>
    %670 = vector.shape_cast %669 : vector<1x18x72xf32> to vector<18x72xf32>
    %cst_289 = arith.constant dense<0.000000e+00> : vector<4x72xf32>
    %671 = tpu.matmul %668, %670, %cst_289 {dimension_numbers = #tpu.dot_dimension_numbers<[1], [0], [0], [1], [0, 0, 1, 1], [], []>} : vector<4x18xf32>, vector<18x72xf32>, vector<4x72xf32> -> vector<4x72xf32>
    %672 = arith.addf %671, %608 : vector<4x72xf32>
    %673 = math.tanh %672 : vector<4x72xf32>
    %cst_290 = arith.constant 5.000000e-01 : f32
    %674 = vector.broadcast %cst_290 : f32 to vector<4x72xf32>
    %675 = arith.mulf %674, %673 : vector<4x72xf32>
    %cst_291 = arith.constant 5.000000e-01 : f32
    %676 = vector.broadcast %cst_291 : f32 to vector<4x72xf32>
    %677 = arith.addf %675, %676 : vector<4x72xf32>
    %678 = arith.select %21, %677, %673 : vector<4x72xi1>, vector<4x72xf32>
    %679 = vector.extract_strided_slice %678 {offsets = [0, 0], sizes = [4, 18], strides = [1, 1]} : vector<4x72xf32> to vector<4x18xf32>
    %680 = vector.extract_strided_slice %678 {offsets = [0, 18], sizes = [4, 18], strides = [1, 1]} : vector<4x72xf32> to vector<4x18xf32>
    %681 = vector.extract_strided_slice %678 {offsets = [0, 36], sizes = [4, 18], strides = [1, 1]} : vector<4x72xf32> to vector<4x18xf32>
    %682 = vector.extract_strided_slice %678 {offsets = [0, 54], sizes = [4, 18], strides = [1, 1]} : vector<4x72xf32> to vector<4x18xf32>
    %683 = arith.mulf %680, %590 : vector<4x18xf32>
    %684 = arith.mulf %679, %681 : vector<4x18xf32>
    %685 = arith.addf %683, %684 : vector<4x18xf32>
    %686 = math.tanh %685 : vector<4x18xf32>
    %687 = arith.mulf %682, %686 : vector<4x18xf32>
    %c0_292 = arith.constant 0 : index
    %c0_293 = arith.constant 0 : index
    %c0_294 = arith.constant 0 : index
    %688 = vector.load %arg2[%c0_292, %c0_293, %c0_294] : memref<4x18x72xf32, #tpu.memory_space<vmem>>, vector<1x18x72xf32>
    %689 = vector.shape_cast %688 : vector<1x18x72xf32> to vector<18x72xf32>
    %cst_295 = arith.constant dense<0.000000e+00> : vector<4x72xf32>
    %690 = tpu.matmul %630, %689, %cst_295 {dimension_numbers = #tpu.dot_dimension_numbers<[1], [0], [0], [1], [0, 0, 1, 1], [], []>} : vector<4x18xf32>, vector<18x72xf32>, vector<4x72xf32> -> vector<4x72xf32>
    %691 = arith.addf %690, %3 : vector<4x72xf32>
    %c1_296 = arith.constant 1 : index
    %c0_297 = arith.constant 0 : index
    %c0_298 = arith.constant 0 : index
    %692 = vector.load %arg2[%c1_296, %c0_297, %c0_298] : memref<4x18x72xf32, #tpu.memory_space<vmem>>, vector<1x18x72xf32>
    %693 = vector.shape_cast %692 : vector<1x18x72xf32> to vector<18x72xf32>
    %cst_299 = arith.constant dense<0.000000e+00> : vector<4x72xf32>
    %694 = tpu.matmul %649, %693, %cst_299 {dimension_numbers = #tpu.dot_dimension_numbers<[1], [0], [0], [1], [0, 0, 1, 1], [], []>} : vector<4x18xf32>, vector<18x72xf32>, vector<4x72xf32> -> vector<4x72xf32>
    %695 = arith.addf %694, %7 : vector<4x72xf32>
    %c2_300 = arith.constant 2 : index
    %c0_301 = arith.constant 0 : index
    %c0_302 = arith.constant 0 : index
    %696 = vector.load %arg2[%c2_300, %c0_301, %c0_302] : memref<4x18x72xf32, #tpu.memory_space<vmem>>, vector<1x18x72xf32>
    %697 = vector.shape_cast %696 : vector<1x18x72xf32> to vector<18x72xf32>
    %cst_303 = arith.constant dense<0.000000e+00> : vector<4x72xf32>
    %698 = tpu.matmul %668, %697, %cst_303 {dimension_numbers = #tpu.dot_dimension_numbers<[1], [0], [0], [1], [0, 0, 1, 1], [], []>} : vector<4x18xf32>, vector<18x72xf32>, vector<4x72xf32> -> vector<4x72xf32>
    %699 = arith.addf %698, %11 : vector<4x72xf32>
    %c3_304 = arith.constant 3 : index
    %c0_305 = arith.constant 0 : index
    %c0_306 = arith.constant 0 : index
    %700 = vector.load %arg2[%c3_304, %c0_305, %c0_306] : memref<4x18x72xf32, #tpu.memory_space<vmem>>, vector<1x18x72xf32>
    %701 = vector.shape_cast %700 : vector<1x18x72xf32> to vector<18x72xf32>
    %cst_307 = arith.constant dense<0.000000e+00> : vector<4x72xf32>
    %702 = tpu.matmul %687, %701, %cst_307 {dimension_numbers = #tpu.dot_dimension_numbers<[1], [0], [0], [1], [0, 0, 1, 1], [], []>} : vector<4x18xf32>, vector<18x72xf32>, vector<4x72xf32> -> vector<4x72xf32>
    %703 = arith.addf %702, %15 : vector<4x72xf32>
    %c7 = arith.constant 7 : index
    %c0_308 = arith.constant 0 : index
    %c0_309 = arith.constant 0 : index
    %704 = vector.load %arg0[%c7, %c0_308, %c0_309] : memref<8x4x1xf32, #tpu.memory_space<vmem>>, vector<1x4x1xf32>
    %705 = vector.shape_cast %704 : vector<1x4x1xf32> to vector<4x1xf32>
    %c0_310 = arith.constant 0 : index
    %c0_311 = arith.constant 0 : index
    %706 = vector.load %arg1[%c0_310, %c0_311] : memref<1x72xf32, #tpu.memory_space<vmem>>, vector<1x72xf32>
    %707 = vector.broadcast %705 : vector<4x1xf32> to vector<4x72xf32>
    %708 = vector.broadcast %706 : vector<1x72xf32> to vector<4x72xf32>
    %709 = arith.mulf %707, %708 : vector<4x72xf32>
    %710 = arith.addf %709, %691 : vector<4x72xf32>
    %711 = math.tanh %710 : vector<4x72xf32>
    %cst_312 = arith.constant 5.000000e-01 : f32
    %712 = vector.broadcast %cst_312 : f32 to vector<4x72xf32>
    %713 = arith.mulf %712, %711 : vector<4x72xf32>
    %cst_313 = arith.constant 5.000000e-01 : f32
    %714 = vector.broadcast %cst_313 : f32 to vector<4x72xf32>
    %715 = arith.addf %713, %714 : vector<4x72xf32>
    %716 = arith.select %21, %715, %711 : vector<4x72xi1>, vector<4x72xf32>
    %717 = vector.extract_strided_slice %716 {offsets = [0, 0], sizes = [4, 18], strides = [1, 1]} : vector<4x72xf32> to vector<4x18xf32>
    %718 = vector.extract_strided_slice %716 {offsets = [0, 18], sizes = [4, 18], strides = [1, 1]} : vector<4x72xf32> to vector<4x18xf32>
    %719 = vector.extract_strided_slice %716 {offsets = [0, 36], sizes = [4, 18], strides = [1, 1]} : vector<4x72xf32> to vector<4x18xf32>
    %720 = vector.extract_strided_slice %716 {offsets = [0, 54], sizes = [4, 18], strides = [1, 1]} : vector<4x72xf32> to vector<4x18xf32>
    %721 = arith.mulf %718, %628 : vector<4x18xf32>
    %722 = arith.mulf %717, %719 : vector<4x18xf32>
    %723 = arith.addf %721, %722 : vector<4x18xf32>
    %724 = math.tanh %723 : vector<4x18xf32>
    %725 = arith.mulf %720, %724 : vector<4x18xf32>
    %c0_314 = arith.constant 0 : index
    %c0_315 = arith.constant 0 : index
    %c0_316 = arith.constant 0 : index
    %726 = vector.load %arg3[%c0_314, %c0_315, %c0_316] : memref<3x18x72xf32, #tpu.memory_space<vmem>>, vector<1x18x72xf32>
    %727 = vector.shape_cast %726 : vector<1x18x72xf32> to vector<18x72xf32>
    %cst_317 = arith.constant dense<0.000000e+00> : vector<4x72xf32>
    %728 = tpu.matmul %725, %727, %cst_317 {dimension_numbers = #tpu.dot_dimension_numbers<[1], [0], [0], [1], [0, 0, 1, 1], [], []>} : vector<4x18xf32>, vector<18x72xf32>, vector<4x72xf32> -> vector<4x72xf32>
    %729 = arith.addf %728, %695 : vector<4x72xf32>
    %730 = math.tanh %729 : vector<4x72xf32>
    %cst_318 = arith.constant 5.000000e-01 : f32
    %731 = vector.broadcast %cst_318 : f32 to vector<4x72xf32>
    %732 = arith.mulf %731, %730 : vector<4x72xf32>
    %cst_319 = arith.constant 5.000000e-01 : f32
    %733 = vector.broadcast %cst_319 : f32 to vector<4x72xf32>
    %734 = arith.addf %732, %733 : vector<4x72xf32>
    %735 = arith.select %21, %734, %730 : vector<4x72xi1>, vector<4x72xf32>
    %736 = vector.extract_strided_slice %735 {offsets = [0, 0], sizes = [4, 18], strides = [1, 1]} : vector<4x72xf32> to vector<4x18xf32>
    %737 = vector.extract_strided_slice %735 {offsets = [0, 18], sizes = [4, 18], strides = [1, 1]} : vector<4x72xf32> to vector<4x18xf32>
    %738 = vector.extract_strided_slice %735 {offsets = [0, 36], sizes = [4, 18], strides = [1, 1]} : vector<4x72xf32> to vector<4x18xf32>
    %739 = vector.extract_strided_slice %735 {offsets = [0, 54], sizes = [4, 18], strides = [1, 1]} : vector<4x72xf32> to vector<4x18xf32>
    %740 = arith.mulf %737, %647 : vector<4x18xf32>
    %741 = arith.mulf %736, %738 : vector<4x18xf32>
    %742 = arith.addf %740, %741 : vector<4x18xf32>
    %743 = math.tanh %742 : vector<4x18xf32>
    %744 = arith.mulf %739, %743 : vector<4x18xf32>
    %c1_320 = arith.constant 1 : index
    %c0_321 = arith.constant 0 : index
    %c0_322 = arith.constant 0 : index
    %745 = vector.load %arg3[%c1_320, %c0_321, %c0_322] : memref<3x18x72xf32, #tpu.memory_space<vmem>>, vector<1x18x72xf32>
    %746 = vector.shape_cast %745 : vector<1x18x72xf32> to vector<18x72xf32>
    %cst_323 = arith.constant dense<0.000000e+00> : vector<4x72xf32>
    %747 = tpu.matmul %744, %746, %cst_323 {dimension_numbers = #tpu.dot_dimension_numbers<[1], [0], [0], [1], [0, 0, 1, 1], [], []>} : vector<4x18xf32>, vector<18x72xf32>, vector<4x72xf32> -> vector<4x72xf32>
    %748 = arith.addf %747, %699 : vector<4x72xf32>
    %749 = math.tanh %748 : vector<4x72xf32>
    %cst_324 = arith.constant 5.000000e-01 : f32
    %750 = vector.broadcast %cst_324 : f32 to vector<4x72xf32>
    %751 = arith.mulf %750, %749 : vector<4x72xf32>
    %cst_325 = arith.constant 5.000000e-01 : f32
    %752 = vector.broadcast %cst_325 : f32 to vector<4x72xf32>
    %753 = arith.addf %751, %752 : vector<4x72xf32>
    %754 = arith.select %21, %753, %749 : vector<4x72xi1>, vector<4x72xf32>
    %755 = vector.extract_strided_slice %754 {offsets = [0, 0], sizes = [4, 18], strides = [1, 1]} : vector<4x72xf32> to vector<4x18xf32>
    %756 = vector.extract_strided_slice %754 {offsets = [0, 18], sizes = [4, 18], strides = [1, 1]} : vector<4x72xf32> to vector<4x18xf32>
    %757 = vector.extract_strided_slice %754 {offsets = [0, 36], sizes = [4, 18], strides = [1, 1]} : vector<4x72xf32> to vector<4x18xf32>
    %758 = vector.extract_strided_slice %754 {offsets = [0, 54], sizes = [4, 18], strides = [1, 1]} : vector<4x72xf32> to vector<4x18xf32>
    %759 = arith.mulf %756, %666 : vector<4x18xf32>
    %760 = arith.mulf %755, %757 : vector<4x18xf32>
    %761 = arith.addf %759, %760 : vector<4x18xf32>
    %762 = math.tanh %761 : vector<4x18xf32>
    %763 = arith.mulf %758, %762 : vector<4x18xf32>
    %c2_326 = arith.constant 2 : index
    %c0_327 = arith.constant 0 : index
    %c0_328 = arith.constant 0 : index
    %764 = vector.load %arg3[%c2_326, %c0_327, %c0_328] : memref<3x18x72xf32, #tpu.memory_space<vmem>>, vector<1x18x72xf32>
    %765 = vector.shape_cast %764 : vector<1x18x72xf32> to vector<18x72xf32>
    %cst_329 = arith.constant dense<0.000000e+00> : vector<4x72xf32>
    %766 = tpu.matmul %763, %765, %cst_329 {dimension_numbers = #tpu.dot_dimension_numbers<[1], [0], [0], [1], [0, 0, 1, 1], [], []>} : vector<4x18xf32>, vector<18x72xf32>, vector<4x72xf32> -> vector<4x72xf32>
    %767 = arith.addf %766, %703 : vector<4x72xf32>
    %768 = math.tanh %767 : vector<4x72xf32>
    %cst_330 = arith.constant 5.000000e-01 : f32
    %769 = vector.broadcast %cst_330 : f32 to vector<4x72xf32>
    %770 = arith.mulf %769, %768 : vector<4x72xf32>
    %cst_331 = arith.constant 5.000000e-01 : f32
    %771 = vector.broadcast %cst_331 : f32 to vector<4x72xf32>
    %772 = arith.addf %770, %771 : vector<4x72xf32>
    %773 = arith.select %21, %772, %768 : vector<4x72xi1>, vector<4x72xf32>
    %774 = vector.extract_strided_slice %773 {offsets = [0, 0], sizes = [4, 18], strides = [1, 1]} : vector<4x72xf32> to vector<4x18xf32>
    %775 = vector.extract_strided_slice %773 {offsets = [0, 18], sizes = [4, 18], strides = [1, 1]} : vector<4x72xf32> to vector<4x18xf32>
    %776 = vector.extract_strided_slice %773 {offsets = [0, 36], sizes = [4, 18], strides = [1, 1]} : vector<4x72xf32> to vector<4x18xf32>
    %777 = vector.extract_strided_slice %773 {offsets = [0, 54], sizes = [4, 18], strides = [1, 1]} : vector<4x72xf32> to vector<4x18xf32>
    %778 = arith.mulf %775, %685 : vector<4x18xf32>
    %779 = arith.mulf %774, %776 : vector<4x18xf32>
    %780 = arith.addf %778, %779 : vector<4x18xf32>
    %781 = math.tanh %780 : vector<4x18xf32>
    %782 = arith.mulf %777, %781 : vector<4x18xf32>
    %783 = tpu.concatenate %117, %212, %307, %402, %497, %592, %687, %782 in 0 : vector<4x18xf32>, vector<4x18xf32>, vector<4x18xf32>, vector<4x18xf32>, vector<4x18xf32>, vector<4x18xf32>, vector<4x18xf32>, vector<4x18xf32> -> vector<32x18xf32>
    %784 = tpu.transpose %783, [1, 0] : vector<32x18xf32> -> vector<18x32xf32>
    %c0_332 = arith.constant 0 : index
    %c0_333 = arith.constant 0 : index
    %785 = vector.load %arg5[%c0_332, %c0_333] : memref<18x18xf32, #tpu.memory_space<vmem>>, vector<18x18xf32>
    %cst_334 = arith.constant dense<0.000000e+00> : vector<18x32xf32>
    %786 = tpu.matmul %785, %784, %cst_334 {dimension_numbers = #tpu.dot_dimension_numbers<[1], [0], [0], [1], [0, 0, 1, 1], [], []>} : vector<18x18xf32>, vector<18x32xf32>, vector<18x32xf32> -> vector<18x32xf32>
    %c0_335 = arith.constant 0 : index
    %c0_336 = arith.constant 0 : index
    %787 = vector.load %arg6[%c0_335, %c0_336] : memref<18x1xf32, #tpu.memory_space<vmem>>, vector<18x1xf32>
    %788 = vector.broadcast %787 : vector<18x1xf32> to vector<18x32xf32>
    %789 = arith.addf %786, %788 : vector<18x32xf32>
    %790 = math.tanh %789 : vector<18x32xf32>
    %c0_337 = arith.constant 0 : index
    %c0_338 = arith.constant 0 : index
    %791 = vector.load %arg7[%c0_337, %c0_338] : memref<1x18xf32, #tpu.memory_space<vmem>>, vector<1x18xf32>
    %cst_339 = arith.constant dense<0.000000e+00> : vector<1x32xf32>
    %792 = tpu.matmul %791, %790, %cst_339 {dimension_numbers = #tpu.dot_dimension_numbers<[1], [0], [0], [1], [0, 0, 1, 1], [], []>} : vector<1x18xf32>, vector<18x32xf32>, vector<1x32xf32> -> vector<1x32xf32>
    %c0_340 = arith.constant 0 : index
    %c0_341 = arith.constant 0 : index
    %793 = vector.load %arg8[%c0_340, %c0_341] : memref<1x1xf32, #tpu.memory_space<vmem>>, vector<1x1xf32>
    %794 = vector.broadcast %793 : vector<1x1xf32> to vector<1x32xf32>
    %795 = arith.addf %792, %794 : vector<1x32xf32>
    %c0_342 = arith.constant 0 : index
    %c0_343 = arith.constant 0 : index
    %796 = vector.load %arg9[%c0_342, %c0_343] : memref<1x32xf32, #tpu.memory_space<vmem>>, vector<1x32xf32>
    tpu.vector_store %arg9[%c0_342, %c0_343], %795 {strides = array<i32>} : memref<1x32xf32, #tpu.memory_space<vmem>>, vector<1x32xf32>,
    return
  }
}

</mosaic_0001>

<llo_original>
// kernel: tpu_custom_call.1
$region0: #{tpu_custom_call.1}
  #allocation0 [shape = 'u32[]', space=smem, size = 0x4, offset = 0x4, fixed_abs, tag = 'smem constant byte address 0x4 - core index']
  #allocation1 [shape = 'u32[72,128]{1,0:T(1,128)}', space=vmem, size = 0x9000, scoped, tag = 'internal scratch']
  #allocation2 [shape = 'f32[1,1]{1,0:T(1,128)S(1)}', space=vmem, size = 0x200, scoped, tag = 'scoped memory for tpu_custom_call.1']
  %s0 = inlined_call_operand.vmem [shape: f32[8,4,1], index: 0, kind: input, shape index: {}]
  %s1 = inlined_call_operand.vmem [shape: f32[1,72], index: 1, kind: input, shape index: {}]
  %s2 = inlined_call_operand.vmem [shape: f32[4,18,72], index: 2, kind: input, shape index: {}]
  %s3 = inlined_call_operand.vmem [shape: f32[3,18,72], index: 3, kind: input, shape index: {}]
  %s4 = inlined_call_operand.vmem [shape: f32[4,1,72], index: 4, kind: input, shape index: {}]
  %s5 = inlined_call_operand.vmem [shape: f32[18,18], index: 5, kind: input, shape index: {}]
  %s6 = inlined_call_operand.vmem [shape: f32[18,1], index: 6, kind: input, shape index: {}]
  %s7 = inlined_call_operand.vmem [shape: f32[1,18], index: 7, kind: input, shape index: {}]
  %s8 = inlined_call_operand.<no memory space> [shape: f32[1,1], index: 8, kind: input, shape index: {}]
  %s9 = inlined_call_operand.hbm [shape: f32[1,32], index: 9, kind: output, shape index: {}]
  %s10 = sld [smem:[#allocation0]]
  $region46: #{tpu_custom_call.1} parent=0
    _
  %s12 = ssub.s32 1, %s10
  %s13 = scalar_select 0, %s12, %s10
  %v14 = vstv %s8
  %15 = vst [vmem:[#allocation2] sm:$0x1] %v14
  $region1: #{tpu_custom_call.1} parent=0
    #allocation3 [shape = 'u8[512]{0}', space=vmem, size = 0x400, scoped, tag = 'output window, operand 0, single buffered']
    #allocation4 [shape = 's32[1]{0}', space=sflag, size = 0x4, scoped, tag = 'scoped memory for tpu_custom_call.1']
    %16 = vsyncpa [#allocation4], 0
    // Predicated region
    $region2: #{tpu_custom_call.1} parent=1 // pred_check
      _
    $region3: #{tpu_custom_call.1} parent=1 // pred_check_branch
      %18 = sbr.rel (0) target = $region5
    $region4: #{tpu_custom_call.1} parent=1 // pred_region
      _
    $region5: #{tpu_custom_call.1} parent=1 // pred_fallthru
      _
    // Predicated region
    $region6: #{tpu_custom_call.1} parent=1 // pred_check
      _
    $region7: #{tpu_custom_call.1} parent=1 // pred_check_branch
      %20 = sbr.rel (0) target = $region9
    $region8: #{tpu_custom_call.1} parent=1 // pred_region
      _
    $region9: #{tpu_custom_call.1} parent=1 // pred_fallthru
      _
    // Predicated region
    $region10: #{tpu_custom_call.1} parent=1 // pred_check
      _
    $region11: #{tpu_custom_call.1} parent=1 // pred_check_branch
      %22 = sbr.rel (0) target = $region13
    $region12: #{tpu_custom_call.1} parent=1 // pred_region
      _
    $region13: #{tpu_custom_call.1} parent=1 // pred_fallthru
      _
    // Predicated region
    $region14: #{tpu_custom_call.1} parent=1 // pred_check
      _
    $region15: #{tpu_custom_call.1} parent=1 // pred_check_branch
      %24 = sbr.rel (0) target = $region17
    $region16: #{tpu_custom_call.1} parent=1 // pred_region
      _
    $region17: #{tpu_custom_call.1} parent=1 // pred_fallthru
      _
    // Predicated region
    $region18: #{tpu_custom_call.1} parent=1 // pred_check
      _
    $region19: #{tpu_custom_call.1} parent=1 // pred_check_branch
      %26 = sbr.rel (0) target = $region21
    $region20: #{tpu_custom_call.1} parent=1 // pred_region
      _
    $region21: #{tpu_custom_call.1} parent=1 // pred_fallthru
      _
    // Predicated region
    $region22: #{tpu_custom_call.1} parent=1 // pred_check
      _
    $region23: #{tpu_custom_call.1} parent=1 // pred_check_branch
      %28 = sbr.rel (0) target = $region25
    $region24: #{tpu_custom_call.1} parent=1 // pred_region
      _
    $region25: #{tpu_custom_call.1} parent=1 // pred_fallthru
      _
    // Predicated region
    $region26: #{tpu_custom_call.1} parent=1 // pred_check
      _
    $region27: #{tpu_custom_call.1} parent=1 // pred_check_branch
      %30 = sbr.rel (0) target = $region29
    $region28: #{tpu_custom_call.1} parent=1 // pred_region
      _
    $region29: #{tpu_custom_call.1} parent=1 // pred_fallthru
      _
    // Predicated region
    $region30: #{tpu_custom_call.1} parent=1 // pred_check
      _
    $region31: #{tpu_custom_call.1} parent=1 // pred_check_branch
      %32 = sbr.rel (0) target = $region33
    $region32: #{tpu_custom_call.1} parent=1 // pred_region
      _
    $region33: #{tpu_custom_call.1} parent=1 // pred_fallthru
      _
    // Predicated region
    $region34: #{tpu_custom_call.1} parent=1 // pred_check
      _
    $region35: #{tpu_custom_call.1} parent=1 // pred_check_branch
      %34 = sbr.rel (0) target = $region37
    $region36: #{tpu_custom_call.1} parent=1 // pred_region
      _
    $region37: #{tpu_custom_call.1} parent=1 // pred_fallthru
      _
    %v35 = vld [vmem:[%s4] sm:$0x1]
    %v37 = vperm.slane %v35, 0
    %s39 = scalar_lea.vmem %s4, 1
    %v40 = vld [vmem:[%s39] sm:$0x1]
    %v42 = vperm.slane %v40, 0
    %s44 = scalar_lea.vmem %s4, 2
    %v45 = vld [vmem:[%s44] sm:$0x1]
    %v47 = vperm.slane %v45, 0
    %s49 = scalar_lea.vmem %s4, 3
    %v50 = vld [vmem:[%s49] sm:$0x1]
    %v52 = vperm.slane %v50, 0
    %v54 = vlaneseq
    %v55 = vand.u32 %v54, 127
    %vm56 = vcmp.lt.s32.totalorder %v55, 36
    %vm57 = vcmp.ge.s32.totalorder %v55, 54
    %vm58 = vmor %vm56, %vm57
    %v59 = vld [vmem:[%s2] sm:$0xff]
    %v60 = vld [vmem:[%s2 + $0x8] sm:$0xff]
    %v61 = vld [vmem:[%s2 + $0x10] sm:$0x3]
    %vm62 = vcmask 146432
    %v64 = vsel %vm62, 0.0, 0
    %vm66 = vcmask 1041408
    %v68 = vsel %vm66, %v61, 0
    %70 = vmatpush.msra.mxu0 0.0
    %71 = vmatpush.msra.mxu0 0.0
    %72 = vmatpush.msra.mxu0 0.0
    %73 = vmatpush.msra.mxu0 0.0
    %74 = vmatpush.msra.mxu0 0.0
    %75 = vmatpush.msra.mxu0 0.0
    %76 = vmatpush.msra.mxu0 0.0
    %77 = vmatpush.msra.mxu0 0.0
    %78 = vmatpush.msra.mxu0 0.0
    %79 = vmatpush.msra.mxu0 0.0
    %80 = vmatpush.msra.mxu0 0.0
    %81 = vmatpush.msra.mxu0 0.0
    %82 = vmatpush.msra.mxu0 0.0
    %83 = vmatpush.msra.mxu0 %v68
    %84 = vmatpush.msra.mxu0 %v60
    %85 = vmatpush.msra.mxu0 %v59
    %86 = vmatmul.f32.gmra.mxu0 %v64
    %v87 = vpop.f32.mrf.mxu0
    %v88 = vadd.f32 %v37, %v87
    %89 = vdwg.mxu0
    %s90 = scalar_lea.vmem %s2, 24
    %v91 = vld [vmem:[%s90] sm:$0xff]
    %v92 = vld [vmem:[%s90 + $0x8] sm:$0xff]
    %v93 = vld [vmem:[%s90 + $0x10] sm:$0x3]
    %v95 = vsel %vm66, %v93, 0
    %97 = vmatpush.msra.mxu0 0.0
    %98 = vmatpush.msra.mxu0 0.0
    %99 = vmatpush.msra.mxu0 0.0
    %100 = vmatpush.msra.mxu0 0.0
    %101 = vmatpush.msra.mxu0 0.0
    %102 = vmatpush.msra.mxu0 0.0
    %103 = vmatpush.msra.mxu0 0.0
    %104 = vmatpush.msra.mxu0 0.0
    %105 = vmatpush.msra.mxu0 0.0
    %106 = vmatpush.msra.mxu0 0.0
    %107 = vmatpush.msra.mxu0 0.0
    %108 = vmatpush.msra.mxu0 0.0
    %109 = vmatpush.msra.mxu0 0.0
    %110 = vmatpush.msra.mxu0 %v95
    %111 = vmatpush.msra.mxu0 %v92
    %112 = vmatpush.msra.mxu0 %v91
    %113 = vmatmul.f32.gmra.mxu0 %v64
    %v114 = vpop.f32.mrf.mxu0
    %v115 = vadd.f32 %v42, %v114
    %116 = vdwg.mxu0
    %s117 = scalar_lea.vmem %s2, 48
    %v118 = vld [vmem:[%s117] sm:$0xff]
    %v119 = vld [vmem:[%s117 + $0x8] sm:$0xff]
    %v120 = vld [vmem:[%s117 + $0x10] sm:$0x3]
    %v122 = vsel %vm66, %v120, 0
    %124 = vmatpush.msra.mxu0 0.0
    %125 = vmatpush.msra.mxu0 0.0
    %126 = vmatpush.msra.mxu0 0.0
    %127 = vmatpush.msra.mxu0 0.0
    %128 = vmatpush.msra.mxu0 0.0
    %129 = vmatpush.msra.mxu0 0.0
    %130 = vmatpush.msra.mxu0 0.0
    %131 = vmatpush.msra.mxu0 0.0
    %132 = vmatpush.msra.mxu0 0.0
    %133 = vmatpush.msra.mxu0 0.0
    %134 = vmatpush.msra.mxu0 0.0
    %135 = vmatpush.msra.mxu0 0.0
    %136 = vmatpush.msra.mxu0 0.0
    %137 = vmatpush.msra.mxu0 %v122
    %138 = vmatpush.msra.mxu0 %v119
    %139 = vmatpush.msra.mxu0 %v118
    %140 = vmatmul.f32.gmra.mxu0 %v64
    %v141 = vpop.f32.mrf.mxu0
    %v142 = vadd.f32 %v47, %v141
    %143 = vdwg.mxu0
    %s144 = scalar_lea.vmem %s2, 72
    %v145 = vld [vmem:[%s144] sm:$0xff]
    %v146 = vld [vmem:[%s144 + $0x8] sm:$0xff]
    %v147 = vld [vmem:[%s144 + $0x10] sm:$0x3]
    %v149 = vsel %vm66, %v147, 0
    %151 = vmatpush.msra.mxu0 0.0
    %152 = vmatpush.msra.mxu0 0.0
    %153 = vmatpush.msra.mxu0 0.0
    %154 = vmatpush.msra.mxu0 0.0
    %155 = vmatpush.msra.mxu0 0.0
    %156 = vmatpush.msra.mxu0 0.0
    %157 = vmatpush.msra.mxu0 0.0
    %158 = vmatpush.msra.mxu0 0.0
    %159 = vmatpush.msra.mxu0 0.0
    %160 = vmatpush.msra.mxu0 0.0
    %161 = vmatpush.msra.mxu0 0.0
    %162 = vmatpush.msra.mxu0 0.0
    %163 = vmatpush.msra.mxu0 0.0
    %164 = vmatpush.msra.mxu0 %v149
    %165 = vmatpush.msra.mxu0 %v146
    %166 = vmatpush.msra.mxu0 %v145
    %167 = vmatmul.f32.gmra.mxu0 %v64
    %v168 = vpop.f32.mrf.mxu0
    %v169 = vadd.f32 %v52, %v168
    %170 = vdwg.mxu0
    %v171 = vld [vmem:[%s0] sm:$0xf]
    %v172 = vld [vmem:[%s1] sm:$0x1]
    %174 = vset.pattern.permute.xlu0 0
    %175 = vperm.xlu0 %174, %v171
    %v176 = vpop.permute.xlu0 %175
    %v179 = vperm.slane %v172, 0
    %v181 = vmul.f32 %v176, %v179
    %v182 = vadd.f32 %v181, %v88
    %v183 = vtanh.pop %v182
    %v184 = vmul.f32 %v183, 0.5
    %v185 = vadd.f32 %v184, 0.5
    %v186 = vsel %vm58, %v185, %v183
    %v187 = vmul.f32 %v186, 0.0
    %189 = vrot.lane.b32.xlu0 %v186, 92
    %v190 = vpop.permute.xlu0 %189
    %v192 = vmul.f32 %v186, %v190
    %194 = vrot.lane.b32.xlu0 %v192, 18
    %v195 = vpop.permute.xlu0 %194
    %v197 = vadd.f32 %v187, %v195
    %v198 = vtanh.pop %v197
    %200 = vrot.lane.b32.xlu0 %v198, 36
    %v201 = vpop.permute.xlu0 %200
    %v203 = vmul.f32 %v186, %v201
    %v204 = vld [vmem:[%s3] sm:$0xff]
    %v205 = vld [vmem:[%s3 + $0x8] sm:$0xff]
    %v206 = vld [vmem:[%s3 + $0x10] sm:$0x3]
    %208 = vrot.lane.b32.xlu0 %v203, 74
    %v209 = vpop.permute.xlu0 %208
    %v210 = vsel %vm62, %v209, 0
    %v213 = vsel %vm66, %v206, 0
    %215 = vmatpush.msra.mxu0 0.0
    %216 = vmatpush.msra.mxu0 0.0
    %217 = vmatpush.msra.mxu0 0.0
    %218 = vmatpush.msra.mxu0 0.0
    %219 = vmatpush.msra.mxu0 0.0
    %220 = vmatpush.msra.mxu0 0.0
    %221 = vmatpush.msra.mxu0 0.0
    %222 = vmatpush.msra.mxu0 0.0
    %223 = vmatpush.msra.mxu0 0.0
    %224 = vmatpush.msra.mxu0 0.0
    %225 = vmatpush.msra.mxu0 0.0
    %226 = vmatpush.msra.mxu0 0.0
    %227 = vmatpush.msra.mxu0 0.0
    %228 = vmatpush.msra.mxu0 %v213
    %229 = vmatpush.msra.mxu0 %v205
    %230 = vmatpush.msra.mxu0 %v204
    %231 = vmatmul.f32.gmra.mxu0 %v210
    %v232 = vpop.f32.mrf.mxu0
    %v233 = vadd.f32 %v115, %v232
    %234 = vdwg.mxu0
    %v235 = vtanh.pop %v233
    %v236 = vmul.f32 %v235, 0.5
    %v237 = vadd.f32 %v236, 0.5
    %v238 = vsel %vm58, %v237, %v235
    %v239 = vmul.f32 %v238, 0.0
    %241 = vrot.lane.b32.xlu0 %v238, 92
    %v242 = vpop.permute.xlu0 %241
    %v244 = vmul.f32 %v238, %v242
    %246 = vrot.lane.b32.xlu0 %v244, 18
    %v247 = vpop.permute.xlu0 %246
    %v249 = vadd.f32 %v239, %v247
    %v250 = vtanh.pop %v249
    %252 = vrot.lane.b32.xlu0 %v250, 36
    %v253 = vpop.permute.xlu0 %252
    %v255 = vmul.f32 %v238, %v253
    %s256 = scalar_lea.vmem %s3, 24
    %v257 = vld [vmem:[%s256] sm:$0xff]
    %v258 = vld [vmem:[%s256 + $0x8] sm:$0xff]
    %v259 = vld [vmem:[%s256 + $0x10] sm:$0x3]
    %261 = vrot.lane.b32.xlu0 %v255, 74
    %v262 = vpop.permute.xlu0 %261
    %v263 = vsel %vm62, %v262, 0
    %v266 = vsel %vm66, %v259, 0
    %268 = vmatpush.msra.mxu0 0.0
    %269 = vmatpush.msra.mxu0 0.0
    %270 = vmatpush.msra.mxu0 0.0
    %271 = vmatpush.msra.mxu0 0.0
    %272 = vmatpush.msra.mxu0 0.0
    %273 = vmatpush.msra.mxu0 0.0
    %274 = vmatpush.msra.mxu0 0.0
    %275 = vmatpush.msra.mxu0 0.0
    %276 = vmatpush.msra.mxu0 0.0
    %277 = vmatpush.msra.mxu0 0.0
    %278 = vmatpush.msra.mxu0 0.0
    %279 = vmatpush.msra.mxu0 0.0
    %280 = vmatpush.msra.mxu0 0.0
    %281 = vmatpush.msra.mxu0 %v266
    %282 = vmatpush.msra.mxu0 %v258
    %283 = vmatpush.msra.mxu0 %v257
    %284 = vmatmul.f32.gmra.mxu0 %v263
    %v285 = vpop.f32.mrf.mxu0
    %v286 = vadd.f32 %v142, %v285
    %287 = vdwg.mxu0
    %v288 = vtanh.pop %v286
    %v289 = vmul.f32 %v288, 0.5
    %v290 = vadd.f32 %v289, 0.5
    %v291 = vsel %vm58, %v290, %v288
    %v292 = vmul.f32 %v291, 0.0
    %294 = vrot.lane.b32.xlu0 %v291, 92
    %v295 = vpop.permute.xlu0 %294
    %v297 = vmul.f32 %v291, %v295
    %299 = vrot.lane.b32.xlu0 %v297, 18
    %v300 = vpop.permute.xlu0 %299
    %v302 = vadd.f32 %v292, %v300
    %v303 = vtanh.pop %v302
    %305 = vrot.lane.b32.xlu0 %v303, 36
    %v306 = vpop.permute.xlu0 %305
    %v308 = vmul.f32 %v291, %v306
    %s309 = scalar_lea.vmem %s3, 48
    %v310 = vld [vmem:[%s309] sm:$0xff]
    %v311 = vld [vmem:[%s309 + $0x8] sm:$0xff]
    %v312 = vld [vmem:[%s309 + $0x10] sm:$0x3]
    %314 = vrot.lane.b32.xlu0 %v308, 74
    %v315 = vpop.permute.xlu0 %314
    %v316 = vsel %vm62, %v315, 0
    %v319 = vsel %vm66, %v312, 0
    %321 = vmatpush.msra.mxu0 0.0
    %322 = vmatpush.msra.mxu0 0.0
    %323 = vmatpush.msra.mxu0 0.0
    %324 = vmatpush.msra.mxu0 0.0
    %325 = vmatpush.msra.mxu0 0.0
    %326 = vmatpush.msra.mxu0 0.0
    %327 = vmatpush.msra.mxu0 0.0
    %328 = vmatpush.msra.mxu0 0.0
    %329 = vmatpush.msra.mxu0 0.0
    %330 = vmatpush.msra.mxu0 0.0
    %331 = vmatpush.msra.mxu0 0.0
    %332 = vmatpush.msra.mxu0 0.0
    %333 = vmatpush.msra.mxu0 0.0
    %334 = vmatpush.msra.mxu0 %v319
    %335 = vmatpush.msra.mxu0 %v311
    %336 = vmatpush.msra.mxu0 %v310
    %337 = vmatmul.f32.gmra.mxu0 %v316
    %v338 = vpop.f32.mrf.mxu0
    %v339 = vadd.f32 %v169, %v338
    %340 = vdwg.mxu0
    %v341 = vtanh.pop %v339
    %v342 = vmul.f32 %v341, 0.5
    %v343 = vadd.f32 %v342, 0.5
    %v344 = vsel %vm58, %v343, %v341
    %v345 = vmul.f32 %v344, 0.0
    %347 = vrot.lane.b32.xlu0 %v344, 92
    %v348 = vpop.permute.xlu0 %347
    %v350 = vmul.f32 %v344, %v348
    %352 = vrot.lane.b32.xlu0 %v350, 18
    %v353 = vpop.permute.xlu0 %352
    %v355 = vadd.f32 %v345, %v353
    %v356 = vtanh.pop %v355
    %358 = vrot.lane.b32.xlu0 %v356, 36
    %v359 = vpop.permute.xlu0 %358
    %v361 = vmul.f32 %v344, %v359
    %362 = vmatpush.msra.mxu0 0.0
    %363 = vmatpush.msra.mxu0 0.0
    %364 = vmatpush.msra.mxu0 0.0
    %365 = vmatpush.msra.mxu0 0.0
    %366 = vmatpush.msra.mxu0 0.0
    %367 = vmatpush.msra.mxu0 0.0
    %368 = vmatpush.msra.mxu0 0.0
    %369 = vmatpush.msra.mxu0 0.0
    %370 = vmatpush.msra.mxu0 0.0
    %371 = vmatpush.msra.mxu0 0.0
    %372 = vmatpush.msra.mxu0 0.0
    %373 = vmatpush.msra.mxu0 0.0
    %374 = vmatpush.msra.mxu0 0.0
    %375 = vmatpush.msra.mxu0 %v68
    %376 = vmatpush.msra.mxu0 %v60
    %377 = vmatpush.msra.mxu0 %v59
    %378 = vmatmul.f32.gmra.mxu0 %v210
    %v379 = vpop.f32.mrf.mxu0
    %v380 = vadd.f32 %v37, %v379
    %381 = vdwg.mxu0
    %382 = vmatpush.msra.mxu0 0.0
    %383 = vmatpush.msra.mxu0 0.0
    %384 = vmatpush.msra.mxu0 0.0
    %385 = vmatpush.msra.mxu0 0.0
    %386 = vmatpush.msra.mxu0 0.0
    %387 = vmatpush.msra.mxu0 0.0
    %388 = vmatpush.msra.mxu0 0.0
    %389 = vmatpush.msra.mxu0 0.0
    %390 = vmatpush.msra.mxu0 0.0
    %391 = vmatpush.msra.mxu0 0.0
    %392 = vmatpush.msra.mxu0 0.0
    %393 = vmatpush.msra.mxu0 0.0
    %394 = vmatpush.msra.mxu0 0.0
    %395 = vmatpush.msra.mxu0 %v95
    %396 = vmatpush.msra.mxu0 %v92
    %397 = vmatpush.msra.mxu0 %v91
    %398 = vmatmul.f32.gmra.mxu0 %v263
    %v399 = vpop.f32.mrf.mxu0
    %v400 = vadd.f32 %v42, %v399
    %401 = vdwg.mxu0
    %402 = vmatpush.msra.mxu0 0.0
    %403 = vmatpush.msra.mxu0 0.0
    %404 = vmatpush.msra.mxu0 0.0
    %405 = vmatpush.msra.mxu0 0.0
    %406 = vmatpush.msra.mxu0 0.0
    %407 = vmatpush.msra.mxu0 0.0
    %408 = vmatpush.msra.mxu0 0.0
    %409 = vmatpush.msra.mxu0 0.0
    %410 = vmatpush.msra.mxu0 0.0
    %411 = vmatpush.msra.mxu0 0.0
    %412 = vmatpush.msra.mxu0 0.0
    %413 = vmatpush.msra.mxu0 0.0
    %414 = vmatpush.msra.mxu0 0.0
    %415 = vmatpush.msra.mxu0 %v122
    %416 = vmatpush.msra.mxu0 %v119
    %417 = vmatpush.msra.mxu0 %v118
    %418 = vmatmul.f32.gmra.mxu0 %v316
    %v419 = vpop.f32.mrf.mxu0
    %v420 = vadd.f32 %v47, %v419
    %421 = vdwg.mxu0
    %423 = vrot.lane.b32.xlu0 %v361, 74
    %v424 = vpop.permute.xlu0 %423
    %v425 = vsel %vm62, %v424, 0
    %427 = vmatpush.msra.mxu0 0.0
    %428 = vmatpush.msra.mxu0 0.0
    %429 = vmatpush.msra.mxu0 0.0
    %430 = vmatpush.msra.mxu0 0.0
    %431 = vmatpush.msra.mxu0 0.0
    %432 = vmatpush.msra.mxu0 0.0
    %433 = vmatpush.msra.mxu0 0.0
    %434 = vmatpush.msra.mxu0 0.0
    %435 = vmatpush.msra.mxu0 0.0
    %436 = vmatpush.msra.mxu0 0.0
    %437 = vmatpush.msra.mxu0 0.0
    %438 = vmatpush.msra.mxu0 0.0
    %439 = vmatpush.msra.mxu0 0.0
    %440 = vmatpush.msra.mxu0 %v149
    %441 = vmatpush.msra.mxu0 %v146
    %442 = vmatpush.msra.mxu0 %v145
    %443 = vmatmul.f32.gmra.mxu0 %v425
    %v444 = vpop.f32.mrf.mxu0
    %v445 = vadd.f32 %v52, %v444
    %446 = vdwg.mxu0
    %s447 = scalar_lea.vmem %s0, 4
    %v448 = vld [vmem:[%s447] sm:$0xf]
    %450 = vset.pattern.permute.xlu0 0
    %451 = vperm.xlu0 %450, %v448
    %v452 = vpop.permute.xlu0 %451
    %v454 = vmul.f32 %v452, %v179
    %v455 = vadd.f32 %v454, %v380
    %v456 = vtanh.pop %v455
    %v457 = vmul.f32 %v456, 0.5
    %v458 = vadd.f32 %v457, 0.5
    %v459 = vsel %vm58, %v458, %v456
    %v460 = vmul.f32 %v459, %v197
    %462 = vrot.lane.b32.xlu0 %v459, 92
    %v463 = vpop.permute.xlu0 %462
    %v465 = vmul.f32 %v459, %v463
    %467 = vrot.lane.b32.xlu0 %v465, 18
    %v468 = vpop.permute.xlu0 %467
    %v470 = vadd.f32 %v460, %v468
    %v471 = vtanh.pop %v470
    %473 = vrot.lane.b32.xlu0 %v471, 36
    %v474 = vpop.permute.xlu0 %473
    %v476 = vmul.f32 %v459, %v474
    %478 = vrot.lane.b32.xlu0 %v476, 74
    %v479 = vpop.permute.xlu0 %478
    %v480 = vsel %vm62, %v479, 0
    %482 = vmatpush.msra.mxu0 0.0
    %483 = vmatpush.msra.mxu0 0.0
    %484 = vmatpush.msra.mxu0 0.0
    %485 = vmatpush.msra.mxu0 0.0
    %486 = vmatpush.msra.mxu0 0.0
    %487 = vmatpush.msra.mxu0 0.0
    %488 = vmatpush.msra.mxu0 0.0
    %489 = vmatpush.msra.mxu0 0.0
    %490 = vmatpush.msra.mxu0 0.0
    %491 = vmatpush.msra.mxu0 0.0
    %492 = vmatpush.msra.mxu0 0.0
    %493 = vmatpush.msra.mxu0 0.0
    %494 = vmatpush.msra.mxu0 0.0
    %495 = vmatpush.msra.mxu0 %v213
    %496 = vmatpush.msra.mxu0 %v205
    %497 = vmatpush.msra.mxu0 %v204
    %498 = vmatmul.f32.gmra.mxu0 %v480
    %v499 = vpop.f32.mrf.mxu0
    %v500 = vadd.f32 %v400, %v499
    %501 = vdwg.mxu0
    %v502 = vtanh.pop %v500
    %v503 = vmul.f32 %v502, 0.5
    %v504 = vadd.f32 %v503, 0.5
    %v505 = vsel %vm58, %v504, %v502
    %v506 = vmul.f32 %v505, %v249
    %508 = vrot.lane.b32.xlu0 %v505, 92
    %v509 = vpop.permute.xlu0 %508
    %v511 = vmul.f32 %v505, %v509
    %513 = vrot.lane.b32.xlu0 %v511, 18
    %v514 = vpop.permute.xlu0 %513
    %v516 = vadd.f32 %v506, %v514
    %v517 = vtanh.pop %v516
    %519 = vrot.lane.b32.xlu0 %v517, 36
    %v520 = vpop.permute.xlu0 %519
    %v522 = vmul.f32 %v505, %v520
    %524 = vrot.lane.b32.xlu0 %v522, 74
    %v525 = vpop.permute.xlu0 %524
    %v526 = vsel %vm62, %v525, 0
    %528 = vmatpush.msra.mxu0 0.0
    %529 = vmatpush.msra.mxu0 0.0
    %530 = vmatpush.msra.mxu0 0.0
    %531 = vmatpush.msra.mxu0 0.0
    %532 = vmatpush.msra.mxu0 0.0
    %533 = vmatpush.msra.mxu0 0.0
    %534 = vmatpush.msra.mxu0 0.0
    %535 = vmatpush.msra.mxu0 0.0
    %536 = vmatpush.msra.mxu0 0.0
    %537 = vmatpush.msra.mxu0 0.0
    %538 = vmatpush.msra.mxu0 0.0
    %539 = vmatpush.msra.mxu0 0.0
    %540 = vmatpush.msra.mxu0 0.0
    %541 = vmatpush.msra.mxu0 %v266
    %542 = vmatpush.msra.mxu0 %v258
    %543 = vmatpush.msra.mxu0 %v257
    %544 = vmatmul.f32.gmra.mxu0 %v526
    %v545 = vpop.f32.mrf.mxu0
    %v546 = vadd.f32 %v420, %v545
    %547 = vdwg.mxu0
    %v548 = vtanh.pop %v546
    %v549 = vmul.f32 %v548, 0.5
    %v550 = vadd.f32 %v549, 0.5
    %v551 = vsel %vm58, %v550, %v548
    %v552 = vmul.f32 %v551, %v302
    %554 = vrot.lane.b32.xlu0 %v551, 92
    %v555 = vpop.permute.xlu0 %554
    %v557 = vmul.f32 %v551, %v555
    %559 = vrot.lane.b32.xlu0 %v557, 18
    %v560 = vpop.permute.xlu0 %559
    %v562 = vadd.f32 %v552, %v560
    %v563 = vtanh.pop %v562
    %565 = vrot.lane.b32.xlu0 %v563, 36
    %v566 = vpop.permute.xlu0 %565
    %v568 = vmul.f32 %v551, %v566
    %570 = vrot.lane.b32.xlu0 %v568, 74
    %v571 = vpop.permute.xlu0 %570
    %v572 = vsel %vm62, %v571, 0
    %574 = vmatpush.msra.mxu0 0.0
    %575 = vmatpush.msra.mxu0 0.0
    %576 = vmatpush.msra.mxu0 0.0
    %577 = vmatpush.msra.mxu0 0.0
    %578 = vmatpush.msra.mxu0 0.0
    %579 = vmatpush.msra.mxu0 0.0
    %580 = vmatpush.msra.mxu0 0.0
    %581 = vmatpush.msra.mxu0 0.0
    %582 = vmatpush.msra.mxu0 0.0
    %583 = vmatpush.msra.mxu0 0.0
    %584 = vmatpush.msra.mxu0 0.0
    %585 = vmatpush.msra.mxu0 0.0
    %586 = vmatpush.msra.mxu0 0.0
    %587 = vmatpush.msra.mxu0 %v319
    %588 = vmatpush.msra.mxu0 %v311
    %589 = vmatpush.msra.mxu0 %v310
    %590 = vmatmul.f32.gmra.mxu0 %v572
    %v591 = vpop.f32.mrf.mxu0
    %v592 = vadd.f32 %v445, %v591
    %593 = vdwg.mxu0
    %v594 = vtanh.pop %v592
    %v595 = vmul.f32 %v594, 0.5
    %v596 = vadd.f32 %v595, 0.5
    %v597 = vsel %vm58, %v596, %v594
    %v598 = vmul.f32 %v597, %v355
    %600 = vrot.lane.b32.xlu0 %v597, 92
    %v601 = vpop.permute.xlu0 %600
    %v603 = vmul.f32 %v597, %v601
    %605 = vrot.lane.b32.xlu0 %v603, 18
    %v606 = vpop.permute.xlu0 %605
    %v608 = vadd.f32 %v598, %v606
    %v609 = vtanh.pop %v608
    %611 = vrot.lane.b32.xlu0 %v609, 36
    %v612 = vpop.permute.xlu0 %611
    %v614 = vmul.f32 %v597, %v612
    %615 = vmatpush.msra.mxu0 0.0
    %616 = vmatpush.msra.mxu0 0.0
    %617 = vmatpush.msra.mxu0 0.0
    %618 = vmatpush.msra.mxu0 0.0
    %619 = vmatpush.msra.mxu0 0.0
    %620 = vmatpush.msra.mxu0 0.0
    %621 = vmatpush.msra.mxu0 0.0
    %622 = vmatpush.msra.mxu0 0.0
    %623 = vmatpush.msra.mxu0 0.0
    %624 = vmatpush.msra.mxu0 0.0
    %625 = vmatpush.msra.mxu0 0.0
    %626 = vmatpush.msra.mxu0 0.0
    %627 = vmatpush.msra.mxu0 0.0
    %628 = vmatpush.msra.mxu0 %v68
    %629 = vmatpush.msra.mxu0 %v60
    %630 = vmatpush.msra.mxu0 %v59
    %631 = vmatmul.f32.gmra.mxu0 %v480
    %v632 = vpop.f32.mrf.mxu0
    %v633 = vadd.f32 %v37, %v632
    %634 = vdwg.mxu0
    %635 = vmatpush.msra.mxu0 0.0
    %636 = vmatpush.msra.mxu0 0.0
    %637 = vmatpush.msra.mxu0 0.0
    %638 = vmatpush.msra.mxu0 0.0
    %639 = vmatpush.msra.mxu0 0.0
    %640 = vmatpush.msra.mxu0 0.0
    %641 = vmatpush.msra.mxu0 0.0
    %642 = vmatpush.msra.mxu0 0.0
    %643 = vmatpush.msra.mxu0 0.0
    %644 = vmatpush.msra.mxu0 0.0
    %645 = vmatpush.msra.mxu0 0.0
    %646 = vmatpush.msra.mxu0 0.0
    %647 = vmatpush.msra.mxu0 0.0
    %648 = vmatpush.msra.mxu0 %v95
    %649 = vmatpush.msra.mxu0 %v92
    %650 = vmatpush.msra.mxu0 %v91
    %651 = vmatmul.f32.gmra.mxu0 %v526
    %v652 = vpop.f32.mrf.mxu0
    %v653 = vadd.f32 %v42, %v652
    %654 = vdwg.mxu0
    %655 = vmatpush.msra.mxu0 0.0
    %656 = vmatpush.msra.mxu0 0.0
    %657 = vmatpush.msra.mxu0 0.0
    %658 = vmatpush.msra.mxu0 0.0
    %659 = vmatpush.msra.mxu0 0.0
    %660 = vmatpush.msra.mxu0 0.0
    %661 = vmatpush.msra.mxu0 0.0
    %662 = vmatpush.msra.mxu0 0.0
    %663 = vmatpush.msra.mxu0 0.0
    %664 = vmatpush.msra.mxu0 0.0
    %665 = vmatpush.msra.mxu0 0.0
    %666 = vmatpush.msra.mxu0 0.0
    %667 = vmatpush.msra.mxu0 0.0
    %668 = vmatpush.msra.mxu0 %v122
    %669 = vmatpush.msra.mxu0 %v119
    %670 = vmatpush.msra.mxu0 %v118
    %671 = vmatmul.f32.gmra.mxu0 %v572
    %v672 = vpop.f32.mrf.mxu0
    %v673 = vadd.f32 %v47, %v672
    %674 = vdwg.mxu0
    %676 = vrot.lane.b32.xlu0 %v614, 74
    %v677 = vpop.permute.xlu0 %676
    %v678 = vsel %vm62, %v677, 0
    %680 = vmatpush.msra.mxu0 0.0
    %681 = vmatpush.msra.mxu0 0.0
    %682 = vmatpush.msra.mxu0 0.0
    %683 = vmatpush.msra.mxu0 0.0
    %684 = vmatpush.msra.mxu0 0.0
    %685 = vmatpush.msra.mxu0 0.0
    %686 = vmatpush.msra.mxu0 0.0
    %687 = vmatpush.msra.mxu0 0.0
    %688 = vmatpush.msra.mxu0 0.0
    %689 = vmatpush.msra.mxu0 0.0
    %690 = vmatpush.msra.mxu0 0.0
    %691 = vmatpush.msra.mxu0 0.0
    %692 = vmatpush.msra.mxu0 0.0
    %693 = vmatpush.msra.mxu0 %v149
    %694 = vmatpush.msra.mxu0 %v146
    %695 = vmatpush.msra.mxu0 %v145
    %696 = vmatmul.f32.gmra.mxu0 %v678
    %v697 = vpop.f32.mrf.mxu0
    %v698 = vadd.f32 %v52, %v697
    %699 = vdwg.mxu0
    %s700 = scalar_lea.vmem %s0, 8
    %v701 = vld [vmem:[%s700] sm:$0xf]
    %703 = vset.pattern.permute.xlu0 0
    %704 = vperm.xlu0 %703, %v701
    %v705 = vpop.permute.xlu0 %704
    %v707 = vmul.f32 %v705, %v179
    %v708 = vadd.f32 %v707, %v633
    %v709 = vtanh.pop %v708
    %v710 = vmul.f32 %v709, 0.5
    %v711 = vadd.f32 %v710, 0.5
    %v712 = vsel %vm58, %v711, %v709
    %v713 = vmul.f32 %v712, %v470
    %715 = vrot.lane.b32.xlu0 %v712, 92
    %v716 = vpop.permute.xlu0 %715
    %v718 = vmul.f32 %v712, %v716
    %720 = vrot.lane.b32.xlu0 %v718, 18
    %v721 = vpop.permute.xlu0 %720
    %v723 = vadd.f32 %v713, %v721
    %v724 = vtanh.pop %v723
    %726 = vrot.lane.b32.xlu0 %v724, 36
    %v727 = vpop.permute.xlu0 %726
    %v729 = vmul.f32 %v712, %v727
    %731 = vrot.lane.b32.xlu0 %v729, 74
    %v732 = vpop.permute.xlu0 %731
    %v733 = vsel %vm62, %v732, 0
    %735 = vmatpush.msra.mxu0 0.0
    %736 = vmatpush.msra.mxu0 0.0
    %737 = vmatpush.msra.mxu0 0.0
    %738 = vmatpush.msra.mxu0 0.0
    %739 = vmatpush.msra.mxu0 0.0
    %740 = vmatpush.msra.mxu0 0.0
    %741 = vmatpush.msra.mxu0 0.0
    %742 = vmatpush.msra.mxu0 0.0
    %743 = vmatpush.msra.mxu0 0.0
    %744 = vmatpush.msra.mxu0 0.0
    %745 = vmatpush.msra.mxu0 0.0
    %746 = vmatpush.msra.mxu0 0.0
    %747 = vmatpush.msra.mxu0 0.0
    %748 = vmatpush.msra.mxu0 %v213
    %749 = vmatpush.msra.mxu0 %v205
    %750 = vmatpush.msra.mxu0 %v204
    %751 = vmatmul.f32.gmra.mxu0 %v733
    %v752 = vpop.f32.mrf.mxu0
    %v753 = vadd.f32 %v653, %v752
    %754 = vdwg.mxu0
    %v755 = vtanh.pop %v753
    %v756 = vmul.f32 %v755, 0.5
    %v757 = vadd.f32 %v756, 0.5
    %v758 = vsel %vm58, %v757, %v755
    %v759 = vmul.f32 %v758, %v516
    %761 = vrot.lane.b32.xlu0 %v758, 92
    %v762 = vpop.permute.xlu0 %761
    %v764 = vmul.f32 %v758, %v762
    %766 = vrot.lane.b32.xlu0 %v764, 18
    %v767 = vpop.permute.xlu0 %766
    %v769 = vadd.f32 %v759, %v767
    %v770 = vtanh.pop %v769
    %772 = vrot.lane.b32.xlu0 %v770, 36
    %v773 = vpop.permute.xlu0 %772
    %v775 = vmul.f32 %v758, %v773
    %777 = vrot.lane.b32.xlu0 %v775, 74
    %v778 = vpop.permute.xlu0 %777
    %v779 = vsel %vm62, %v778, 0
    %781 = vmatpush.msra.mxu0 0.0
    %782 = vmatpush.msra.mxu0 0.0
    %783 = vmatpush.msra.mxu0 0.0
    %784 = vmatpush.msra.mxu0 0.0
    %785 = vmatpush.msra.mxu0 0.0
    %786 = vmatpush.msra.mxu0 0.0
    %787 = vmatpush.msra.mxu0 0.0
    %788 = vmatpush.msra.mxu0 0.0
    %789 = vmatpush.msra.mxu0 0.0
    %790 = vmatpush.msra.mxu0 0.0
    %791 = vmatpush.msra.mxu0 0.0
    %792 = vmatpush.msra.mxu0 0.0
    %793 = vmatpush.msra.mxu0 0.0
    %794 = vmatpush.msra.mxu0 %v266
    %795 = vmatpush.msra.mxu0 %v258
    %796 = vmatpush.msra.mxu0 %v257
    %797 = vmatmul.f32.gmra.mxu0 %v779
    %v798 = vpop.f32.mrf.mxu0
    %v799 = vadd.f32 %v673, %v798
    %800 = vdwg.mxu0
    %v801 = vtanh.pop %v799
    %v802 = vmul.f32 %v801, 0.5
    %v803 = vadd.f32 %v802, 0.5
    %v804 = vsel %vm58, %v803, %v801
    %v805 = vmul.f32 %v804, %v562
    %807 = vrot.lane.b32.xlu0 %v804, 92
    %v808 = vpop.permute.xlu0 %807
    %v810 = vmul.f32 %v804, %v808
    %812 = vrot.lane.b32.xlu0 %v810, 18
    %v813 = vpop.permute.xlu0 %812
    %v815 = vadd.f32 %v805, %v813
    %v816 = vtanh.pop %v815
    %818 = vrot.lane.b32.xlu0 %v816, 36
    %v819 = vpop.permute.xlu0 %818
    %v821 = vmul.f32 %v804, %v819
    %823 = vrot.lane.b32.xlu0 %v821, 74
    %v824 = vpop.permute.xlu0 %823
    %v825 = vsel %vm62, %v824, 0
    %827 = vmatpush.msra.mxu0 0.0
    %828 = vmatpush.msra.mxu0 0.0
    %829 = vmatpush.msra.mxu0 0.0
    %830 = vmatpush.msra.mxu0 0.0
    %831 = vmatpush.msra.mxu0 0.0
    %832 = vmatpush.msra.mxu0 0.0
    %833 = vmatpush.msra.mxu0 0.0
    %834 = vmatpush.msra.mxu0 0.0
    %835 = vmatpush.msra.mxu0 0.0
    %836 = vmatpush.msra.mxu0 0.0
    %837 = vmatpush.msra.mxu0 0.0
    %838 = vmatpush.msra.mxu0 0.0
    %839 = vmatpush.msra.mxu0 0.0
    %840 = vmatpush.msra.mxu0 %v319
    %841 = vmatpush.msra.mxu0 %v311
    %842 = vmatpush.msra.mxu0 %v310
    %843 = vmatmul.f32.gmra.mxu0 %v825
    %v844 = vpop.f32.mrf.mxu0
    %v845 = vadd.f32 %v698, %v844
    %846 = vdwg.mxu0
    %v847 = vtanh.pop %v845
    %v848 = vmul.f32 %v847, 0.5
    %v849 = vadd.f32 %v848, 0.5
    %v850 = vsel %vm58, %v849, %v847
    %v851 = vmul.f32 %v850, %v608
    %853 = vrot.lane.b32.xlu0 %v850, 92
    %v854 = vpop.permute.xlu0 %853
    %v856 = vmul.f32 %v850, %v854
    %858 = vrot.lane.b32.xlu0 %v856, 18
    %v859 = vpop.permute.xlu0 %858
    %v861 = vadd.f32 %v851, %v859
    %v862 = vtanh.pop %v861
    %864 = vrot.lane.b32.xlu0 %v862, 36
    %v865 = vpop.permute.xlu0 %864
    %v867 = vmul.f32 %v850, %v865
    %868 = vmatpush.msra.mxu0 0.0
    %869 = vmatpush.msra.mxu0 0.0
    %870 = vmatpush.msra.mxu0 0.0
    %871 = vmatpush.msra.mxu0 0.0
    %872 = vmatpush.msra.mxu0 0.0
    %873 = vmatpush.msra.mxu0 0.0
    %874 = vmatpush.msra.mxu0 0.0
    %875 = vmatpush.msra.mxu0 0.0
    %876 = vmatpush.msra.mxu0 0.0
    %877 = vmatpush.msra.mxu0 0.0
    %878 = vmatpush.msra.mxu0 0.0
    %879 = vmatpush.msra.mxu0 0.0
    %880 = vmatpush.msra.mxu0 0.0
    %881 = vmatpush.msra.mxu0 %v68
    %882 = vmatpush.msra.mxu0 %v60
    %883 = vmatpush.msra.mxu0 %v59
    %884 = vmatmul.f32.gmra.mxu0 %v733
    %v885 = vpop.f32.mrf.mxu0
    %v886 = vadd.f32 %v37, %v885
    %887 = vdwg.mxu0
    %888 = vmatpush.msra.mxu0 0.0
    %889 = vmatpush.msra.mxu0 0.0
    %890 = vmatpush.msra.mxu0 0.0
    %891 = vmatpush.msra.mxu0 0.0
    %892 = vmatpush.msra.mxu0 0.0
    %893 = vmatpush.msra.mxu0 0.0
    %894 = vmatpush.msra.mxu0 0.0
    %895 = vmatpush.msra.mxu0 0.0
    %896 = vmatpush.msra.mxu0 0.0
    %897 = vmatpush.msra.mxu0 0.0
    %898 = vmatpush.msra.mxu0 0.0
    %899 = vmatpush.msra.mxu0 0.0
    %900 = vmatpush.msra.mxu0 0.0
    %901 = vmatpush.msra.mxu0 %v95
    %902 = vmatpush.msra.mxu0 %v92
    %903 = vmatpush.msra.mxu0 %v91
    %904 = vmatmul.f32.gmra.mxu0 %v779
    %v905 = vpop.f32.mrf.mxu0
    %v906 = vadd.f32 %v42, %v905
    %907 = vdwg.mxu0
    %908 = vmatpush.msra.mxu0 0.0
    %909 = vmatpush.msra.mxu0 0.0
    %910 = vmatpush.msra.mxu0 0.0
    %911 = vmatpush.msra.mxu0 0.0
    %912 = vmatpush.msra.mxu0 0.0
    %913 = vmatpush.msra.mxu0 0.0
    %914 = vmatpush.msra.mxu0 0.0
    %915 = vmatpush.msra.mxu0 0.0
    %916 = vmatpush.msra.mxu0 0.0
    %917 = vmatpush.msra.mxu0 0.0
    %918 = vmatpush.msra.mxu0 0.0
    %919 = vmatpush.msra.mxu0 0.0
    %920 = vmatpush.msra.mxu0 0.0
    %921 = vmatpush.msra.mxu0 %v122
    %922 = vmatpush.msra.mxu0 %v119
    %923 = vmatpush.msra.mxu0 %v118
    %924 = vmatmul.f32.gmra.mxu0 %v825
    %v925 = vpop.f32.mrf.mxu0
    %v926 = vadd.f32 %v47, %v925
    %927 = vdwg.mxu0
    %929 = vrot.lane.b32.xlu0 %v867, 74
    %v930 = vpop.permute.xlu0 %929
    %v931 = vsel %vm62, %v930, 0
    %933 = vmatpush.msra.mxu0 0.0
    %934 = vmatpush.msra.mxu0 0.0
    %935 = vmatpush.msra.mxu0 0.0
    %936 = vmatpush.msra.mxu0 0.0
    %937 = vmatpush.msra.mxu0 0.0
    %938 = vmatpush.msra.mxu0 0.0
    %939 = vmatpush.msra.mxu0 0.0
    %940 = vmatpush.msra.mxu0 0.0
    %941 = vmatpush.msra.mxu0 0.0
    %942 = vmatpush.msra.mxu0 0.0
    %943 = vmatpush.msra.mxu0 0.0
    %944 = vmatpush.msra.mxu0 0.0
    %945 = vmatpush.msra.mxu0 0.0
    %946 = vmatpush.msra.mxu0 %v149
    %947 = vmatpush.msra.mxu0 %v146
    %948 = vmatpush.msra.mxu0 %v145
    %949 = vmatmul.f32.gmra.mxu0 %v931
    %v950 = vpop.f32.mrf.mxu0
    %v951 = vadd.f32 %v52, %v950
    %952 = vdwg.mxu0
    %s953 = scalar_lea.vmem %s0, 12
    %v954 = vld [vmem:[%s953] sm:$0xf]
    %956 = vset.pattern.permute.xlu0 0
    %957 = vperm.xlu0 %956, %v954
    %v958 = vpop.permute.xlu0 %957
    %v960 = vmul.f32 %v958, %v179
    %v961 = vadd.f32 %v960, %v886
    %v962 = vtanh.pop %v961
    %v963 = vmul.f32 %v962, 0.5
    %v964 = vadd.f32 %v963, 0.5
    %v965 = vsel %vm58, %v964, %v962
    %v966 = vmul.f32 %v965, %v723
    %968 = vrot.lane.b32.xlu0 %v965, 92
    %v969 = vpop.permute.xlu0 %968
    %v971 = vmul.f32 %v965, %v969
    %973 = vrot.lane.b32.xlu0 %v971, 18
    %v974 = vpop.permute.xlu0 %973
    %v976 = vadd.f32 %v966, %v974
    %v977 = vtanh.pop %v976
    %979 = vrot.lane.b32.xlu0 %v977, 36
    %v980 = vpop.permute.xlu0 %979
    %v982 = vmul.f32 %v965, %v980
    %984 = vrot.lane.b32.xlu0 %v982, 74
    %v985 = vpop.permute.xlu0 %984
    %v986 = vsel %vm62, %v985, 0
    %988 = vmatpush.msra.mxu0 0.0
    %989 = vmatpush.msra.mxu0 0.0
    %990 = vmatpush.msra.mxu0 0.0
    %991 = vmatpush.msra.mxu0 0.0
    %992 = vmatpush.msra.mxu0 0.0
    %993 = vmatpush.msra.mxu0 0.0
    %994 = vmatpush.msra.mxu0 0.0
    %995 = vmatpush.msra.mxu0 0.0
    %996 = vmatpush.msra.mxu0 0.0
    %997 = vmatpush.msra.mxu0 0.0
    %998 = vmatpush.msra.mxu0 0.0
    %999 = vmatpush.msra.mxu0 0.0
    %1000 = vmatpush.msra.mxu0 0.0
    %1001 = vmatpush.msra.mxu0 %v213
    %1002 = vmatpush.msra.mxu0 %v205
    %1003 = vmatpush.msra.mxu0 %v204
    %1004 = vmatmul.f32.gmra.mxu0 %v986
    %v1005 = vpop.f32.mrf.mxu0
    %v1006 = vadd.f32 %v906, %v1005
    %1007 = vdwg.mxu0
    %v1008 = vtanh.pop %v1006
    %v1009 = vmul.f32 %v1008, 0.5
    %v1010 = vadd.f32 %v1009, 0.5
    %v1011 = vsel %vm58, %v1010, %v1008
    %v1012 = vmul.f32 %v1011, %v769
    %1014 = vrot.lane.b32.xlu0 %v1011, 92
    %v1015 = vpop.permute.xlu0 %1014
    %v1017 = vmul.f32 %v1011, %v1015
    %1019 = vrot.lane.b32.xlu0 %v1017, 18
    %v1020 = vpop.permute.xlu0 %1019
    %v1022 = vadd.f32 %v1012, %v1020
    %v1023 = vtanh.pop %v1022
    %1025 = vrot.lane.b32.xlu0 %v1023, 36
    %v1026 = vpop.permute.xlu0 %1025
    %v1028 = vmul.f32 %v1011, %v1026
    %1030 = vrot.lane.b32.xlu0 %v1028, 74
    %v1031 = vpop.permute.xlu0 %1030
    %v1032 = vsel %vm62, %v1031, 0
    %1034 = vmatpush.msra.mxu0 0.0
    %1035 = vmatpush.msra.mxu0 0.0
    %1036 = vmatpush.msra.mxu0 0.0
    %1037 = vmatpush.msra.mxu0 0.0
    %1038 = vmatpush.msra.mxu0 0.0
    %1039 = vmatpush.msra.mxu0 0.0
    %1040 = vmatpush.msra.mxu0 0.0
    %1041 = vmatpush.msra.mxu0 0.0
    %1042 = vmatpush.msra.mxu0 0.0
    %1043 = vmatpush.msra.mxu0 0.0
    %1044 = vmatpush.msra.mxu0 0.0
    %1045 = vmatpush.msra.mxu0 0.0
    %1046 = vmatpush.msra.mxu0 0.0
    %1047 = vmatpush.msra.mxu0 %v266
    %1048 = vmatpush.msra.mxu0 %v258
    %1049 = vmatpush.msra.mxu0 %v257
    %1050 = vmatmul.f32.gmra.mxu0 %v1032
    %v1051 = vpop.f32.mrf.mxu0
    %v1052 = vadd.f32 %v926, %v1051
    %1053 = vdwg.mxu0
    %v1054 = vtanh.pop %v1052
    %v1055 = vmul.f32 %v1054, 0.5
    %v1056 = vadd.f32 %v1055, 0.5
    %v1057 = vsel %vm58, %v1056, %v1054
    %v1058 = vmul.f32 %v1057, %v815
    %1060 = vrot.lane.b32.xlu0 %v1057, 92
    %v1061 = vpop.permute.xlu0 %1060
    %v1063 = vmul.f32 %v1057, %v1061
    %1065 = vrot.lane.b32.xlu0 %v1063, 18
    %v1066 = vpop.permute.xlu0 %1065
    %v1068 = vadd.f32 %v1058, %v1066
    %v1069 = vtanh.pop %v1068
    %1071 = vrot.lane.b32.xlu0 %v1069, 36
    %v1072 = vpop.permute.xlu0 %1071
    %v1074 = vmul.f32 %v1057, %v1072
    %1076 = vrot.lane.b32.xlu0 %v1074, 74
    %v1077 = vpop.permute.xlu0 %1076
    %v1078 = vsel %vm62, %v1077, 0
    %1080 = vmatpush.msra.mxu0 0.0
    %1081 = vmatpush.msra.mxu0 0.0
    %1082 = vmatpush.msra.mxu0 0.0
    %1083 = vmatpush.msra.mxu0 0.0
    %1084 = vmatpush.msra.mxu0 0.0
    %1085 = vmatpush.msra.mxu0 0.0
    %1086 = vmatpush.msra.mxu0 0.0
    %1087 = vmatpush.msra.mxu0 0.0
    %1088 = vmatpush.msra.mxu0 0.0
    %1089 = vmatpush.msra.mxu0 0.0
    %1090 = vmatpush.msra.mxu0 0.0
    %1091 = vmatpush.msra.mxu0 0.0
    %1092 = vmatpush.msra.mxu0 0.0
    %1093 = vmatpush.msra.mxu0 %v319
    %1094 = vmatpush.msra.mxu0 %v311
    %1095 = vmatpush.msra.mxu0 %v310
    %1096 = vmatmul.f32.gmra.mxu0 %v1078
    %v1097 = vpop.f32.mrf.mxu0
    %v1098 = vadd.f32 %v951, %v1097
    %1099 = vdwg.mxu0
    %v1100 = vtanh.pop %v1098
    %v1101 = vmul.f32 %v1100, 0.5
    %v1102 = vadd.f32 %v1101, 0.5
    %v1103 = vsel %vm58, %v1102, %v1100
    %v1104 = vmul.f32 %v1103, %v861
    %1106 = vrot.lane.b32.xlu0 %v1103, 92
    %v1107 = vpop.permute.xlu0 %1106
    %v1109 = vmul.f32 %v1103, %v1107
    %1111 = vrot.lane.b32.xlu0 %v1109, 18
    %v1112 = vpop.permute.xlu0 %1111
    %v1114 = vadd.f32 %v1104, %v1112
    %v1115 = vtanh.pop %v1114
    %1117 = vrot.lane.b32.xlu0 %v1115, 36
    %v1118 = vpop.permute.xlu0 %1117
    %v1120 = vmul.f32 %v1103, %v1118
    %1121 = vmatpush.msra.mxu0 0.0
    %1122 = vmatpush.msra.mxu0 0.0
    %1123 = vmatpush.msra.mxu0 0.0
    %1124 = vmatpush.msra.mxu0 0.0
    %1125 = vmatpush.msra.mxu0 0.0
    %1126 = vmatpush.msra.mxu0 0.0
    %1127 = vmatpush.msra.mxu0 0.0
    %1128 = vmatpush.msra.mxu0 0.0
    %1129 = vmatpush.msra.mxu0 0.0
    %1130 = vmatpush.msra.mxu0 0.0
    %1131 = vmatpush.msra.mxu0 0.0
    %1132 = vmatpush.msra.mxu0 0.0
    %1133 = vmatpush.msra.mxu0 0.0
    %1134 = vmatpush.msra.mxu0 %v68
    %1135 = vmatpush.msra.mxu0 %v60
    %1136 = vmatpush.msra.mxu0 %v59
    %1137 = vmatmul.f32.gmra.mxu0 %v986
    %v1138 = vpop.f32.mrf.mxu0
    %v1139 = vadd.f32 %v37, %v1138
    %1140 = vdwg.mxu0
    %1141 = vmatpush.msra.mxu0 0.0
    %1142 = vmatpush.msra.mxu0 0.0
    %1143 = vmatpush.msra.mxu0 0.0
    %1144 = vmatpush.msra.mxu0 0.0
    %1145 = vmatpush.msra.mxu0 0.0
    %1146 = vmatpush.msra.mxu0 0.0
    %1147 = vmatpush.msra.mxu0 0.0
    %1148 = vmatpush.msra.mxu0 0.0
    %1149 = vmatpush.msra.mxu0 0.0
    %1150 = vmatpush.msra.mxu0 0.0
    %1151 = vmatpush.msra.mxu0 0.0
    %1152 = vmatpush.msra.mxu0 0.0
    %1153 = vmatpush.msra.mxu0 0.0
    %1154 = vmatpush.msra.mxu0 %v95
    %1155 = vmatpush.msra.mxu0 %v92
    %1156 = vmatpush.msra.mxu0 %v91
    %1157 = vmatmul.f32.gmra.mxu0 %v1032
    %v1158 = vpop.f32.mrf.mxu0
    %v1159 = vadd.f32 %v42, %v1158
    %1160 = vdwg.mxu0
    %1161 = vmatpush.msra.mxu0 0.0
    %1162 = vmatpush.msra.mxu0 0.0
    %1163 = vmatpush.msra.mxu0 0.0
    %1164 = vmatpush.msra.mxu0 0.0
    %1165 = vmatpush.msra.mxu0 0.0
    %1166 = vmatpush.msra.mxu0 0.0
    %1167 = vmatpush.msra.mxu0 0.0
    %1168 = vmatpush.msra.mxu0 0.0
    %1169 = vmatpush.msra.mxu0 0.0
    %1170 = vmatpush.msra.mxu0 0.0
    %1171 = vmatpush.msra.mxu0 0.0
    %1172 = vmatpush.msra.mxu0 0.0
    %1173 = vmatpush.msra.mxu0 0.0
    %1174 = vmatpush.msra.mxu0 %v122
    %1175 = vmatpush.msra.mxu0 %v119
    %1176 = vmatpush.msra.mxu0 %v118
    %1177 = vmatmul.f32.gmra.mxu0 %v1078
    %v1178 = vpop.f32.mrf.mxu0
    %v1179 = vadd.f32 %v47, %v1178
    %1180 = vdwg.mxu0
    %1182 = vrot.lane.b32.xlu0 %v1120, 74
    %v1183 = vpop.permute.xlu0 %1182
    %v1184 = vsel %vm62, %v1183, 0
    %1186 = vmatpush.msra.mxu0 0.0
    %1187 = vmatpush.msra.mxu0 0.0
    %1188 = vmatpush.msra.mxu0 0.0
    %1189 = vmatpush.msra.mxu0 0.0
    %1190 = vmatpush.msra.mxu0 0.0
    %1191 = vmatpush.msra.mxu0 0.0
    %1192 = vmatpush.msra.mxu0 0.0
    %1193 = vmatpush.msra.mxu0 0.0
    %1194 = vmatpush.msra.mxu0 0.0
    %1195 = vmatpush.msra.mxu0 0.0
    %1196 = vmatpush.msra.mxu0 0.0
    %1197 = vmatpush.msra.mxu0 0.0
    %1198 = vmatpush.msra.mxu0 0.0
    %1199 = vmatpush.msra.mxu0 %v149
    %1200 = vmatpush.msra.mxu0 %v146
    %1201 = vmatpush.msra.mxu0 %v145
    %1202 = vmatmul.f32.gmra.mxu0 %v1184
    %v1203 = vpop.f32.mrf.mxu0
    %v1204 = vadd.f32 %v52, %v1203
    %1205 = vdwg.mxu0
    %s1206 = scalar_lea.vmem %s0, 16
    %v1207 = vld [vmem:[%s1206] sm:$0xf]
    %1209 = vset.pattern.permute.xlu0 0
    %1210 = vperm.xlu0 %1209, %v1207
    %v1211 = vpop.permute.xlu0 %1210
    %v1213 = vmul.f32 %v1211, %v179
    %v1214 = vadd.f32 %v1213, %v1139
    %v1215 = vtanh.pop %v1214
    %v1216 = vmul.f32 %v1215, 0.5
    %v1217 = vadd.f32 %v1216, 0.5
    %v1218 = vsel %vm58, %v1217, %v1215
    %v1219 = vmul.f32 %v1218, %v976
    %1221 = vrot.lane.b32.xlu0 %v1218, 92
    %v1222 = vpop.permute.xlu0 %1221
    %v1224 = vmul.f32 %v1218, %v1222
    %1226 = vrot.lane.b32.xlu0 %v1224, 18
    %v1227 = vpop.permute.xlu0 %1226
    %v1229 = vadd.f32 %v1219, %v1227
    %v1230 = vtanh.pop %v1229
    %1232 = vrot.lane.b32.xlu0 %v1230, 36
    %v1233 = vpop.permute.xlu0 %1232
    %v1235 = vmul.f32 %v1218, %v1233
    %1237 = vrot.lane.b32.xlu0 %v1235, 74
    %v1238 = vpop.permute.xlu0 %1237
    %v1239 = vsel %vm62, %v1238, 0
    %1241 = vmatpush.msra.mxu0 0.0
    %1242 = vmatpush.msra.mxu0 0.0
    %1243 = vmatpush.msra.mxu0 0.0
    %1244 = vmatpush.msra.mxu0 0.0
    %1245 = vmatpush.msra.mxu0 0.0
    %1246 = vmatpush.msra.mxu0 0.0
    %1247 = vmatpush.msra.mxu0 0.0
    %1248 = vmatpush.msra.mxu0 0.0
    %1249 = vmatpush.msra.mxu0 0.0
    %1250 = vmatpush.msra.mxu0 0.0
    %1251 = vmatpush.msra.mxu0 0.0
    %1252 = vmatpush.msra.mxu0 0.0
    %1253 = vmatpush.msra.mxu0 0.0
    %1254 = vmatpush.msra.mxu0 %v213
    %1255 = vmatpush.msra.mxu0 %v205
    %1256 = vmatpush.msra.mxu0 %v204
    %1257 = vmatmul.f32.gmra.mxu0 %v1239
    %v1258 = vpop.f32.mrf.mxu0
    %v1259 = vadd.f32 %v1159, %v1258
    %1260 = vdwg.mxu0
    %v1261 = vtanh.pop %v1259
    %v1262 = vmul.f32 %v1261, 0.5
    %v1263 = vadd.f32 %v1262, 0.5
    %v1264 = vsel %vm58, %v1263, %v1261
    %v1265 = vmul.f32 %v1264, %v1022
    %1267 = vrot.lane.b32.xlu0 %v1264, 92
    %v1268 = vpop.permute.xlu0 %1267
    %v1270 = vmul.f32 %v1264, %v1268
    %1272 = vrot.lane.b32.xlu0 %v1270, 18
    %v1273 = vpop.permute.xlu0 %1272
    %v1275 = vadd.f32 %v1265, %v1273
    %v1276 = vtanh.pop %v1275
    %1278 = vrot.lane.b32.xlu0 %v1276, 36
    %v1279 = vpop.permute.xlu0 %1278
    %v1281 = vmul.f32 %v1264, %v1279
    %1283 = vrot.lane.b32.xlu0 %v1281, 74
    %v1284 = vpop.permute.xlu0 %1283
    %v1285 = vsel %vm62, %v1284, 0
    %1287 = vmatpush.msra.mxu0 0.0
    %1288 = vmatpush.msra.mxu0 0.0
    %1289 = vmatpush.msra.mxu0 0.0
    %1290 = vmatpush.msra.mxu0 0.0
    %1291 = vmatpush.msra.mxu0 0.0
    %1292 = vmatpush.msra.mxu0 0.0
    %1293 = vmatpush.msra.mxu0 0.0
    %1294 = vmatpush.msra.mxu0 0.0
    %1295 = vmatpush.msra.mxu0 0.0
    %1296 = vmatpush.msra.mxu0 0.0
    %1297 = vmatpush.msra.mxu0 0.0
    %1298 = vmatpush.msra.mxu0 0.0
    %1299 = vmatpush.msra.mxu0 0.0
    %1300 = vmatpush.msra.mxu0 %v266
    %1301 = vmatpush.msra.mxu0 %v258
    %1302 = vmatpush.msra.mxu0 %v257
    %1303 = vmatmul.f32.gmra.mxu0 %v1285
    %v1304 = vpop.f32.mrf.mxu0
    %v1305 = vadd.f32 %v1179, %v1304
    %1306 = vdwg.mxu0
    %v1307 = vtanh.pop %v1305
    %v1308 = vmul.f32 %v1307, 0.5
    %v1309 = vadd.f32 %v1308, 0.5
    %v1310 = vsel %vm58, %v1309, %v1307
    %v1311 = vmul.f32 %v1310, %v1068
    %1313 = vrot.lane.b32.xlu0 %v1310, 92
    %v1314 = vpop.permute.xlu0 %1313
    %v1316 = vmul.f32 %v1310, %v1314
    %1318 = vrot.lane.b32.xlu0 %v1316, 18
    %v1319 = vpop.permute.xlu0 %1318
    %v1321 = vadd.f32 %v1311, %v1319
    %v1322 = vtanh.pop %v1321
    %1324 = vrot.lane.b32.xlu0 %v1322, 36
    %v1325 = vpop.permute.xlu0 %1324
    %v1327 = vmul.f32 %v1310, %v1325
    %1329 = vrot.lane.b32.xlu0 %v1327, 74
    %v1330 = vpop.permute.xlu0 %1329
    %v1331 = vsel %vm62, %v1330, 0
    %1333 = vmatpush.msra.mxu0 0.0
    %1334 = vmatpush.msra.mxu0 0.0
    %1335 = vmatpush.msra.mxu0 0.0
    %1336 = vmatpush.msra.mxu0 0.0
    %1337 = vmatpush.msra.mxu0 0.0
    %1338 = vmatpush.msra.mxu0 0.0
    %1339 = vmatpush.msra.mxu0 0.0
    %1340 = vmatpush.msra.mxu0 0.0
    %1341 = vmatpush.msra.mxu0 0.0
    %1342 = vmatpush.msra.mxu0 0.0
    %1343 = vmatpush.msra.mxu0 0.0
    %1344 = vmatpush.msra.mxu0 0.0
    %1345 = vmatpush.msra.mxu0 0.0
    %1346 = vmatpush.msra.mxu0 %v319
    %1347 = vmatpush.msra.mxu0 %v311
    %1348 = vmatpush.msra.mxu0 %v310
    %1349 = vmatmul.f32.gmra.mxu0 %v1331
    %v1350 = vpop.f32.mrf.mxu0
    %v1351 = vadd.f32 %v1204, %v1350
    %1352 = vdwg.mxu0
    %v1353 = vtanh.pop %v1351
    %v1354 = vmul.f32 %v1353, 0.5
    %v1355 = vadd.f32 %v1354, 0.5
    %v1356 = vsel %vm58, %v1355, %v1353
    %v1357 = vmul.f32 %v1356, %v1114
    %1359 = vrot.lane.b32.xlu0 %v1356, 92
    %v1360 = vpop.permute.xlu0 %1359
    %v1362 = vmul.f32 %v1356, %v1360
    %1364 = vrot.lane.b32.xlu0 %v1362, 18
    %v1365 = vpop.permute.xlu0 %1364
    %v1367 = vadd.f32 %v1357, %v1365
    %v1368 = vtanh.pop %v1367
    %1370 = vrot.lane.b32.xlu0 %v1368, 36
    %v1371 = vpop.permute.xlu0 %1370
    %v1373 = vmul.f32 %v1356, %v1371
    %1374 = vmatpush.msra.mxu0 0.0
    %1375 = vmatpush.msra.mxu0 0.0
    %1376 = vmatpush.msra.mxu0 0.0
    %1377 = vmatpush.msra.mxu0 0.0
    %1378 = vmatpush.msra.mxu0 0.0
    %1379 = vmatpush.msra.mxu0 0.0
    %1380 = vmatpush.msra.mxu0 0.0
    %1381 = vmatpush.msra.mxu0 0.0
    %1382 = vmatpush.msra.mxu0 0.0
    %1383 = vmatpush.msra.mxu0 0.0
    %1384 = vmatpush.msra.mxu0 0.0
    %1385 = vmatpush.msra.mxu0 0.0
    %1386 = vmatpush.msra.mxu0 0.0
    %1387 = vmatpush.msra.mxu0 %v68
    %1388 = vmatpush.msra.mxu0 %v60
    %1389 = vmatpush.msra.mxu0 %v59
    %1390 = vmatmul.f32.gmra.mxu0 %v1239
    %v1391 = vpop.f32.mrf.mxu0
    %v1392 = vadd.f32 %v37, %v1391
    %1393 = vdwg.mxu0
    %1394 = vmatpush.msra.mxu0 0.0
    %1395 = vmatpush.msra.mxu0 0.0
    %1396 = vmatpush.msra.mxu0 0.0
    %1397 = vmatpush.msra.mxu0 0.0
    %1398 = vmatpush.msra.mxu0 0.0
    %1399 = vmatpush.msra.mxu0 0.0
    %1400 = vmatpush.msra.mxu0 0.0
    %1401 = vmatpush.msra.mxu0 0.0
    %1402 = vmatpush.msra.mxu0 0.0
    %1403 = vmatpush.msra.mxu0 0.0
    %1404 = vmatpush.msra.mxu0 0.0
    %1405 = vmatpush.msra.mxu0 0.0
    %1406 = vmatpush.msra.mxu0 0.0
    %1407 = vmatpush.msra.mxu0 %v95
    %1408 = vmatpush.msra.mxu0 %v92
    %1409 = vmatpush.msra.mxu0 %v91
    %1410 = vmatmul.f32.gmra.mxu0 %v1285
    %v1411 = vpop.f32.mrf.mxu0
    %v1412 = vadd.f32 %v42, %v1411
    %1413 = vdwg.mxu0
    %1414 = vmatpush.msra.mxu0 0.0
    %1415 = vmatpush.msra.mxu0 0.0
    %1416 = vmatpush.msra.mxu0 0.0
    %1417 = vmatpush.msra.mxu0 0.0
    %1418 = vmatpush.msra.mxu0 0.0
    %1419 = vmatpush.msra.mxu0 0.0
    %1420 = vmatpush.msra.mxu0 0.0
    %1421 = vmatpush.msra.mxu0 0.0
    %1422 = vmatpush.msra.mxu0 0.0
    %1423 = vmatpush.msra.mxu0 0.0
    %1424 = vmatpush.msra.mxu0 0.0
    %1425 = vmatpush.msra.mxu0 0.0
    %1426 = vmatpush.msra.mxu0 0.0
    %1427 = vmatpush.msra.mxu0 %v122
    %1428 = vmatpush.msra.mxu0 %v119
    %1429 = vmatpush.msra.mxu0 %v118
    %1430 = vmatmul.f32.gmra.mxu0 %v1331
    %v1431 = vpop.f32.mrf.mxu0
    %v1432 = vadd.f32 %v47, %v1431
    %1433 = vdwg.mxu0
    %1435 = vrot.lane.b32.xlu0 %v1373, 74
    %v1436 = vpop.permute.xlu0 %1435
    %v1437 = vsel %vm62, %v1436, 0
    %1439 = vmatpush.msra.mxu0 0.0
    %1440 = vmatpush.msra.mxu0 0.0
    %1441 = vmatpush.msra.mxu0 0.0
    %1442 = vmatpush.msra.mxu0 0.0
    %1443 = vmatpush.msra.mxu0 0.0
    %1444 = vmatpush.msra.mxu0 0.0
    %1445 = vmatpush.msra.mxu0 0.0
    %1446 = vmatpush.msra.mxu0 0.0
    %1447 = vmatpush.msra.mxu0 0.0
    %1448 = vmatpush.msra.mxu0 0.0
    %1449 = vmatpush.msra.mxu0 0.0
    %1450 = vmatpush.msra.mxu0 0.0
    %1451 = vmatpush.msra.mxu0 0.0
    %1452 = vmatpush.msra.mxu0 %v149
    %1453 = vmatpush.msra.mxu0 %v146
    %1454 = vmatpush.msra.mxu0 %v145
    %1455 = vmatmul.f32.gmra.mxu0 %v1437
    %v1456 = vpop.f32.mrf.mxu0
    %v1457 = vadd.f32 %v52, %v1456
    %1458 = vdwg.mxu0
    %s1459 = scalar_lea.vmem %s0, 20
    %v1460 = vld [vmem:[%s1459] sm:$0xf]
    %1462 = vset.pattern.permute.xlu0 0
    %1463 = vperm.xlu0 %1462, %v1460
    %v1464 = vpop.permute.xlu0 %1463
    %v1466 = vmul.f32 %v1464, %v179
    %v1467 = vadd.f32 %v1466, %v1392
    %v1468 = vtanh.pop %v1467
    %v1469 = vmul.f32 %v1468, 0.5
    %v1470 = vadd.f32 %v1469, 0.5
    %v1471 = vsel %vm58, %v1470, %v1468
    %v1472 = vmul.f32 %v1471, %v1229
    %1474 = vrot.lane.b32.xlu0 %v1471, 92
    %v1475 = vpop.permute.xlu0 %1474
    %v1477 = vmul.f32 %v1471, %v1475
    %1479 = vrot.lane.b32.xlu0 %v1477, 18
    %v1480 = vpop.permute.xlu0 %1479
    %v1482 = vadd.f32 %v1472, %v1480
    %v1483 = vtanh.pop %v1482
    %1485 = vrot.lane.b32.xlu0 %v1483, 36
    %v1486 = vpop.permute.xlu0 %1485
    %v1488 = vmul.f32 %v1471, %v1486
    %1490 = vrot.lane.b32.xlu0 %v1488, 74
    %v1491 = vpop.permute.xlu0 %1490
    %v1492 = vsel %vm62, %v1491, 0
    %1494 = vmatpush.msra.mxu0 0.0
    %1495 = vmatpush.msra.mxu0 0.0
    %1496 = vmatpush.msra.mxu0 0.0
    %1497 = vmatpush.msra.mxu0 0.0
    %1498 = vmatpush.msra.mxu0 0.0
    %1499 = vmatpush.msra.mxu0 0.0
    %1500 = vmatpush.msra.mxu0 0.0
    %1501 = vmatpush.msra.mxu0 0.0
    %1502 = vmatpush.msra.mxu0 0.0
    %1503 = vmatpush.msra.mxu0 0.0
    %1504 = vmatpush.msra.mxu0 0.0
    %1505 = vmatpush.msra.mxu0 0.0
    %1506 = vmatpush.msra.mxu0 0.0
    %1507 = vmatpush.msra.mxu0 %v213
    %1508 = vmatpush.msra.mxu0 %v205
    %1509 = vmatpush.msra.mxu0 %v204
    %1510 = vmatmul.f32.gmra.mxu0 %v1492
    %v1511 = vpop.f32.mrf.mxu0
    %v1512 = vadd.f32 %v1412, %v1511
    %1513 = vdwg.mxu0
    %v1514 = vtanh.pop %v1512
    %v1515 = vmul.f32 %v1514, 0.5
    %v1516 = vadd.f32 %v1515, 0.5
    %v1517 = vsel %vm58, %v1516, %v1514
    %v1518 = vmul.f32 %v1517, %v1275
    %1520 = vrot.lane.b32.xlu0 %v1517, 92
    %v1521 = vpop.permute.xlu0 %1520
    %v1523 = vmul.f32 %v1517, %v1521
    %1525 = vrot.lane.b32.xlu0 %v1523, 18
    %v1526 = vpop.permute.xlu0 %1525
    %v1528 = vadd.f32 %v1518, %v1526
    %v1529 = vtanh.pop %v1528
    %1531 = vrot.lane.b32.xlu0 %v1529, 36
    %v1532 = vpop.permute.xlu0 %1531
    %v1534 = vmul.f32 %v1517, %v1532
    %1536 = vrot.lane.b32.xlu0 %v1534, 74
    %v1537 = vpop.permute.xlu0 %1536
    %v1538 = vsel %vm62, %v1537, 0
    %1540 = vmatpush.msra.mxu0 0.0
    %1541 = vmatpush.msra.mxu0 0.0
    %1542 = vmatpush.msra.mxu0 0.0
    %1543 = vmatpush.msra.mxu0 0.0
    %1544 = vmatpush.msra.mxu0 0.0
    %1545 = vmatpush.msra.mxu0 0.0
    %1546 = vmatpush.msra.mxu0 0.0
    %1547 = vmatpush.msra.mxu0 0.0
    %1548 = vmatpush.msra.mxu0 0.0
    %1549 = vmatpush.msra.mxu0 0.0
    %1550 = vmatpush.msra.mxu0 0.0
    %1551 = vmatpush.msra.mxu0 0.0
    %1552 = vmatpush.msra.mxu0 0.0
    %1553 = vmatpush.msra.mxu0 %v266
    %1554 = vmatpush.msra.mxu0 %v258
    %1555 = vmatpush.msra.mxu0 %v257
    %1556 = vmatmul.f32.gmra.mxu0 %v1538
    %v1557 = vpop.f32.mrf.mxu0
    %v1558 = vadd.f32 %v1432, %v1557
    %1559 = vdwg.mxu0
    %v1560 = vtanh.pop %v1558
    %v1561 = vmul.f32 %v1560, 0.5
    %v1562 = vadd.f32 %v1561, 0.5
    %v1563 = vsel %vm58, %v1562, %v1560
    %v1564 = vmul.f32 %v1563, %v1321
    %1566 = vrot.lane.b32.xlu0 %v1563, 92
    %v1567 = vpop.permute.xlu0 %1566
    %v1569 = vmul.f32 %v1563, %v1567
    %1571 = vrot.lane.b32.xlu0 %v1569, 18
    %v1572 = vpop.permute.xlu0 %1571
    %v1574 = vadd.f32 %v1564, %v1572
    %v1575 = vtanh.pop %v1574
    %1577 = vrot.lane.b32.xlu0 %v1575, 36
    %v1578 = vpop.permute.xlu0 %1577
    %v1580 = vmul.f32 %v1563, %v1578
    %1582 = vrot.lane.b32.xlu0 %v1580, 74
    %v1583 = vpop.permute.xlu0 %1582
    %v1584 = vsel %vm62, %v1583, 0
    %1586 = vmatpush.msra.mxu0 0.0
    %1587 = vmatpush.msra.mxu0 0.0
    %1588 = vmatpush.msra.mxu0 0.0
    %1589 = vmatpush.msra.mxu0 0.0
    %1590 = vmatpush.msra.mxu0 0.0
    %1591 = vmatpush.msra.mxu0 0.0
    %1592 = vmatpush.msra.mxu0 0.0
    %1593 = vmatpush.msra.mxu0 0.0
    %1594 = vmatpush.msra.mxu0 0.0
    %1595 = vmatpush.msra.mxu0 0.0
    %1596 = vmatpush.msra.mxu0 0.0
    %1597 = vmatpush.msra.mxu0 0.0
    %1598 = vmatpush.msra.mxu0 0.0
    %1599 = vmatpush.msra.mxu0 %v319
    %1600 = vmatpush.msra.mxu0 %v311
    %1601 = vmatpush.msra.mxu0 %v310
    %1602 = vmatmul.f32.gmra.mxu0 %v1584
    %v1603 = vpop.f32.mrf.mxu0
    %v1604 = vadd.f32 %v1457, %v1603
    %1605 = vdwg.mxu0
    %v1606 = vtanh.pop %v1604
    %v1607 = vmul.f32 %v1606, 0.5
    %v1608 = vadd.f32 %v1607, 0.5
    %v1609 = vsel %vm58, %v1608, %v1606
    %v1610 = vmul.f32 %v1609, %v1367
    %1612 = vrot.lane.b32.xlu0 %v1609, 92
    %v1613 = vpop.permute.xlu0 %1612
    %v1615 = vmul.f32 %v1609, %v1613
    %1617 = vrot.lane.b32.xlu0 %v1615, 18
    %v1618 = vpop.permute.xlu0 %1617
    %v1620 = vadd.f32 %v1610, %v1618
    %v1621 = vtanh.pop %v1620
    %1623 = vrot.lane.b32.xlu0 %v1621, 36
    %v1624 = vpop.permute.xlu0 %1623
    %v1626 = vmul.f32 %v1609, %v1624
    %1627 = vmatpush.msra.mxu0 0.0
    %1628 = vmatpush.msra.mxu0 0.0
    %1629 = vmatpush.msra.mxu0 0.0
    %1630 = vmatpush.msra.mxu0 0.0
    %1631 = vmatpush.msra.mxu0 0.0
    %1632 = vmatpush.msra.mxu0 0.0
    %1633 = vmatpush.msra.mxu0 0.0
    %1634 = vmatpush.msra.mxu0 0.0
    %1635 = vmatpush.msra.mxu0 0.0
    %1636 = vmatpush.msra.mxu0 0.0
    %1637 = vmatpush.msra.mxu0 0.0
    %1638 = vmatpush.msra.mxu0 0.0
    %1639 = vmatpush.msra.mxu0 0.0
    %1640 = vmatpush.msra.mxu0 %v68
    %1641 = vmatpush.msra.mxu0 %v60
    %1642 = vmatpush.msra.mxu0 %v59
    %1643 = vmatmul.f32.gmra.mxu0 %v1492
    %v1644 = vpop.f32.mrf.mxu0
    %v1645 = vadd.f32 %v37, %v1644
    %1646 = vdwg.mxu0
    %1647 = vmatpush.msra.mxu0 0.0
    %1648 = vmatpush.msra.mxu0 0.0
    %1649 = vmatpush.msra.mxu0 0.0
    %1650 = vmatpush.msra.mxu0 0.0
    %1651 = vmatpush.msra.mxu0 0.0
    %1652 = vmatpush.msra.mxu0 0.0
    %1653 = vmatpush.msra.mxu0 0.0
    %1654 = vmatpush.msra.mxu0 0.0
    %1655 = vmatpush.msra.mxu0 0.0
    %1656 = vmatpush.msra.mxu0 0.0
    %1657 = vmatpush.msra.mxu0 0.0
    %1658 = vmatpush.msra.mxu0 0.0
    %1659 = vmatpush.msra.mxu0 0.0
    %1660 = vmatpush.msra.mxu0 %v95
    %1661 = vmatpush.msra.mxu0 %v92
    %1662 = vmatpush.msra.mxu0 %v91
    %1663 = vmatmul.f32.gmra.mxu0 %v1538
    %v1664 = vpop.f32.mrf.mxu0
    %v1665 = vadd.f32 %v42, %v1664
    %1666 = vdwg.mxu0
    %1667 = vmatpush.msra.mxu0 0.0
    %1668 = vmatpush.msra.mxu0 0.0
    %1669 = vmatpush.msra.mxu0 0.0
    %1670 = vmatpush.msra.mxu0 0.0
    %1671 = vmatpush.msra.mxu0 0.0
    %1672 = vmatpush.msra.mxu0 0.0
    %1673 = vmatpush.msra.mxu0 0.0
    %1674 = vmatpush.msra.mxu0 0.0
    %1675 = vmatpush.msra.mxu0 0.0
    %1676 = vmatpush.msra.mxu0 0.0
    %1677 = vmatpush.msra.mxu0 0.0
    %1678 = vmatpush.msra.mxu0 0.0
    %1679 = vmatpush.msra.mxu0 0.0
    %1680 = vmatpush.msra.mxu0 %v122
    %1681 = vmatpush.msra.mxu0 %v119
    %1682 = vmatpush.msra.mxu0 %v118
    %1683 = vmatmul.f32.gmra.mxu0 %v1584
    %v1684 = vpop.f32.mrf.mxu0
    %v1685 = vadd.f32 %v47, %v1684
    %1686 = vdwg.mxu0
    %1688 = vrot.lane.b32.xlu0 %v1626, 74
    %v1689 = vpop.permute.xlu0 %1688
    %v1690 = vsel %vm62, %v1689, 0
    %1692 = vmatpush.msra.mxu0 0.0
    %1693 = vmatpush.msra.mxu0 0.0
    %1694 = vmatpush.msra.mxu0 0.0
    %1695 = vmatpush.msra.mxu0 0.0
    %1696 = vmatpush.msra.mxu0 0.0
    %1697 = vmatpush.msra.mxu0 0.0
    %1698 = vmatpush.msra.mxu0 0.0
    %1699 = vmatpush.msra.mxu0 0.0
    %1700 = vmatpush.msra.mxu0 0.0
    %1701 = vmatpush.msra.mxu0 0.0
    %1702 = vmatpush.msra.mxu0 0.0
    %1703 = vmatpush.msra.mxu0 0.0
    %1704 = vmatpush.msra.mxu0 0.0
    %1705 = vmatpush.msra.mxu0 %v149
    %1706 = vmatpush.msra.mxu0 %v146
    %1707 = vmatpush.msra.mxu0 %v145
    %1708 = vmatmul.f32.gmra.mxu0 %v1690
    %v1709 = vpop.f32.mrf.mxu0
    %v1710 = vadd.f32 %v52, %v1709
    %1711 = vdwg.mxu0
    %s1712 = scalar_lea.vmem %s0, 24
    %v1713 = vld [vmem:[%s1712] sm:$0xf]
    %1715 = vset.pattern.permute.xlu0 0
    %1716 = vperm.xlu0 %1715, %v1713
    %v1717 = vpop.permute.xlu0 %1716
    %v1719 = vmul.f32 %v1717, %v179
    %v1720 = vadd.f32 %v1719, %v1645
    %v1721 = vtanh.pop %v1720
    %v1722 = vmul.f32 %v1721, 0.5
    %v1723 = vadd.f32 %v1722, 0.5
    %v1724 = vsel %vm58, %v1723, %v1721
    %v1725 = vmul.f32 %v1724, %v1482
    %1727 = vrot.lane.b32.xlu0 %v1724, 92
    %v1728 = vpop.permute.xlu0 %1727
    %v1730 = vmul.f32 %v1724, %v1728
    %1732 = vrot.lane.b32.xlu0 %v1730, 18
    %v1733 = vpop.permute.xlu0 %1732
    %v1735 = vadd.f32 %v1725, %v1733
    %v1736 = vtanh.pop %v1735
    %1738 = vrot.lane.b32.xlu0 %v1736, 36
    %v1739 = vpop.permute.xlu0 %1738
    %v1741 = vmul.f32 %v1724, %v1739
    %1743 = vrot.lane.b32.xlu0 %v1741, 74
    %v1744 = vpop.permute.xlu0 %1743
    %v1745 = vsel %vm62, %v1744, 0
    %1747 = vmatpush.msra.mxu0 0.0
    %1748 = vmatpush.msra.mxu0 0.0
    %1749 = vmatpush.msra.mxu0 0.0
    %1750 = vmatpush.msra.mxu0 0.0
    %1751 = vmatpush.msra.mxu0 0.0
    %1752 = vmatpush.msra.mxu0 0.0
    %1753 = vmatpush.msra.mxu0 0.0
    %1754 = vmatpush.msra.mxu0 0.0
    %1755 = vmatpush.msra.mxu0 0.0
    %1756 = vmatpush.msra.mxu0 0.0
    %1757 = vmatpush.msra.mxu0 0.0
    %1758 = vmatpush.msra.mxu0 0.0
    %1759 = vmatpush.msra.mxu0 0.0
    %1760 = vmatpush.msra.mxu0 %v213
    %1761 = vmatpush.msra.mxu0 %v205
    %1762 = vmatpush.msra.mxu0 %v204
    %1763 = vmatmul.f32.gmra.mxu0 %v1745
    %v1764 = vpop.f32.mrf.mxu0
    %v1765 = vadd.f32 %v1665, %v1764
    %1766 = vdwg.mxu0
    %v1767 = vtanh.pop %v1765
    %v1768 = vmul.f32 %v1767, 0.5
    %v1769 = vadd.f32 %v1768, 0.5
    %v1770 = vsel %vm58, %v1769, %v1767
    %v1771 = vmul.f32 %v1770, %v1528
    %1773 = vrot.lane.b32.xlu0 %v1770, 92
    %v1774 = vpop.permute.xlu0 %1773
    %v1776 = vmul.f32 %v1770, %v1774
    %1778 = vrot.lane.b32.xlu0 %v1776, 18
    %v1779 = vpop.permute.xlu0 %1778
    %v1781 = vadd.f32 %v1771, %v1779
    %v1782 = vtanh.pop %v1781
    %1784 = vrot.lane.b32.xlu0 %v1782, 36
    %v1785 = vpop.permute.xlu0 %1784
    %v1787 = vmul.f32 %v1770, %v1785
    %1789 = vrot.lane.b32.xlu0 %v1787, 74
    %v1790 = vpop.permute.xlu0 %1789
    %v1791 = vsel %vm62, %v1790, 0
    %1793 = vmatpush.msra.mxu0 0.0
    %1794 = vmatpush.msra.mxu0 0.0
    %1795 = vmatpush.msra.mxu0 0.0
    %1796 = vmatpush.msra.mxu0 0.0
    %1797 = vmatpush.msra.mxu0 0.0
    %1798 = vmatpush.msra.mxu0 0.0
    %1799 = vmatpush.msra.mxu0 0.0
    %1800 = vmatpush.msra.mxu0 0.0
    %1801 = vmatpush.msra.mxu0 0.0
    %1802 = vmatpush.msra.mxu0 0.0
    %1803 = vmatpush.msra.mxu0 0.0
    %1804 = vmatpush.msra.mxu0 0.0
    %1805 = vmatpush.msra.mxu0 0.0
    %1806 = vmatpush.msra.mxu0 %v266
    %1807 = vmatpush.msra.mxu0 %v258
    %1808 = vmatpush.msra.mxu0 %v257
    %1809 = vmatmul.f32.gmra.mxu0 %v1791
    %v1810 = vpop.f32.mrf.mxu0
    %v1811 = vadd.f32 %v1685, %v1810
    %1812 = vdwg.mxu0
    %v1813 = vtanh.pop %v1811
    %v1814 = vmul.f32 %v1813, 0.5
    %v1815 = vadd.f32 %v1814, 0.5
    %v1816 = vsel %vm58, %v1815, %v1813
    %v1817 = vmul.f32 %v1816, %v1574
    %1819 = vrot.lane.b32.xlu0 %v1816, 92
    %v1820 = vpop.permute.xlu0 %1819
    %v1822 = vmul.f32 %v1816, %v1820
    %1824 = vrot.lane.b32.xlu0 %v1822, 18
    %v1825 = vpop.permute.xlu0 %1824
    %v1827 = vadd.f32 %v1817, %v1825
    %v1828 = vtanh.pop %v1827
    %1830 = vrot.lane.b32.xlu0 %v1828, 36
    %v1831 = vpop.permute.xlu0 %1830
    %v1833 = vmul.f32 %v1816, %v1831
    %1835 = vrot.lane.b32.xlu0 %v1833, 74
    %v1836 = vpop.permute.xlu0 %1835
    %v1837 = vsel %vm62, %v1836, 0
    %1839 = vmatpush.msra.mxu0 0.0
    %1840 = vmatpush.msra.mxu0 0.0
    %1841 = vmatpush.msra.mxu0 0.0
    %1842 = vmatpush.msra.mxu0 0.0
    %1843 = vmatpush.msra.mxu0 0.0
    %1844 = vmatpush.msra.mxu0 0.0
    %1845 = vmatpush.msra.mxu0 0.0
    %1846 = vmatpush.msra.mxu0 0.0
    %1847 = vmatpush.msra.mxu0 0.0
    %1848 = vmatpush.msra.mxu0 0.0
    %1849 = vmatpush.msra.mxu0 0.0
    %1850 = vmatpush.msra.mxu0 0.0
    %1851 = vmatpush.msra.mxu0 0.0
    %1852 = vmatpush.msra.mxu0 %v319
    %1853 = vmatpush.msra.mxu0 %v311
    %1854 = vmatpush.msra.mxu0 %v310
    %1855 = vmatmul.f32.gmra.mxu0 %v1837
    %v1856 = vpop.f32.mrf.mxu0
    %v1857 = vadd.f32 %v1710, %v1856
    %1858 = vdwg.mxu0
    %v1859 = vtanh.pop %v1857
    %v1860 = vmul.f32 %v1859, 0.5
    %v1861 = vadd.f32 %v1860, 0.5
    %v1862 = vsel %vm58, %v1861, %v1859
    %v1863 = vmul.f32 %v1862, %v1620
    %1865 = vrot.lane.b32.xlu0 %v1862, 92
    %v1866 = vpop.permute.xlu0 %1865
    %v1868 = vmul.f32 %v1862, %v1866
    %1870 = vrot.lane.b32.xlu0 %v1868, 18
    %v1871 = vpop.permute.xlu0 %1870
    %v1873 = vadd.f32 %v1863, %v1871
    %v1874 = vtanh.pop %v1873
    %1876 = vrot.lane.b32.xlu0 %v1874, 36
    %v1877 = vpop.permute.xlu0 %1876
    %v1879 = vmul.f32 %v1862, %v1877
    %1880 = vmatpush.msra.mxu0 0.0
    %1881 = vmatpush.msra.mxu0 0.0
    %1882 = vmatpush.msra.mxu0 0.0
    %1883 = vmatpush.msra.mxu0 0.0
    %1884 = vmatpush.msra.mxu0 0.0
    %1885 = vmatpush.msra.mxu0 0.0
    %1886 = vmatpush.msra.mxu0 0.0
    %1887 = vmatpush.msra.mxu0 0.0
    %1888 = vmatpush.msra.mxu0 0.0
    %1889 = vmatpush.msra.mxu0 0.0
    %1890 = vmatpush.msra.mxu0 0.0
    %1891 = vmatpush.msra.mxu0 0.0
    %1892 = vmatpush.msra.mxu0 0.0
    %1893 = vmatpush.msra.mxu0 %v68
    %1894 = vmatpush.msra.mxu0 %v60
    %1895 = vmatpush.msra.mxu0 %v59
    %1896 = vmatmul.f32.gmra.mxu0 %v1745
    %v1897 = vpop.f32.mrf.mxu0
    %v1898 = vadd.f32 %v37, %v1897
    %1899 = vdwg.mxu0
    %1900 = vmatpush.msra.mxu0 0.0
    %1901 = vmatpush.msra.mxu0 0.0
    %1902 = vmatpush.msra.mxu0 0.0
    %1903 = vmatpush.msra.mxu0 0.0
    %1904 = vmatpush.msra.mxu0 0.0
    %1905 = vmatpush.msra.mxu0 0.0
    %1906 = vmatpush.msra.mxu0 0.0
    %1907 = vmatpush.msra.mxu0 0.0
    %1908 = vmatpush.msra.mxu0 0.0
    %1909 = vmatpush.msra.mxu0 0.0
    %1910 = vmatpush.msra.mxu0 0.0
    %1911 = vmatpush.msra.mxu0 0.0
    %1912 = vmatpush.msra.mxu0 0.0
    %1913 = vmatpush.msra.mxu0 %v95
    %1914 = vmatpush.msra.mxu0 %v92
    %1915 = vmatpush.msra.mxu0 %v91
    %1916 = vmatmul.f32.gmra.mxu0 %v1791
    %v1917 = vpop.f32.mrf.mxu0
    %v1918 = vadd.f32 %v42, %v1917
    %1919 = vdwg.mxu0
    %1920 = vmatpush.msra.mxu0 0.0
    %1921 = vmatpush.msra.mxu0 0.0
    %1922 = vmatpush.msra.mxu0 0.0
    %1923 = vmatpush.msra.mxu0 0.0
    %1924 = vmatpush.msra.mxu0 0.0
    %1925 = vmatpush.msra.mxu0 0.0
    %1926 = vmatpush.msra.mxu0 0.0
    %1927 = vmatpush.msra.mxu0 0.0
    %1928 = vmatpush.msra.mxu0 0.0
    %1929 = vmatpush.msra.mxu0 0.0
    %1930 = vmatpush.msra.mxu0 0.0
    %1931 = vmatpush.msra.mxu0 0.0
    %1932 = vmatpush.msra.mxu0 0.0
    %1933 = vmatpush.msra.mxu0 %v122
    %1934 = vmatpush.msra.mxu0 %v119
    %1935 = vmatpush.msra.mxu0 %v118
    %1936 = vmatmul.f32.gmra.mxu0 %v1837
    %v1937 = vpop.f32.mrf.mxu0
    %v1938 = vadd.f32 %v47, %v1937
    %1939 = vdwg.mxu0
    %1941 = vrot.lane.b32.xlu0 %v1879, 74
    %v1942 = vpop.permute.xlu0 %1941
    %v1943 = vsel %vm62, %v1942, 0
    %1945 = vmatpush.msra.mxu0 0.0
    %1946 = vmatpush.msra.mxu0 0.0
    %1947 = vmatpush.msra.mxu0 0.0
    %1948 = vmatpush.msra.mxu0 0.0
    %1949 = vmatpush.msra.mxu0 0.0
    %1950 = vmatpush.msra.mxu0 0.0
    %1951 = vmatpush.msra.mxu0 0.0
    %1952 = vmatpush.msra.mxu0 0.0
    %1953 = vmatpush.msra.mxu0 0.0
    %1954 = vmatpush.msra.mxu0 0.0
    %1955 = vmatpush.msra.mxu0 0.0
    %1956 = vmatpush.msra.mxu0 0.0
    %1957 = vmatpush.msra.mxu0 0.0
    %1958 = vmatpush.msra.mxu0 %v149
    %1959 = vmatpush.msra.mxu0 %v146
    %1960 = vmatpush.msra.mxu0 %v145
    %1961 = vmatmul.f32.gmra.mxu0 %v1943
    %v1962 = vpop.f32.mrf.mxu0
    %v1963 = vadd.f32 %v52, %v1962
    %1964 = vdwg.mxu0
    %s1965 = scalar_lea.vmem %s0, 28
    %v1966 = vld [vmem:[%s1965] sm:$0xf]
    %1968 = vset.pattern.permute.xlu0 0
    %1969 = vperm.xlu0 %1968, %v1966
    %v1970 = vpop.permute.xlu0 %1969
    %v1972 = vmul.f32 %v1970, %v179
    %v1973 = vadd.f32 %v1972, %v1898
    %v1974 = vtanh.pop %v1973
    %v1975 = vmul.f32 %v1974, 0.5
    %v1976 = vadd.f32 %v1975, 0.5
    %v1977 = vsel %vm58, %v1976, %v1974
    %v1978 = vmul.f32 %v1977, %v1735
    %1980 = vrot.lane.b32.xlu0 %v1977, 92
    %v1981 = vpop.permute.xlu0 %1980
    %v1983 = vmul.f32 %v1977, %v1981
    %1985 = vrot.lane.b32.xlu0 %v1983, 18
    %v1986 = vpop.permute.xlu0 %1985
    %v1988 = vadd.f32 %v1978, %v1986
    %v1989 = vtanh.pop %v1988
    %1991 = vrot.lane.b32.xlu0 %v1989, 36
    %v1992 = vpop.permute.xlu0 %1991
    %v1994 = vmul.f32 %v1977, %v1992
    %1996 = vrot.lane.b32.xlu0 %v1994, 74
    %v1997 = vpop.permute.xlu0 %1996
    %v1998 = vsel %vm62, %v1997, 0
    %2000 = vmatpush.msra.mxu0 0.0
    %2001 = vmatpush.msra.mxu0 0.0
    %2002 = vmatpush.msra.mxu0 0.0
    %2003 = vmatpush.msra.mxu0 0.0
    %2004 = vmatpush.msra.mxu0 0.0
    %2005 = vmatpush.msra.mxu0 0.0
    %2006 = vmatpush.msra.mxu0 0.0
    %2007 = vmatpush.msra.mxu0 0.0
    %2008 = vmatpush.msra.mxu0 0.0
    %2009 = vmatpush.msra.mxu0 0.0
    %2010 = vmatpush.msra.mxu0 0.0
    %2011 = vmatpush.msra.mxu0 0.0
    %2012 = vmatpush.msra.mxu0 0.0
    %2013 = vmatpush.msra.mxu0 %v213
    %2014 = vmatpush.msra.mxu0 %v205
    %2015 = vmatpush.msra.mxu0 %v204
    %2016 = vmatmul.f32.gmra.mxu0 %v1998
    %v2017 = vpop.f32.mrf.mxu0
    %v2018 = vadd.f32 %v1918, %v2017
    %2019 = vdwg.mxu0
    %v2020 = vtanh.pop %v2018
    %v2021 = vmul.f32 %v2020, 0.5
    %v2022 = vadd.f32 %v2021, 0.5
    %v2023 = vsel %vm58, %v2022, %v2020
    %v2024 = vmul.f32 %v2023, %v1781
    %2026 = vrot.lane.b32.xlu0 %v2023, 92
    %v2027 = vpop.permute.xlu0 %2026
    %v2029 = vmul.f32 %v2023, %v2027
    %2031 = vrot.lane.b32.xlu0 %v2029, 18
    %v2032 = vpop.permute.xlu0 %2031
    %v2034 = vadd.f32 %v2024, %v2032
    %v2035 = vtanh.pop %v2034
    %2037 = vrot.lane.b32.xlu0 %v2035, 36
    %v2038 = vpop.permute.xlu0 %2037
    %v2040 = vmul.f32 %v2023, %v2038
    %2042 = vrot.lane.b32.xlu0 %v2040, 74
    %v2043 = vpop.permute.xlu0 %2042
    %v2044 = vsel %vm62, %v2043, 0
    %2046 = vmatpush.msra.mxu0 0.0
    %2047 = vmatpush.msra.mxu0 0.0
    %2048 = vmatpush.msra.mxu0 0.0
    %2049 = vmatpush.msra.mxu0 0.0
    %2050 = vmatpush.msra.mxu0 0.0
    %2051 = vmatpush.msra.mxu0 0.0
    %2052 = vmatpush.msra.mxu0 0.0
    %2053 = vmatpush.msra.mxu0 0.0
    %2054 = vmatpush.msra.mxu0 0.0
    %2055 = vmatpush.msra.mxu0 0.0
    %2056 = vmatpush.msra.mxu0 0.0
    %2057 = vmatpush.msra.mxu0 0.0
    %2058 = vmatpush.msra.mxu0 0.0
    %2059 = vmatpush.msra.mxu0 %v266
    %2060 = vmatpush.msra.mxu0 %v258
    %2061 = vmatpush.msra.mxu0 %v257
    %2062 = vmatmul.f32.gmra.mxu0 %v2044
    %v2063 = vpop.f32.mrf.mxu0
    %v2064 = vadd.f32 %v1938, %v2063
    %2065 = vdwg.mxu0
    %v2066 = vtanh.pop %v2064
    %v2067 = vmul.f32 %v2066, 0.5
    %v2068 = vadd.f32 %v2067, 0.5
    %v2069 = vsel %vm58, %v2068, %v2066
    %v2070 = vmul.f32 %v2069, %v1827
    %2072 = vrot.lane.b32.xlu0 %v2069, 92
    %v2073 = vpop.permute.xlu0 %2072
    %v2075 = vmul.f32 %v2069, %v2073
    %2077 = vrot.lane.b32.xlu0 %v2075, 18
    %v2078 = vpop.permute.xlu0 %2077
    %v2080 = vadd.f32 %v2070, %v2078
    %v2081 = vtanh.pop %v2080
    %2083 = vrot.lane.b32.xlu0 %v2081, 36
    %v2084 = vpop.permute.xlu0 %2083
    %v2086 = vmul.f32 %v2069, %v2084
    %2088 = vrot.lane.b32.xlu0 %v2086, 74
    %v2089 = vpop.permute.xlu0 %2088
    %v2090 = vsel %vm62, %v2089, 0
    %2092 = vmatpush.msra.mxu0 0.0
    %2093 = vmatpush.msra.mxu0 0.0
    %2094 = vmatpush.msra.mxu0 0.0
    %2095 = vmatpush.msra.mxu0 0.0
    %2096 = vmatpush.msra.mxu0 0.0
    %2097 = vmatpush.msra.mxu0 0.0
    %2098 = vmatpush.msra.mxu0 0.0
    %2099 = vmatpush.msra.mxu0 0.0
    %2100 = vmatpush.msra.mxu0 0.0
    %2101 = vmatpush.msra.mxu0 0.0
    %2102 = vmatpush.msra.mxu0 0.0
    %2103 = vmatpush.msra.mxu0 0.0
    %2104 = vmatpush.msra.mxu0 0.0
    %2105 = vmatpush.msra.mxu0 %v319
    %2106 = vmatpush.msra.mxu0 %v311
    %2107 = vmatpush.msra.mxu0 %v310
    %2108 = vmatmul.f32.gmra.mxu0 %v2090
    %v2109 = vpop.f32.mrf.mxu0
    %v2110 = vadd.f32 %v1963, %v2109
    %2111 = vdwg.mxu0
    %v2112 = vtanh.pop %v2110
    %v2113 = vmul.f32 %v2112, 0.5
    %v2114 = vadd.f32 %v2113, 0.5
    %v2115 = vsel %vm58, %v2114, %v2112
    %v2116 = vmul.f32 %v2115, %v1873
    %2118 = vrot.lane.b32.xlu0 %v2115, 92
    %v2119 = vpop.permute.xlu0 %2118
    %v2121 = vmul.f32 %v2115, %v2119
    %2123 = vrot.lane.b32.xlu0 %v2121, 18
    %v2124 = vpop.permute.xlu0 %2123
    %v2126 = vadd.f32 %v2116, %v2124
    %v2127 = vtanh.pop %v2126
    %2129 = vrot.lane.b32.xlu0 %v2127, 36
    %v2130 = vpop.permute.xlu0 %2129
    %v2132 = vmul.f32 %v2115, %v2130
    %v2133 = vrot.slane %v614, 4
    %v2135 = vrot.slane %v1120, 4
    %v2137 = vrot.slane %v1626, 4
    %v2140 = vrot.slane %v2132, 4
    %vm2142 = vcmask 1043456
    %v2143 = vsel %vm2142, %v361, %v2133
    %v2144 = vsel %vm2142, %v867, %v2135
    %v2145 = vsel %vm2142, %v1373, %v2137
    %v2146 = vsel %vm2142, %v1879, %v2140
    %v2147 = vld [vmem:[%s5] sm:$0xff]
    %v2148 = vld [vmem:[%s5 + $0x8] sm:$0xff]
    %v2149 = vld [vmem:[%s5 + $0x10] sm:$0x3]
    %v2150 = vld [vmem:[%s6] sm:$0xff]
    %v2151 = vld [vmem:[%s6 + $0x8] sm:$0xff]
    %v2152 = vld [vmem:[%s6 + $0x10] sm:$0x3]
    %2154 = vset.pattern.permute.xlu0 0
    %2155 = vperm.xlu0 %2154, %v2150
    %v2156 = vpop.permute.xlu0 %2155
    %2159 = vset.pattern.permute.xlu0 0
    %2160 = vperm.xlu0 %2159, %v2151
    %v2161 = vpop.permute.xlu0 %2160
    %2164 = vset.pattern.permute.xlu0 0
    %2165 = vperm.xlu0 %2164, %v2152
    %v2166 = vpop.permute.xlu0 %2165
    %2172 = vrot.lane.b32.xlu0 %v2143, 74
    %v2173 = vpop.permute.xlu0 %2172
    %2174 = vrot.lane.b32.xlu0 %v2144, 74
    %v2175 = vpop.permute.xlu0 %2174
    %2176 = vrot.lane.b32.xlu0 %v2145, 74
    %v2177 = vpop.permute.xlu0 %2176
    %2178 = vrot.lane.b32.xlu0 %v2146, 74
    %v2179 = vpop.permute.xlu0 %2178
    %v2181 = vsel %vm62, %v2147, 0
    %v2184 = vsel %vm62, %v2148, 0
    %v2187 = vsel %vm62, %v2149, 0
    %v2189 = vsel %vm62, %v2173, 0
    %v2191 = vsel %vm62, %v2175, 0
    %v2193 = vsel %vm62, %v2177, 0
    %v2195 = vsel %vm62, %v2179, 0
    %2197 = vmatpush.xpose.msra.mxu0 0.0
    %2198 = vmatpush.xpose.msra.mxu0 0.0
    %2199 = vmatpush.xpose.msra.mxu0 0.0
    %2200 = vmatpush.xpose.msra.mxu0 0.0
    %2201 = vmatpush.xpose.msra.mxu0 0.0
    %2202 = vmatpush.xpose.msra.mxu0 0.0
    %2203 = vmatpush.xpose.msra.mxu0 0.0
    %2204 = vmatpush.xpose.msra.mxu0 0.0
    %2205 = vmatpush.xpose.msra.mxu0 0.0
    %2206 = vmatpush.xpose.msra.mxu0 0.0
    %2207 = vmatpush.xpose.msra.mxu0 0.0
    %2208 = vmatpush.xpose.msra.mxu0 0.0
    %2209 = vmatpush.xpose.msra.mxu0 %v2195
    %2210 = vmatpush.xpose.msra.mxu0 %v2193
    %2211 = vmatpush.xpose.msra.mxu0 %v2191
    %2212 = vmatpush.xpose.msra.mxu0 %v2189
    %2213 = vmatmul.f32.gmra.mxu0 %v2181
    %v2214 = vpop.f32.mrf.mxu0
    %v2215 = vadd.f32 %v2156, %v2214
    %2216 = vmatmul.f32.gmra.mxu0 %v2184
    %v2217 = vpop.f32.mrf.mxu0
    %v2218 = vadd.f32 %v2161, %v2217
    %2219 = vmatmul.f32.gmra.mxu0 %v2187
    %v2220 = vpop.f32.mrf.mxu0
    %v2221 = vadd.f32 %v2166, %v2220
    %2222 = vdwg.mxu0
    %v2223 = vtanh.pop %v2215
    %v2224 = vtanh.pop %v2218
    %v2225 = vtanh.pop %v2221
    %v2226 = vld [vmem:[%s7] sm:$0x1]
    %v2227 = vld [vmem:[#allocation2] sm:$0x1]
    %2229 = vset.pattern.permute.xlu0 0
    %2230 = vperm.xlu0 %2229, %v2227
    %v2231 = vpop.permute.xlu0 %2230
    %v2233 = vperm.slane %v2231, 0
    %v2235 = vsel %vm62, %v2226, 0
    %v2238 = vsel %vm66, %v2225, 0
    %2240 = vmatpush.msra.mxu0 0.0
    %2241 = vmatpush.msra.mxu0 0.0
    %2242 = vmatpush.msra.mxu0 0.0
    %2243 = vmatpush.msra.mxu0 0.0
    %2244 = vmatpush.msra.mxu0 0.0
    %2245 = vmatpush.msra.mxu0 0.0
    %2246 = vmatpush.msra.mxu0 0.0
    %2247 = vmatpush.msra.mxu0 0.0
    %2248 = vmatpush.msra.mxu0 0.0
    %2249 = vmatpush.msra.mxu0 0.0
    %2250 = vmatpush.msra.mxu0 0.0
    %2251 = vmatpush.msra.mxu0 0.0
    %2252 = vmatpush.msra.mxu0 0.0
    %2253 = vmatpush.msra.mxu0 %v2238
    %2254 = vmatpush.msra.mxu0 %v2224
    %2255 = vmatpush.msra.mxu0 %v2223
    %2256 = vmatmul.f32.gmra.mxu0 %v2235
    %v2257 = vpop.f32.mrf.mxu0
    %v2258 = vadd.f32 %v2233, %v2257
    %2259 = vdwg.mxu0
    %vm2260 = vcmask 253952
    %2261 = vst.msk [vmem:[#allocation3] sm:$0x1] %vm2260, %v2258
    // Predicated region
    $region38: #{tpu_custom_call.1} parent=1 // pred_check
      _
    $region39: #{tpu_custom_call.1} parent=1 // pred_check_branch
      %2263 = sbr.rel (0) target = $region41
    $region40: #{tpu_custom_call.1} parent=1 // pred_region
      %2265 = vsyncadd [#allocation4], 0
      %s2267 = sshll.u32 [#allocation3], 4
      %s2268 = int_to_ptr.vmem [resolvable:$true] %s2267
      %s2269 = sshll.u32 %s9, 4
      %s2270 = int_to_ptr.hbm [resolvable:$true] %s2269
      %2272 = dma.vmem_to_hbm [thread:$0]  %s2268, 16, %s2270, [#allocation4]
    $region41: #{tpu_custom_call.1} parent=1 // pred_fallthru
      _
    // Predicated region
    $region42: #{tpu_custom_call.1} parent=1 // pred_check
      _
    $region43: #{tpu_custom_call.1} parent=1 // pred_check_branch
      %2274 = sbr.rel (0) target = $region45
    $region44: #{tpu_custom_call.1} parent=1 // pred_region
      %2276 = dma.done [#allocation4], 16
    $region45: #{tpu_custom_call.1} parent=1 // pred_fallthru
      _
    %2277 = vsyncpa [#allocation4], 1

</llo_original>
